<compile_context>
chip_gen: v7x
topology: tpu7x:2x2x1
jax: 0.10.0
libtpu: 0.0.40
codegen_flags: <defaults>
</compile_context>

<pallas_src>
import functools

import jax
import jax.numpy as jnp
from jax.experimental import pallas as pl
from jax.experimental.pallas import tpu as pltpu


def _round_up(x, m):
    return (x + m - 1) // m * m


def _mlp_kernel(x_ref, w1_ref, b1_ref, w2_ref, b2_ref, o_ref, *, in_nc):
    # ---- Layer 1 on the VPU: rank-`in_nc` update (K is tiny; an MXU matmul
    # would still pay a full systolic pass + result-FIFO latency for K=6). ----
    x = x_ref[...]                                   # (tb, in_nc)  f32
    w1 = w1_ref[...]                                 # (in_nc, ncp) f32
    tb = x.shape[0]
    ncp = w1.shape[1]
    h = jnp.broadcast_to(b1_ref[...], (tb, ncp))     # bias, hoisted broadcast
    for k in range(in_nc):                           # static unroll (in_nc small)
        h = h + x[:, k:k + 1] * w1[k:k + 1, :]
    # LeakyReLU (slope 0.01): max(h, 0.01*h) is identical for slope < 1.
    h = jnp.maximum(h, 0.01 * h)
    # ---- Layer 2 on the MXU (lane-dense K=ncp, N=odp). ----
    o = jnp.dot(h, w2_ref[...], preferred_element_type=jnp.float32)
    o_ref[...] = (o + b2_ref[...]).astype(o_ref.dtype)


def nonlinear_type_forward(inp, w1, b1, w2, b2, *, out_nc, bowl, tb=None):
    """Forward pass of NonLinearTypeModelModify.

    Arguments use PyTorch nn.Linear layout:
      inp: (B, in_nc)
      w1:  (nc, in_nc)         b1: (nc,)
      w2:  (out_nc*bowl, nc)   b2: (out_nc*bowl,)
    Returns (B, out_nc, bowl).
    """
    f32 = jnp.float32
    B, in_nc = inp.shape
    nc = w1.shape[0]
    out_dim = w2.shape[0]
    assert out_dim == out_nc * bowl

    # Lane-dense padded dims (multiples of 128) for hidden & output features.
    ncp = _round_up(nc, 128)
    odp = _round_up(out_dim, 128)

    # Batch tile: run the whole (padded) batch in one grid step when small;
    # cap the tile at 512 rows for larger batches (VMEM stays tiny either way).
    if tb is None:
        tb = min(_round_up(B, 8), 512)
    tb = _round_up(tb, 8)
    Bp = _round_up(B, tb)

    # Zero-pad weights/biases/inputs once in the wrapper (static glue).
    w1_t = jnp.pad(w1.T.astype(f32), ((0, 0), (0, ncp - nc)))            # (in_nc, ncp)
    b1_p = jnp.pad(b1.astype(f32).reshape(1, nc), ((0, 0), (0, ncp - nc)))
    w2_t = jnp.pad(w2.T.astype(f32), ((0, ncp - nc), (0, odp - out_dim)))  # (ncp, odp)
    b2_p = jnp.pad(b2.astype(f32).reshape(1, out_dim), ((0, 0), (0, odp - out_dim)))
    x_p = jnp.pad(inp.astype(f32), ((0, Bp - B), (0, 0)))                # (Bp, in_nc)

    grid = (Bp // tb,)
    flops = 2 * Bp * ncp * (in_nc + odp)
    bytes_accessed = 4 * (Bp * in_nc + in_nc * ncp + ncp + ncp * odp + odp + Bp * odp)

    out = pl.pallas_call(
        functools.partial(_mlp_kernel, in_nc=in_nc),
        out_shape=jax.ShapeDtypeStruct((Bp, odp), f32),
        grid_spec=pl.GridSpec(
            grid=grid,
            in_specs=[
                pl.BlockSpec((tb, in_nc), lambda i: (i, 0)),    # x batch tile
                pl.BlockSpec((in_nc, ncp), lambda i: (0, 0)),   # W1 (full, padded)
                pl.BlockSpec((1, ncp), lambda i: (0, 0)),       # b1 (full, padded)
                pl.BlockSpec((ncp, odp), lambda i: (0, 0)),     # W2 (full, padded)
                pl.BlockSpec((1, odp), lambda i: (0, 0)),       # b2 (full, padded)
            ],
            out_specs=pl.BlockSpec((tb, odp), lambda i: (i, 0)),
        ),
        compiler_params=pltpu.CompilerParams(
            # "parallel" lets megacore (v7x) shard the batch axis when the grid
            # has >= 2 steps; at a single step one TC is the right call anyway.
            dimension_semantics=("parallel",),
        ),
        cost_estimate=pl.CostEstimate(
            flops=flops, transcendentals=0, bytes_accessed=bytes_accessed),
    )(x_p, w1_t, b1_p, w2_t, b2_p)

    # Glue: drop padding, then view(-1, out_nc, bowl).
    return out[:B, :out_dim].reshape(-1, out_nc, bowl)


def init_params(key, in_nc, nc, out_dim):
    """PyTorch nn.Linear default init: U(-1/sqrt(fan_in), 1/sqrt(fan_in))."""
    k1, k2, k3, k4 = jax.random.split(key, 4)
    lim1 = 1.0 / jnp.sqrt(in_nc)
    lim2 = 1.0 / jnp.sqrt(nc)
    w1 = jax.random.uniform(k1, (nc, in_nc), jnp.float32, -lim1, lim1)
    b1 = jax.random.uniform(k2, (nc,), jnp.float32, -lim1, lim1)
    w2 = jax.random.uniform(k3, (out_dim, nc), jnp.float32, -lim2, lim2)
    b2 = jax.random.uniform(k4, (out_dim,), jnp.float32, -lim2, lim2)
    return w1, b1, w2, b2


if __name__ == "__main__":
    # Module defaults: in_nc=6, nc=1600, out_nc=4, bowl=2.
    in_nc, nc, out_nc, bowl = 6, 1600, 4, 2
    out_dim = out_nc * bowl
    B = 100  # arbitrary (non-multiple-of-8) batch to exercise padding path

    key = jax.random.PRNGKey(0)
    kx, kp = jax.random.split(key)
    x = jax.random.normal(kx, (B, in_nc), jnp.float32)
    w1, b1, w2, b2 = init_params(kp, in_nc, nc, out_dim)

    out = nonlinear_type_forward(x, w1, b1, w2, b2, out_nc=out_nc, bowl=bowl)
    out = jax.block_until_ready(out)

    # Reference check in plain JAX (PyTorch layout / same math).
    h_ref = x @ w1.T + b1
    h_ref = jnp.where(h_ref >= 0, h_ref, 0.01 * h_ref)
    ref = (h_ref @ w2.T + b2).reshape(-1, out_nc, bowl)
    assert out.shape == (B, out_nc, bowl)
    assert jnp.allclose(out, ref, atol=1e-3, rtol=1e-4)

    print("KERNEL_OK")
</pallas_src>

<mosaic_0001>
module attributes {stable_mosaic.version = 11 : i64} {
  func.func @_mlp_kernel(%arg0: i32, %arg1: memref<104x6xf32, #tpu.memory_space<vmem>>, %arg2: memref<6x1664xf32, #tpu.memory_space<vmem>>, %arg3: memref<1x1664xf32, #tpu.memory_space<vmem>>, %arg4: memref<1664x128xf32, #tpu.memory_space<vmem>>, %arg5: memref<1x128xf32, #tpu.memory_space<vmem>>, %arg6: memref<104x128xf32, #tpu.memory_space<vmem>>) attributes {dimension_semantics = [#tpu.dimension_semantics<parallel>], iteration_bounds = array<i64: 1>, scalar_prefetch = 0 : i64, scratch_operands = 0 : i64, tpu.core_type = #tpu.core_type<tc>, window_params = [{transform_indices = @transform_0, window_bounds = array<i64: 104, 6>}, {pipeline_mode = #tpu.pipeline_mode<synchronous>, transform_indices = @transform_1, window_bounds = array<i64: 6, 1664>}, {pipeline_mode = #tpu.pipeline_mode<synchronous>, transform_indices = @transform_2, window_bounds = array<i64: 1, 1664>}, {pipeline_mode = #tpu.pipeline_mode<synchronous>, transform_indices = @transform_3, window_bounds = array<i64: 1664, 128>}, {pipeline_mode = #tpu.pipeline_mode<synchronous>, transform_indices = @transform_4, window_bounds = array<i64: 1, 128>}, {transform_indices = @transform_5, window_bounds = array<i64: 104, 128>}]} {
    %c0 = arith.constant 0 : index
    %c0_0 = arith.constant 0 : index
    %0 = vector.load %arg1[%c0, %c0_0] : memref<104x6xf32, #tpu.memory_space<vmem>>, vector<104x6xf32>
    %c0_1 = arith.constant 0 : index
    %c0_2 = arith.constant 0 : index
    %1 = vector.load %arg2[%c0_1, %c0_2] : memref<6x1664xf32, #tpu.memory_space<vmem>>, vector<6x1664xf32>
    %c0_3 = arith.constant 0 : index
    %c0_4 = arith.constant 0 : index
    %2 = vector.load %arg3[%c0_3, %c0_4] : memref<1x1664xf32, #tpu.memory_space<vmem>>, vector<1x1664xf32>
    %3 = vector.shape_cast %2 : vector<1x1664xf32> to vector<1x1664xf32>
    %4 = vector.broadcast %3 : vector<1x1664xf32> to vector<104x1664xf32>
    %5 = vector.extract_strided_slice %0 {offsets = [0, 0], sizes = [104, 1], strides = [1, 1]} : vector<104x6xf32> to vector<104x1xf32>
    %6 = vector.extract_strided_slice %1 {offsets = [0, 0], sizes = [1, 1664], strides = [1, 1]} : vector<6x1664xf32> to vector<1x1664xf32>
    %7 = vector.broadcast %5 : vector<104x1xf32> to vector<104x1664xf32>
    %8 = vector.broadcast %6 : vector<1x1664xf32> to vector<104x1664xf32>
    %9 = arith.mulf %7, %8 : vector<104x1664xf32>
    %10 = arith.addf %4, %9 : vector<104x1664xf32>
    %11 = vector.extract_strided_slice %0 {offsets = [0, 1], sizes = [104, 1], strides = [1, 1]} : vector<104x6xf32> to vector<104x1xf32>
    %12 = vector.extract_strided_slice %1 {offsets = [1, 0], sizes = [1, 1664], strides = [1, 1]} : vector<6x1664xf32> to vector<1x1664xf32>
    %13 = vector.broadcast %11 : vector<104x1xf32> to vector<104x1664xf32>
    %14 = vector.broadcast %12 : vector<1x1664xf32> to vector<104x1664xf32>
    %15 = arith.mulf %13, %14 : vector<104x1664xf32>
    %16 = arith.addf %10, %15 : vector<104x1664xf32>
    %17 = vector.extract_strided_slice %0 {offsets = [0, 2], sizes = [104, 1], strides = [1, 1]} : vector<104x6xf32> to vector<104x1xf32>
    %18 = vector.extract_strided_slice %1 {offsets = [2, 0], sizes = [1, 1664], strides = [1, 1]} : vector<6x1664xf32> to vector<1x1664xf32>
    %19 = vector.broadcast %17 : vector<104x1xf32> to vector<104x1664xf32>
    %20 = vector.broadcast %18 : vector<1x1664xf32> to vector<104x1664xf32>
    %21 = arith.mulf %19, %20 : vector<104x1664xf32>
    %22 = arith.addf %16, %21 : vector<104x1664xf32>
    %23 = vector.extract_strided_slice %0 {offsets = [0, 3], sizes = [104, 1], strides = [1, 1]} : vector<104x6xf32> to vector<104x1xf32>
    %24 = vector.extract_strided_slice %1 {offsets = [3, 0], sizes = [1, 1664], strides = [1, 1]} : vector<6x1664xf32> to vector<1x1664xf32>
    %25 = vector.broadcast %23 : vector<104x1xf32> to vector<104x1664xf32>
    %26 = vector.broadcast %24 : vector<1x1664xf32> to vector<104x1664xf32>
    %27 = arith.mulf %25, %26 : vector<104x1664xf32>
    %28 = arith.addf %22, %27 : vector<104x1664xf32>
    %29 = vector.extract_strided_slice %0 {offsets = [0, 4], sizes = [104, 1], strides = [1, 1]} : vector<104x6xf32> to vector<104x1xf32>
    %30 = vector.extract_strided_slice %1 {offsets = [4, 0], sizes = [1, 1664], strides = [1, 1]} : vector<6x1664xf32> to vector<1x1664xf32>
    %31 = vector.broadcast %29 : vector<104x1xf32> to vector<104x1664xf32>
    %32 = vector.broadcast %30 : vector<1x1664xf32> to vector<104x1664xf32>
    %33 = arith.mulf %31, %32 : vector<104x1664xf32>
    %34 = arith.addf %28, %33 : vector<104x1664xf32>
    %35 = vector.extract_strided_slice %0 {offsets = [0, 5], sizes = [104, 1], strides = [1, 1]} : vector<104x6xf32> to vector<104x1xf32>
    %36 = vector.extract_strided_slice %1 {offsets = [5, 0], sizes = [1, 1664], strides = [1, 1]} : vector<6x1664xf32> to vector<1x1664xf32>
    %37 = vector.broadcast %35 : vector<104x1xf32> to vector<104x1664xf32>
    %38 = vector.broadcast %36 : vector<1x1664xf32> to vector<104x1664xf32>
    %39 = arith.mulf %37, %38 : vector<104x1664xf32>
    %40 = arith.addf %34, %39 : vector<104x1664xf32>
    %cst = arith.constant 0.00999999977 : f32
    %41 = vector.broadcast %cst : f32 to vector<104x1664xf32>
    %42 = arith.mulf %41, %40 : vector<104x1664xf32>
    %43 = arith.maximumf %40, %42 : vector<104x1664xf32>
    %c0_5 = arith.constant 0 : index
    %c0_6 = arith.constant 0 : index
    %44 = vector.load %arg4[%c0_5, %c0_6] : memref<1664x128xf32, #tpu.memory_space<vmem>>, vector<1664x128xf32>
    %cst_7 = arith.constant dense<0.000000e+00> : vector<104x128xf32>
    %45 = tpu.matmul %43, %44, %cst_7 {dimension_numbers = #tpu.dot_dimension_numbers<[1], [0], [0], [1], [0, 0, 1, 1], [], []>} : vector<104x1664xf32>, vector<1664x128xf32>, vector<104x128xf32> -> vector<104x128xf32>
    %c0_8 = arith.constant 0 : index
    %c0_9 = arith.constant 0 : index
    %46 = vector.load %arg5[%c0_8, %c0_9] : memref<1x128xf32, #tpu.memory_space<vmem>>, vector<1x128xf32>
    %47 = vector.broadcast %46 : vector<1x128xf32> to vector<104x128xf32>
    %48 = arith.addf %45, %47 : vector<104x128xf32>
    %c0_10 = arith.constant 0 : index
    %c0_11 = arith.constant 0 : index
    %49 = vector.load %arg6[%c0_10, %c0_11] : memref<104x128xf32, #tpu.memory_space<vmem>>, vector<104x128xf32>
    tpu.vector_store %arg6[%c0_10, %c0_11], %48 {strides = array<i32>} : memref<104x128xf32, #tpu.memory_space<vmem>>, vector<104x128xf32>,
    return
  }
  func.func @transform_0(%arg0: i32) -> (i32, i32) {
    %c0_i32 = arith.constant 0 : i32
    %c0_i32_0 = arith.constant 0 : i32
    return %arg0, %c0_i32 : i32, i32
  }
  func.func @transform_1(%arg0: i32) -> (i32, i32) {
    %c0_i32 = arith.constant 0 : i32
    %c0_i32_0 = arith.constant 0 : i32
    %c0_i32_1 = arith.constant 0 : i32
    return %c0_i32, %c0_i32_0 : i32, i32
  }
  func.func @transform_2(%arg0: i32) -> (i32, i32) {
    %c0_i32 = arith.constant 0 : i32
    %c0_i32_0 = arith.constant 0 : i32
    %c0_i32_1 = arith.constant 0 : i32
    return %c0_i32, %c0_i32_0 : i32, i32
  }
  func.func @transform_3(%arg0: i32) -> (i32, i32) {
    %c0_i32 = arith.constant 0 : i32
    %c0_i32_0 = arith.constant 0 : i32
    %c0_i32_1 = arith.constant 0 : i32
    return %c0_i32, %c0_i32_0 : i32, i32
  }
  func.func @transform_4(%arg0: i32) -> (i32, i32) {
    %c0_i32 = arith.constant 0 : i32
    %c0_i32_0 = arith.constant 0 : i32
    %c0_i32_1 = arith.constant 0 : i32
    return %c0_i32, %c0_i32_0 : i32, i32
  }
  func.func @transform_5(%arg0: i32) -> (i32, i32) {
    %c0_i32 = arith.constant 0 : i32
    %c0_i32_0 = arith.constant 0 : i32
    return %arg0, %c0_i32 : i32, i32
  }
}

</mosaic_0001>

<llo_original>
// kernel: tpu_custom_call.1
$region0: #{tpu_custom_call.1}
  #allocation0 [shape = 'u32[]', space=smem, size = 0x4, offset = 0x4, fixed_abs, tag = 'smem constant byte address 0x4 - core index']
  #allocation1 [shape = 'u32[144,128]{1,0:T(1,128)}', space=vmem, size = 0x12000, scoped, tag = 'internal scratch']
  %s0 = inlined_call_operand.vmem [shape: f32[104,6], index: 0, kind: input, shape index: {}]
  %s1 = inlined_call_operand.vmem [shape: f32[6,1664], index: 1, kind: input, shape index: {}]
  %s2 = inlined_call_operand.vmem [shape: f32[1,1664], index: 2, kind: input, shape index: {}]
  %s3 = inlined_call_operand.hbm [shape: f32[1664,128], index: 3, kind: input, shape index: {}]
  %s4 = inlined_call_operand.vmem [shape: f32[1,128], index: 4, kind: input, shape index: {}]
  %s5 = inlined_call_operand.hbm [shape: f32[104,128], index: 5, kind: output, shape index: {}]
  %s6 = sld [smem:[#allocation0]]
  $region34: #{tpu_custom_call.1} parent=0
    _
  %s8 = ssub.s32 1, %s6
  %s9 = scalar_select 0, %s8, %s6
  $region1: #{tpu_custom_call.1} parent=0
    #allocation2 [shape = 'u8[851968]{0}', space=vmem, size = 0xd0000, scoped, tag = 'input window, operand 3, single buffered']
    #allocation3 [shape = 's32[1]{0}', space=sflag, size = 0x4, scoped, tag = 'scoped memory for tpu_custom_call.1']
    #allocation4 [shape = 's32[1]{0}', space=sflag, size = 0x4, scoped, tag = 'scoped memory for tpu_custom_call.1']
    #allocation5 [shape = 'u8[53248]{0}', space=vmem, size = 0xd000, scoped, tag = 'output window, operand 0, single buffered']
    %10 = vsyncpa [#allocation3], 0
    %11 = vsyncpa [#allocation4], 0
    // Predicated region
    $region2: #{tpu_custom_call.1} parent=1 // pred_check
      _
    $region3: #{tpu_custom_call.1} parent=1 // pred_check_branch
      %13 = sbr.rel (0) target = $region5
    $region4: #{tpu_custom_call.1} parent=1 // pred_region
      _
    $region5: #{tpu_custom_call.1} parent=1 // pred_fallthru
      _
    // Predicated region
    $region6: #{tpu_custom_call.1} parent=1 // pred_check
      _
    $region7: #{tpu_custom_call.1} parent=1 // pred_check_branch
      %15 = sbr.rel (0) target = $region9
    $region8: #{tpu_custom_call.1} parent=1 // pred_region
      _
    $region9: #{tpu_custom_call.1} parent=1 // pred_fallthru
      _
    // Predicated region
    $region10: #{tpu_custom_call.1} parent=1 // pred_check
      _
    $region11: #{tpu_custom_call.1} parent=1 // pred_check_branch
      %17 = sbr.rel (0) target = $region13
    $region12: #{tpu_custom_call.1} parent=1 // pred_region
      _
    $region13: #{tpu_custom_call.1} parent=1 // pred_fallthru
      _
    // Predicated region
    $region14: #{tpu_custom_call.1} parent=1 // pred_check
      _
    $region15: #{tpu_custom_call.1} parent=1 // pred_check_branch
      %19 = sbr.rel (0) target = $region17
    $region16: #{tpu_custom_call.1} parent=1 // pred_region
      %s21 = ssub.s32 26624, 26624
      %22 = vsyncadd [#allocation3], %s21
      %s23 = sshll.u32 [#allocation2], 4
      %s24 = int_to_ptr.vmem [resolvable:$true] %s23
      %29 = dma.hbm_to_vmem [thread:$0]  %s3, 26624, %s24, [#allocation3], 128, 128, 8
    $region17: #{tpu_custom_call.1} parent=1 // pred_fallthru
      _
    // Predicated region
    $region18: #{tpu_custom_call.1} parent=1 // pred_check
      _
    $region19: #{tpu_custom_call.1} parent=1 // pred_check_branch
      %31 = sbr.rel (0) target = $region21
    $region20: #{tpu_custom_call.1} parent=1 // pred_region
      _
    $region21: #{tpu_custom_call.1} parent=1 // pred_fallthru
      _
    // Predicated region
    $region22: #{tpu_custom_call.1} parent=1 // pred_check
      _
    $region23: #{tpu_custom_call.1} parent=1 // pred_check_branch
      %33 = sbr.rel (0) target = $region25
    $region24: #{tpu_custom_call.1} parent=1 // pred_region
      %34 = dma.done [#allocation3], 26624
    $region25: #{tpu_custom_call.1} parent=1 // pred_fallthru
      _
    %v35 = vld [vmem:[%s0] sm:$0xff]
    %v36 = vld [vmem:[%s0 + $0x8] sm:$0xff]
    %v37 = vld [vmem:[%s0 + $0x10] sm:$0xff]
    %v38 = vld [vmem:[%s0 + $0x18] sm:$0xff]
    %v39 = vld [vmem:[%s0 + $0x20] sm:$0xff]
    %v40 = vld [vmem:[%s0 + $0x28] sm:$0xff]
    %v41 = vld [vmem:[%s0 + $0x30] sm:$0xff]
    %v42 = vld [vmem:[%s0 + $0x38] sm:$0xff]
    %v43 = vld [vmem:[%s0 + $0x40] sm:$0xff]
    %v44 = vld [vmem:[%s0 + $0x48] sm:$0xff]
    %v45 = vld [vmem:[%s0 + $0x50] sm:$0xff]
    %v46 = vld [vmem:[%s0 + $0x58] sm:$0xff]
    %v47 = vld [vmem:[%s0 + $0x60] sm:$0xff]
    %v48 = vld [vmem:[%s1] sm:$0x3f]
    %v49 = vld [vmem:[%s1 + $0x8] sm:$0x3f]
    %v50 = vld [vmem:[%s1 + $0x10] sm:$0x3f]
    %v51 = vld [vmem:[%s1 + $0x18] sm:$0x3f]
    %v52 = vld [vmem:[%s1 + $0x20] sm:$0x3f]
    %v53 = vld [vmem:[%s1 + $0x28] sm:$0x3f]
    %v54 = vld [vmem:[%s1 + $0x30] sm:$0x3f]
    %v55 = vld [vmem:[%s1 + $0x38] sm:$0x3f]
    %v56 = vld [vmem:[%s1 + $0x40] sm:$0x3f]
    %v57 = vld [vmem:[%s1 + $0x48] sm:$0x3f]
    %v58 = vld [vmem:[%s1 + $0x50] sm:$0x3f]
    %v59 = vld [vmem:[%s1 + $0x58] sm:$0x3f]
    %v60 = vld [vmem:[%s1 + $0x60] sm:$0x3f]
    %v61 = vld [vmem:[%s2] sm:$0xff]
    %v62 = vld [vmem:[%s2 + $0x8] sm:$0x1f]
    %v65 = vlaneseq
    %v66 = vshrl.u32 %v65, 7
    %v67 = vsub.s32 0, %v66
    %v68 = vrot.slane %v61, %v67
    %v69 = vlaneseq
    %v70 = vshrl.u32 %v69, 7
    %v71 = vsub.s32 1, %v70
    %v72 = vrot.slane %v61, %v71
    %v73 = vlaneseq
    %v74 = vshrl.u32 %v73, 7
    %v75 = vsub.s32 2, %v74
    %v76 = vrot.slane %v61, %v75
    %v77 = vlaneseq
    %v78 = vshrl.u32 %v77, 7
    %v79 = vsub.s32 3, %v78
    %v80 = vrot.slane %v61, %v79
    %v81 = vlaneseq
    %v82 = vshrl.u32 %v81, 7
    %v83 = vsub.s32 4, %v82
    %v84 = vrot.slane %v61, %v83
    %v85 = vlaneseq
    %v86 = vshrl.u32 %v85, 7
    %v87 = vsub.s32 5, %v86
    %v88 = vrot.slane %v61, %v87
    %v89 = vlaneseq
    %v90 = vshrl.u32 %v89, 7
    %v91 = vsub.s32 6, %v90
    %v92 = vrot.slane %v61, %v91
    %v93 = vlaneseq
    %v94 = vshrl.u32 %v93, 7
    %v95 = vsub.s32 7, %v94
    %v96 = vrot.slane %v61, %v95
    %v97 = vlaneseq
    %v98 = vshrl.u32 %v97, 7
    %v99 = vsub.s32 0, %v98
    %v100 = vrot.slane %v62, %v99
    %v101 = vlaneseq
    %v102 = vshrl.u32 %v101, 7
    %v103 = vsub.s32 1, %v102
    %v104 = vrot.slane %v62, %v103
    %v105 = vlaneseq
    %v106 = vshrl.u32 %v105, 7
    %v107 = vsub.s32 2, %v106
    %v108 = vrot.slane %v62, %v107
    %v109 = vlaneseq
    %v110 = vshrl.u32 %v109, 7
    %v111 = vsub.s32 3, %v110
    %v112 = vrot.slane %v62, %v111
    %v113 = vlaneseq
    %v114 = vshrl.u32 %v113, 7
    %v115 = vsub.s32 4, %v114
    %v116 = vrot.slane %v62, %v115
    %131 = vset.pattern.permute.xlu0 0
    %132 = vperm.xlu0 %131, %v35
    %v133 = vpop.permute.xlu0 %132
    %136 = vset.pattern.permute.xlu0 0
    %137 = vperm.xlu0 %136, %v36
    %v138 = vpop.permute.xlu0 %137
    %141 = vset.pattern.permute.xlu0 0
    %142 = vperm.xlu0 %141, %v37
    %v143 = vpop.permute.xlu0 %142
    %146 = vset.pattern.permute.xlu0 0
    %147 = vperm.xlu0 %146, %v38
    %v148 = vpop.permute.xlu0 %147
    %151 = vset.pattern.permute.xlu0 0
    %152 = vperm.xlu0 %151, %v39
    %v153 = vpop.permute.xlu0 %152
    %156 = vset.pattern.permute.xlu0 0
    %157 = vperm.xlu0 %156, %v40
    %v158 = vpop.permute.xlu0 %157
    %161 = vset.pattern.permute.xlu0 0
    %162 = vperm.xlu0 %161, %v41
    %v163 = vpop.permute.xlu0 %162
    %166 = vset.pattern.permute.xlu0 0
    %167 = vperm.xlu0 %166, %v42
    %v168 = vpop.permute.xlu0 %167
    %171 = vset.pattern.permute.xlu0 0
    %172 = vperm.xlu0 %171, %v43
    %v173 = vpop.permute.xlu0 %172
    %176 = vset.pattern.permute.xlu0 0
    %177 = vperm.xlu0 %176, %v44
    %v178 = vpop.permute.xlu0 %177
    %181 = vset.pattern.permute.xlu0 0
    %182 = vperm.xlu0 %181, %v45
    %v183 = vpop.permute.xlu0 %182
    %186 = vset.pattern.permute.xlu0 0
    %187 = vperm.xlu0 %186, %v46
    %v188 = vpop.permute.xlu0 %187
    %191 = vset.pattern.permute.xlu0 0
    %192 = vperm.xlu0 %191, %v47
    %v193 = vpop.permute.xlu0 %192
    %v195 = vlaneseq
    %v196 = vshrl.u32 %v195, 7
    %v197 = vsub.s32 0, %v196
    %v198 = vrot.slane %v48, %v197
    %v199 = vlaneseq
    %v200 = vshrl.u32 %v199, 7
    %v201 = vsub.s32 0, %v200
    %v202 = vrot.slane %v49, %v201
    %v203 = vlaneseq
    %v204 = vshrl.u32 %v203, 7
    %v205 = vsub.s32 0, %v204
    %v206 = vrot.slane %v50, %v205
    %v207 = vlaneseq
    %v208 = vshrl.u32 %v207, 7
    %v209 = vsub.s32 0, %v208
    %v210 = vrot.slane %v51, %v209
    %v211 = vlaneseq
    %v212 = vshrl.u32 %v211, 7
    %v213 = vsub.s32 0, %v212
    %v214 = vrot.slane %v52, %v213
    %v215 = vlaneseq
    %v216 = vshrl.u32 %v215, 7
    %v217 = vsub.s32 0, %v216
    %v218 = vrot.slane %v53, %v217
    %v219 = vlaneseq
    %v220 = vshrl.u32 %v219, 7
    %v221 = vsub.s32 0, %v220
    %v222 = vrot.slane %v54, %v221
    %v223 = vlaneseq
    %v224 = vshrl.u32 %v223, 7
    %v225 = vsub.s32 0, %v224
    %v226 = vrot.slane %v55, %v225
    %v227 = vlaneseq
    %v228 = vshrl.u32 %v227, 7
    %v229 = vsub.s32 0, %v228
    %v230 = vrot.slane %v56, %v229
    %v231 = vlaneseq
    %v232 = vshrl.u32 %v231, 7
    %v233 = vsub.s32 0, %v232
    %v234 = vrot.slane %v57, %v233
    %v235 = vlaneseq
    %v236 = vshrl.u32 %v235, 7
    %v237 = vsub.s32 0, %v236
    %v238 = vrot.slane %v58, %v237
    %v239 = vlaneseq
    %v240 = vshrl.u32 %v239, 7
    %v241 = vsub.s32 0, %v240
    %v242 = vrot.slane %v59, %v241
    %v243 = vlaneseq
    %v244 = vshrl.u32 %v243, 7
    %v245 = vsub.s32 0, %v244
    %v246 = vrot.slane %v60, %v245
    %v247 = vmul.f32 %v133, %v198
    %v248 = vmul.f32 %v133, %v202
    %v249 = vmul.f32 %v133, %v206
    %v250 = vmul.f32 %v133, %v210
    %v251 = vmul.f32 %v133, %v214
    %v252 = vmul.f32 %v133, %v218
    %v253 = vmul.f32 %v133, %v222
    %v254 = vmul.f32 %v133, %v226
    %v255 = vmul.f32 %v133, %v230
    %v256 = vmul.f32 %v133, %v234
    %v257 = vmul.f32 %v133, %v238
    %v258 = vmul.f32 %v133, %v242
    %v259 = vmul.f32 %v133, %v246
    %v260 = vmul.f32 %v138, %v198
    %v261 = vmul.f32 %v138, %v202
    %v262 = vmul.f32 %v138, %v206
    %v263 = vmul.f32 %v138, %v210
    %v264 = vmul.f32 %v138, %v214
    %v265 = vmul.f32 %v138, %v218
    %v266 = vmul.f32 %v138, %v222
    %v267 = vmul.f32 %v138, %v226
    %v268 = vmul.f32 %v138, %v230
    %v269 = vmul.f32 %v138, %v234
    %v270 = vmul.f32 %v138, %v238
    %v271 = vmul.f32 %v138, %v242
    %v272 = vmul.f32 %v138, %v246
    %v273 = vmul.f32 %v143, %v198
    %v274 = vmul.f32 %v143, %v202
    %v275 = vmul.f32 %v143, %v206
    %v276 = vmul.f32 %v143, %v210
    %v277 = vmul.f32 %v143, %v214
    %v278 = vmul.f32 %v143, %v218
    %v279 = vmul.f32 %v143, %v222
    %v280 = vmul.f32 %v143, %v226
    %v281 = vmul.f32 %v143, %v230
    %v282 = vmul.f32 %v143, %v234
    %v283 = vmul.f32 %v143, %v238
    %v284 = vmul.f32 %v143, %v242
    %v285 = vmul.f32 %v143, %v246
    %v286 = vmul.f32 %v148, %v198
    %v287 = vmul.f32 %v148, %v202
    %v288 = vmul.f32 %v148, %v206
    %v289 = vmul.f32 %v148, %v210
    %v290 = vmul.f32 %v148, %v214
    %v291 = vmul.f32 %v148, %v218
    %v292 = vmul.f32 %v148, %v222
    %v293 = vmul.f32 %v148, %v226
    %v294 = vmul.f32 %v148, %v230
    %v295 = vmul.f32 %v148, %v234
    %v296 = vmul.f32 %v148, %v238
    %v297 = vmul.f32 %v148, %v242
    %v298 = vmul.f32 %v148, %v246
    %v299 = vmul.f32 %v153, %v198
    %v300 = vmul.f32 %v153, %v202
    %v301 = vmul.f32 %v153, %v206
    %v302 = vmul.f32 %v153, %v210
    %v303 = vmul.f32 %v153, %v214
    %v304 = vmul.f32 %v153, %v218
    %v305 = vmul.f32 %v153, %v222
    %v306 = vmul.f32 %v153, %v226
    %v307 = vmul.f32 %v153, %v230
    %v308 = vmul.f32 %v153, %v234
    %v309 = vmul.f32 %v153, %v238
    %v310 = vmul.f32 %v153, %v242
    %v311 = vmul.f32 %v153, %v246
    %v312 = vmul.f32 %v158, %v198
    %v313 = vmul.f32 %v158, %v202
    %v314 = vmul.f32 %v158, %v206
    %v315 = vmul.f32 %v158, %v210
    %v316 = vmul.f32 %v158, %v214
    %v317 = vmul.f32 %v158, %v218
    %v318 = vmul.f32 %v158, %v222
    %v319 = vmul.f32 %v158, %v226
    %v320 = vmul.f32 %v158, %v230
    %v321 = vmul.f32 %v158, %v234
    %v322 = vmul.f32 %v158, %v238
    %v323 = vmul.f32 %v158, %v242
    %v324 = vmul.f32 %v158, %v246
    %v325 = vmul.f32 %v163, %v198
    %v326 = vmul.f32 %v163, %v202
    %v327 = vmul.f32 %v163, %v206
    %v328 = vmul.f32 %v163, %v210
    %v329 = vmul.f32 %v163, %v214
    %v330 = vmul.f32 %v163, %v218
    %v331 = vmul.f32 %v163, %v222
    %v332 = vmul.f32 %v163, %v226
    %v333 = vmul.f32 %v163, %v230
    %v334 = vmul.f32 %v163, %v234
    %v335 = vmul.f32 %v163, %v238
    %v336 = vmul.f32 %v163, %v242
    %v337 = vmul.f32 %v163, %v246
    %v338 = vmul.f32 %v168, %v198
    %v339 = vmul.f32 %v168, %v202
    %v340 = vmul.f32 %v168, %v206
    %v341 = vmul.f32 %v168, %v210
    %v342 = vmul.f32 %v168, %v214
    %v343 = vmul.f32 %v168, %v218
    %v344 = vmul.f32 %v168, %v222
    %v345 = vmul.f32 %v168, %v226
    %v346 = vmul.f32 %v168, %v230
    %v347 = vmul.f32 %v168, %v234
    %v348 = vmul.f32 %v168, %v238
    %v349 = vmul.f32 %v168, %v242
    %v350 = vmul.f32 %v168, %v246
    %v351 = vmul.f32 %v173, %v198
    %v352 = vmul.f32 %v173, %v202
    %v353 = vmul.f32 %v173, %v206
    %v354 = vmul.f32 %v173, %v210
    %v355 = vmul.f32 %v173, %v214
    %v356 = vmul.f32 %v173, %v218
    %v357 = vmul.f32 %v173, %v222
    %v358 = vmul.f32 %v173, %v226
    %v359 = vmul.f32 %v173, %v230
    %v360 = vmul.f32 %v173, %v234
    %v361 = vmul.f32 %v173, %v238
    %v362 = vmul.f32 %v173, %v242
    %v363 = vmul.f32 %v173, %v246
    %v364 = vmul.f32 %v178, %v198
    %v365 = vmul.f32 %v178, %v202
    %v366 = vmul.f32 %v178, %v206
    %v367 = vmul.f32 %v178, %v210
    %v368 = vmul.f32 %v178, %v214
    %v369 = vmul.f32 %v178, %v218
    %v370 = vmul.f32 %v178, %v222
    %v371 = vmul.f32 %v178, %v226
    %v372 = vmul.f32 %v178, %v230
    %v373 = vmul.f32 %v178, %v234
    %v374 = vmul.f32 %v178, %v238
    %v375 = vmul.f32 %v178, %v242
    %v376 = vmul.f32 %v178, %v246
    %v377 = vmul.f32 %v183, %v198
    %v378 = vmul.f32 %v183, %v202
    %v379 = vmul.f32 %v183, %v206
    %v380 = vmul.f32 %v183, %v210
    %v381 = vmul.f32 %v183, %v214
    %v382 = vmul.f32 %v183, %v218
    %v383 = vmul.f32 %v183, %v222
    %v384 = vmul.f32 %v183, %v226
    %v385 = vmul.f32 %v183, %v230
    %v386 = vmul.f32 %v183, %v234
    %v387 = vmul.f32 %v183, %v238
    %v388 = vmul.f32 %v183, %v242
    %v389 = vmul.f32 %v183, %v246
    %v390 = vmul.f32 %v188, %v198
    %v391 = vmul.f32 %v188, %v202
    %v392 = vmul.f32 %v188, %v206
    %v393 = vmul.f32 %v188, %v210
    %v394 = vmul.f32 %v188, %v214
    %v395 = vmul.f32 %v188, %v218
    %v396 = vmul.f32 %v188, %v222
    %v397 = vmul.f32 %v188, %v226
    %v398 = vmul.f32 %v188, %v230
    %v399 = vmul.f32 %v188, %v234
    %v400 = vmul.f32 %v188, %v238
    %v401 = vmul.f32 %v188, %v242
    %v402 = vmul.f32 %v188, %v246
    %v403 = vmul.f32 %v193, %v198
    %v404 = vmul.f32 %v193, %v202
    %v405 = vmul.f32 %v193, %v206
    %v406 = vmul.f32 %v193, %v210
    %v407 = vmul.f32 %v193, %v214
    %v408 = vmul.f32 %v193, %v218
    %v409 = vmul.f32 %v193, %v222
    %v410 = vmul.f32 %v193, %v226
    %v411 = vmul.f32 %v193, %v230
    %v412 = vmul.f32 %v193, %v234
    %v413 = vmul.f32 %v193, %v238
    %v414 = vmul.f32 %v193, %v242
    %v415 = vmul.f32 %v193, %v246
    %v416 = vadd.f32 %v68, %v247
    %v417 = vadd.f32 %v72, %v248
    %v418 = vadd.f32 %v76, %v249
    %v419 = vadd.f32 %v80, %v250
    %v420 = vadd.f32 %v84, %v251
    %v421 = vadd.f32 %v88, %v252
    %v422 = vadd.f32 %v92, %v253
    %v423 = vadd.f32 %v96, %v254
    %v424 = vadd.f32 %v100, %v255
    %v425 = vadd.f32 %v104, %v256
    %v426 = vadd.f32 %v108, %v257
    %v427 = vadd.f32 %v112, %v258
    %v428 = vadd.f32 %v116, %v259
    %v429 = vadd.f32 %v68, %v260
    %v430 = vadd.f32 %v72, %v261
    %v431 = vadd.f32 %v76, %v262
    %v432 = vadd.f32 %v80, %v263
    %v433 = vadd.f32 %v84, %v264
    %v434 = vadd.f32 %v88, %v265
    %v435 = vadd.f32 %v92, %v266
    %v436 = vadd.f32 %v96, %v267
    %v437 = vadd.f32 %v100, %v268
    %v438 = vadd.f32 %v104, %v269
    %v439 = vadd.f32 %v108, %v270
    %v440 = vadd.f32 %v112, %v271
    %v441 = vadd.f32 %v116, %v272
    %v442 = vadd.f32 %v68, %v273
    %v443 = vadd.f32 %v72, %v274
    %v444 = vadd.f32 %v76, %v275
    %v445 = vadd.f32 %v80, %v276
    %v446 = vadd.f32 %v84, %v277
    %v447 = vadd.f32 %v88, %v278
    %v448 = vadd.f32 %v92, %v279
    %v449 = vadd.f32 %v96, %v280
    %v450 = vadd.f32 %v100, %v281
    %v451 = vadd.f32 %v104, %v282
    %v452 = vadd.f32 %v108, %v283
    %v453 = vadd.f32 %v112, %v284
    %v454 = vadd.f32 %v116, %v285
    %v455 = vadd.f32 %v68, %v286
    %v456 = vadd.f32 %v72, %v287
    %v457 = vadd.f32 %v76, %v288
    %v458 = vadd.f32 %v80, %v289
    %v459 = vadd.f32 %v84, %v290
    %v460 = vadd.f32 %v88, %v291
    %v461 = vadd.f32 %v92, %v292
    %v462 = vadd.f32 %v96, %v293
    %v463 = vadd.f32 %v100, %v294
    %v464 = vadd.f32 %v104, %v295
    %v465 = vadd.f32 %v108, %v296
    %v466 = vadd.f32 %v112, %v297
    %v467 = vadd.f32 %v116, %v298
    %v468 = vadd.f32 %v68, %v299
    %v469 = vadd.f32 %v72, %v300
    %v470 = vadd.f32 %v76, %v301
    %v471 = vadd.f32 %v80, %v302
    %v472 = vadd.f32 %v84, %v303
    %v473 = vadd.f32 %v88, %v304
    %v474 = vadd.f32 %v92, %v305
    %v475 = vadd.f32 %v96, %v306
    %v476 = vadd.f32 %v100, %v307
    %v477 = vadd.f32 %v104, %v308
    %v478 = vadd.f32 %v108, %v309
    %v479 = vadd.f32 %v112, %v310
    %v480 = vadd.f32 %v116, %v311
    %v481 = vadd.f32 %v68, %v312
    %v482 = vadd.f32 %v72, %v313
    %v483 = vadd.f32 %v76, %v314
    %v484 = vadd.f32 %v80, %v315
    %v485 = vadd.f32 %v84, %v316
    %v486 = vadd.f32 %v88, %v317
    %v487 = vadd.f32 %v92, %v318
    %v488 = vadd.f32 %v96, %v319
    %v489 = vadd.f32 %v100, %v320
    %v490 = vadd.f32 %v104, %v321
    %v491 = vadd.f32 %v108, %v322
    %v492 = vadd.f32 %v112, %v323
    %v493 = vadd.f32 %v116, %v324
    %v494 = vadd.f32 %v68, %v325
    %v495 = vadd.f32 %v72, %v326
    %v496 = vadd.f32 %v76, %v327
    %v497 = vadd.f32 %v80, %v328
    %v498 = vadd.f32 %v84, %v329
    %v499 = vadd.f32 %v88, %v330
    %v500 = vadd.f32 %v92, %v331
    %v501 = vadd.f32 %v96, %v332
    %v502 = vadd.f32 %v100, %v333
    %v503 = vadd.f32 %v104, %v334
    %v504 = vadd.f32 %v108, %v335
    %v505 = vadd.f32 %v112, %v336
    %v506 = vadd.f32 %v116, %v337
    %v507 = vadd.f32 %v68, %v338
    %v508 = vadd.f32 %v72, %v339
    %v509 = vadd.f32 %v76, %v340
    %v510 = vadd.f32 %v80, %v341
    %v511 = vadd.f32 %v84, %v342
    %v512 = vadd.f32 %v88, %v343
    %v513 = vadd.f32 %v92, %v344
    %v514 = vadd.f32 %v96, %v345
    %v515 = vadd.f32 %v100, %v346
    %v516 = vadd.f32 %v104, %v347
    %v517 = vadd.f32 %v108, %v348
    %v518 = vadd.f32 %v112, %v349
    %v519 = vadd.f32 %v116, %v350
    %v520 = vadd.f32 %v68, %v351
    %v521 = vadd.f32 %v72, %v352
    %v522 = vadd.f32 %v76, %v353
    %v523 = vadd.f32 %v80, %v354
    %v524 = vadd.f32 %v84, %v355
    %v525 = vadd.f32 %v88, %v356
    %v526 = vadd.f32 %v92, %v357
    %v527 = vadd.f32 %v96, %v358
    %v528 = vadd.f32 %v100, %v359
    %v529 = vadd.f32 %v104, %v360
    %v530 = vadd.f32 %v108, %v361
    %v531 = vadd.f32 %v112, %v362
    %v532 = vadd.f32 %v116, %v363
    %v533 = vadd.f32 %v68, %v364
    %v534 = vadd.f32 %v72, %v365
    %v535 = vadd.f32 %v76, %v366
    %v536 = vadd.f32 %v80, %v367
    %v537 = vadd.f32 %v84, %v368
    %v538 = vadd.f32 %v88, %v369
    %v539 = vadd.f32 %v92, %v370
    %v540 = vadd.f32 %v96, %v371
    %v541 = vadd.f32 %v100, %v372
    %v542 = vadd.f32 %v104, %v373
    %v543 = vadd.f32 %v108, %v374
    %v544 = vadd.f32 %v112, %v375
    %v545 = vadd.f32 %v116, %v376
    %v546 = vadd.f32 %v68, %v377
    %v547 = vadd.f32 %v72, %v378
    %v548 = vadd.f32 %v76, %v379
    %v549 = vadd.f32 %v80, %v380
    %v550 = vadd.f32 %v84, %v381
    %v551 = vadd.f32 %v88, %v382
    %v552 = vadd.f32 %v92, %v383
    %v553 = vadd.f32 %v96, %v384
    %v554 = vadd.f32 %v100, %v385
    %v555 = vadd.f32 %v104, %v386
    %v556 = vadd.f32 %v108, %v387
    %v557 = vadd.f32 %v112, %v388
    %v558 = vadd.f32 %v116, %v389
    %v559 = vadd.f32 %v68, %v390
    %v560 = vadd.f32 %v72, %v391
    %v561 = vadd.f32 %v76, %v392
    %v562 = vadd.f32 %v80, %v393
    %v563 = vadd.f32 %v84, %v394
    %v564 = vadd.f32 %v88, %v395
    %v565 = vadd.f32 %v92, %v396
    %v566 = vadd.f32 %v96, %v397
    %v567 = vadd.f32 %v100, %v398
    %v568 = vadd.f32 %v104, %v399
    %v569 = vadd.f32 %v108, %v400
    %v570 = vadd.f32 %v112, %v401
    %v571 = vadd.f32 %v116, %v402
    %v572 = vadd.f32 %v68, %v403
    %v573 = vadd.f32 %v72, %v404
    %v574 = vadd.f32 %v76, %v405
    %v575 = vadd.f32 %v80, %v406
    %v576 = vadd.f32 %v84, %v407
    %v577 = vadd.f32 %v88, %v408
    %v578 = vadd.f32 %v92, %v409
    %v579 = vadd.f32 %v96, %v410
    %v580 = vadd.f32 %v100, %v411
    %v581 = vadd.f32 %v104, %v412
    %v582 = vadd.f32 %v108, %v413
    %v583 = vadd.f32 %v112, %v414
    %v584 = vadd.f32 %v116, %v415
    %585 = vset.pattern.permute.xlu0 1
    %586 = vperm.xlu0 %585, %v35
    %v587 = vpop.permute.xlu0 %586
    %589 = vset.pattern.permute.xlu0 1
    %590 = vperm.xlu0 %589, %v36
    %v591 = vpop.permute.xlu0 %590
    %593 = vset.pattern.permute.xlu0 1
    %594 = vperm.xlu0 %593, %v37
    %v595 = vpop.permute.xlu0 %594
    %597 = vset.pattern.permute.xlu0 1
    %598 = vperm.xlu0 %597, %v38
    %v599 = vpop.permute.xlu0 %598
    %601 = vset.pattern.permute.xlu0 1
    %602 = vperm.xlu0 %601, %v39
    %v603 = vpop.permute.xlu0 %602
    %605 = vset.pattern.permute.xlu0 1
    %606 = vperm.xlu0 %605, %v40
    %v607 = vpop.permute.xlu0 %606
    %609 = vset.pattern.permute.xlu0 1
    %610 = vperm.xlu0 %609, %v41
    %v611 = vpop.permute.xlu0 %610
    %613 = vset.pattern.permute.xlu0 1
    %614 = vperm.xlu0 %613, %v42
    %v615 = vpop.permute.xlu0 %614
    %617 = vset.pattern.permute.xlu0 1
    %618 = vperm.xlu0 %617, %v43
    %v619 = vpop.permute.xlu0 %618
    %621 = vset.pattern.permute.xlu0 1
    %622 = vperm.xlu0 %621, %v44
    %v623 = vpop.permute.xlu0 %622
    %625 = vset.pattern.permute.xlu0 1
    %626 = vperm.xlu0 %625, %v45
    %v627 = vpop.permute.xlu0 %626
    %629 = vset.pattern.permute.xlu0 1
    %630 = vperm.xlu0 %629, %v46
    %v631 = vpop.permute.xlu0 %630
    %633 = vset.pattern.permute.xlu0 1
    %634 = vperm.xlu0 %633, %v47
    %v635 = vpop.permute.xlu0 %634
    %v637 = vlaneseq
    %v638 = vshrl.u32 %v637, 7
    %v639 = vsub.s32 1, %v638
    %v640 = vrot.slane %v48, %v639
    %v641 = vlaneseq
    %v642 = vshrl.u32 %v641, 7
    %v643 = vsub.s32 1, %v642
    %v644 = vrot.slane %v49, %v643
    %v645 = vlaneseq
    %v646 = vshrl.u32 %v645, 7
    %v647 = vsub.s32 1, %v646
    %v648 = vrot.slane %v50, %v647
    %v649 = vlaneseq
    %v650 = vshrl.u32 %v649, 7
    %v651 = vsub.s32 1, %v650
    %v652 = vrot.slane %v51, %v651
    %v653 = vlaneseq
    %v654 = vshrl.u32 %v653, 7
    %v655 = vsub.s32 1, %v654
    %v656 = vrot.slane %v52, %v655
    %v657 = vlaneseq
    %v658 = vshrl.u32 %v657, 7
    %v659 = vsub.s32 1, %v658
    %v660 = vrot.slane %v53, %v659
    %v661 = vlaneseq
    %v662 = vshrl.u32 %v661, 7
    %v663 = vsub.s32 1, %v662
    %v664 = vrot.slane %v54, %v663
    %v665 = vlaneseq
    %v666 = vshrl.u32 %v665, 7
    %v667 = vsub.s32 1, %v666
    %v668 = vrot.slane %v55, %v667
    %v669 = vlaneseq
    %v670 = vshrl.u32 %v669, 7
    %v671 = vsub.s32 1, %v670
    %v672 = vrot.slane %v56, %v671
    %v673 = vlaneseq
    %v674 = vshrl.u32 %v673, 7
    %v675 = vsub.s32 1, %v674
    %v676 = vrot.slane %v57, %v675
    %v677 = vlaneseq
    %v678 = vshrl.u32 %v677, 7
    %v679 = vsub.s32 1, %v678
    %v680 = vrot.slane %v58, %v679
    %v681 = vlaneseq
    %v682 = vshrl.u32 %v681, 7
    %v683 = vsub.s32 1, %v682
    %v684 = vrot.slane %v59, %v683
    %v685 = vlaneseq
    %v686 = vshrl.u32 %v685, 7
    %v687 = vsub.s32 1, %v686
    %v688 = vrot.slane %v60, %v687
    %v689 = vmul.f32 %v587, %v640
    %v690 = vmul.f32 %v587, %v644
    %v691 = vmul.f32 %v587, %v648
    %v692 = vmul.f32 %v587, %v652
    %v693 = vmul.f32 %v587, %v656
    %v694 = vmul.f32 %v587, %v660
    %v695 = vmul.f32 %v587, %v664
    %v696 = vmul.f32 %v587, %v668
    %v697 = vmul.f32 %v587, %v672
    %v698 = vmul.f32 %v587, %v676
    %v699 = vmul.f32 %v587, %v680
    %v700 = vmul.f32 %v587, %v684
    %v701 = vmul.f32 %v587, %v688
    %v702 = vmul.f32 %v591, %v640
    %v703 = vmul.f32 %v591, %v644
    %v704 = vmul.f32 %v591, %v648
    %v705 = vmul.f32 %v591, %v652
    %v706 = vmul.f32 %v591, %v656
    %v707 = vmul.f32 %v591, %v660
    %v708 = vmul.f32 %v591, %v664
    %v709 = vmul.f32 %v591, %v668
    %v710 = vmul.f32 %v591, %v672
    %v711 = vmul.f32 %v591, %v676
    %v712 = vmul.f32 %v591, %v680
    %v713 = vmul.f32 %v591, %v684
    %v714 = vmul.f32 %v591, %v688
    %v715 = vmul.f32 %v595, %v640
    %v716 = vmul.f32 %v595, %v644
    %v717 = vmul.f32 %v595, %v648
    %v718 = vmul.f32 %v595, %v652
    %v719 = vmul.f32 %v595, %v656
    %v720 = vmul.f32 %v595, %v660
    %v721 = vmul.f32 %v595, %v664
    %v722 = vmul.f32 %v595, %v668
    %v723 = vmul.f32 %v595, %v672
    %v724 = vmul.f32 %v595, %v676
    %v725 = vmul.f32 %v595, %v680
    %v726 = vmul.f32 %v595, %v684
    %v727 = vmul.f32 %v595, %v688
    %v728 = vmul.f32 %v599, %v640
    %v729 = vmul.f32 %v599, %v644
    %v730 = vmul.f32 %v599, %v648
    %v731 = vmul.f32 %v599, %v652
    %v732 = vmul.f32 %v599, %v656
    %v733 = vmul.f32 %v599, %v660
    %v734 = vmul.f32 %v599, %v664
    %v735 = vmul.f32 %v599, %v668
    %v736 = vmul.f32 %v599, %v672
    %v737 = vmul.f32 %v599, %v676
    %v738 = vmul.f32 %v599, %v680
    %v739 = vmul.f32 %v599, %v684
    %v740 = vmul.f32 %v599, %v688
    %v741 = vmul.f32 %v603, %v640
    %v742 = vmul.f32 %v603, %v644
    %v743 = vmul.f32 %v603, %v648
    %v744 = vmul.f32 %v603, %v652
    %v745 = vmul.f32 %v603, %v656
    %v746 = vmul.f32 %v603, %v660
    %v747 = vmul.f32 %v603, %v664
    %v748 = vmul.f32 %v603, %v668
    %v749 = vmul.f32 %v603, %v672
    %v750 = vmul.f32 %v603, %v676
    %v751 = vmul.f32 %v603, %v680
    %v752 = vmul.f32 %v603, %v684
    %v753 = vmul.f32 %v603, %v688
    %v754 = vmul.f32 %v607, %v640
    %v755 = vmul.f32 %v607, %v644
    %v756 = vmul.f32 %v607, %v648
    %v757 = vmul.f32 %v607, %v652
    %v758 = vmul.f32 %v607, %v656
    %v759 = vmul.f32 %v607, %v660
    %v760 = vmul.f32 %v607, %v664
    %v761 = vmul.f32 %v607, %v668
    %v762 = vmul.f32 %v607, %v672
    %v763 = vmul.f32 %v607, %v676
    %v764 = vmul.f32 %v607, %v680
    %v765 = vmul.f32 %v607, %v684
    %v766 = vmul.f32 %v607, %v688
    %v767 = vmul.f32 %v611, %v640
    %v768 = vmul.f32 %v611, %v644
    %v769 = vmul.f32 %v611, %v648
    %v770 = vmul.f32 %v611, %v652
    %v771 = vmul.f32 %v611, %v656
    %v772 = vmul.f32 %v611, %v660
    %v773 = vmul.f32 %v611, %v664
    %v774 = vmul.f32 %v611, %v668
    %v775 = vmul.f32 %v611, %v672
    %v776 = vmul.f32 %v611, %v676
    %v777 = vmul.f32 %v611, %v680
    %v778 = vmul.f32 %v611, %v684
    %v779 = vmul.f32 %v611, %v688
    %v780 = vmul.f32 %v615, %v640
    %v781 = vmul.f32 %v615, %v644
    %v782 = vmul.f32 %v615, %v648
    %v783 = vmul.f32 %v615, %v652
    %v784 = vmul.f32 %v615, %v656
    %v785 = vmul.f32 %v615, %v660
    %v786 = vmul.f32 %v615, %v664
    %v787 = vmul.f32 %v615, %v668
    %v788 = vmul.f32 %v615, %v672
    %v789 = vmul.f32 %v615, %v676
    %v790 = vmul.f32 %v615, %v680
    %v791 = vmul.f32 %v615, %v684
    %v792 = vmul.f32 %v615, %v688
    %v793 = vmul.f32 %v619, %v640
    %v794 = vmul.f32 %v619, %v644
    %v795 = vmul.f32 %v619, %v648
    %v796 = vmul.f32 %v619, %v652
    %v797 = vmul.f32 %v619, %v656
    %v798 = vmul.f32 %v619, %v660
    %v799 = vmul.f32 %v619, %v664
    %v800 = vmul.f32 %v619, %v668
    %v801 = vmul.f32 %v619, %v672
    %v802 = vmul.f32 %v619, %v676
    %v803 = vmul.f32 %v619, %v680
    %v804 = vmul.f32 %v619, %v684
    %v805 = vmul.f32 %v619, %v688
    %v806 = vmul.f32 %v623, %v640
    %v807 = vmul.f32 %v623, %v644
    %v808 = vmul.f32 %v623, %v648
    %v809 = vmul.f32 %v623, %v652
    %v810 = vmul.f32 %v623, %v656
    %v811 = vmul.f32 %v623, %v660
    %v812 = vmul.f32 %v623, %v664
    %v813 = vmul.f32 %v623, %v668
    %v814 = vmul.f32 %v623, %v672
    %v815 = vmul.f32 %v623, %v676
    %v816 = vmul.f32 %v623, %v680
    %v817 = vmul.f32 %v623, %v684
    %v818 = vmul.f32 %v623, %v688
    %v819 = vmul.f32 %v627, %v640
    %v820 = vmul.f32 %v627, %v644
    %v821 = vmul.f32 %v627, %v648
    %v822 = vmul.f32 %v627, %v652
    %v823 = vmul.f32 %v627, %v656
    %v824 = vmul.f32 %v627, %v660
    %v825 = vmul.f32 %v627, %v664
    %v826 = vmul.f32 %v627, %v668
    %v827 = vmul.f32 %v627, %v672
    %v828 = vmul.f32 %v627, %v676
    %v829 = vmul.f32 %v627, %v680
    %v830 = vmul.f32 %v627, %v684
    %v831 = vmul.f32 %v627, %v688
    %v832 = vmul.f32 %v631, %v640
    %v833 = vmul.f32 %v631, %v644
    %v834 = vmul.f32 %v631, %v648
    %v835 = vmul.f32 %v631, %v652
    %v836 = vmul.f32 %v631, %v656
    %v837 = vmul.f32 %v631, %v660
    %v838 = vmul.f32 %v631, %v664
    %v839 = vmul.f32 %v631, %v668
    %v840 = vmul.f32 %v631, %v672
    %v841 = vmul.f32 %v631, %v676
    %v842 = vmul.f32 %v631, %v680
    %v843 = vmul.f32 %v631, %v684
    %v844 = vmul.f32 %v631, %v688
    %v845 = vmul.f32 %v635, %v640
    %v846 = vmul.f32 %v635, %v644
    %v847 = vmul.f32 %v635, %v648
    %v848 = vmul.f32 %v635, %v652
    %v849 = vmul.f32 %v635, %v656
    %v850 = vmul.f32 %v635, %v660
    %v851 = vmul.f32 %v635, %v664
    %v852 = vmul.f32 %v635, %v668
    %v853 = vmul.f32 %v635, %v672
    %v854 = vmul.f32 %v635, %v676
    %v855 = vmul.f32 %v635, %v680
    %v856 = vmul.f32 %v635, %v684
    %v857 = vmul.f32 %v635, %v688
    %v858 = vadd.f32 %v416, %v689
    %v859 = vadd.f32 %v417, %v690
    %v860 = vadd.f32 %v418, %v691
    %v861 = vadd.f32 %v419, %v692
    %v862 = vadd.f32 %v420, %v693
    %v863 = vadd.f32 %v421, %v694
    %v864 = vadd.f32 %v422, %v695
    %v865 = vadd.f32 %v423, %v696
    %v866 = vadd.f32 %v424, %v697
    %v867 = vadd.f32 %v425, %v698
    %v868 = vadd.f32 %v426, %v699
    %v869 = vadd.f32 %v427, %v700
    %v870 = vadd.f32 %v428, %v701
    %v871 = vadd.f32 %v429, %v702
    %v872 = vadd.f32 %v430, %v703
    %v873 = vadd.f32 %v431, %v704
    %v874 = vadd.f32 %v432, %v705
    %v875 = vadd.f32 %v433, %v706
    %v876 = vadd.f32 %v434, %v707
    %v877 = vadd.f32 %v435, %v708
    %v878 = vadd.f32 %v436, %v709
    %v879 = vadd.f32 %v437, %v710
    %v880 = vadd.f32 %v438, %v711
    %v881 = vadd.f32 %v439, %v712
    %v882 = vadd.f32 %v440, %v713
    %v883 = vadd.f32 %v441, %v714
    %v884 = vadd.f32 %v442, %v715
    %v885 = vadd.f32 %v443, %v716
    %v886 = vadd.f32 %v444, %v717
    %v887 = vadd.f32 %v445, %v718
    %v888 = vadd.f32 %v446, %v719
    %v889 = vadd.f32 %v447, %v720
    %v890 = vadd.f32 %v448, %v721
    %v891 = vadd.f32 %v449, %v722
    %v892 = vadd.f32 %v450, %v723
    %v893 = vadd.f32 %v451, %v724
    %v894 = vadd.f32 %v452, %v725
    %v895 = vadd.f32 %v453, %v726
    %v896 = vadd.f32 %v454, %v727
    %v897 = vadd.f32 %v455, %v728
    %v898 = vadd.f32 %v456, %v729
    %v899 = vadd.f32 %v457, %v730
    %v900 = vadd.f32 %v458, %v731
    %v901 = vadd.f32 %v459, %v732
    %v902 = vadd.f32 %v460, %v733
    %v903 = vadd.f32 %v461, %v734
    %v904 = vadd.f32 %v462, %v735
    %v905 = vadd.f32 %v463, %v736
    %v906 = vadd.f32 %v464, %v737
    %v907 = vadd.f32 %v465, %v738
    %v908 = vadd.f32 %v466, %v739
    %v909 = vadd.f32 %v467, %v740
    %v910 = vadd.f32 %v468, %v741
    %v911 = vadd.f32 %v469, %v742
    %v912 = vadd.f32 %v470, %v743
    %v913 = vadd.f32 %v471, %v744
    %v914 = vadd.f32 %v472, %v745
    %v915 = vadd.f32 %v473, %v746
    %v916 = vadd.f32 %v474, %v747
    %v917 = vadd.f32 %v475, %v748
    %v918 = vadd.f32 %v476, %v749
    %v919 = vadd.f32 %v477, %v750
    %v920 = vadd.f32 %v478, %v751
    %v921 = vadd.f32 %v479, %v752
    %v922 = vadd.f32 %v480, %v753
    %v923 = vadd.f32 %v481, %v754
    %v924 = vadd.f32 %v482, %v755
    %v925 = vadd.f32 %v483, %v756
    %v926 = vadd.f32 %v484, %v757
    %v927 = vadd.f32 %v485, %v758
    %v928 = vadd.f32 %v486, %v759
    %v929 = vadd.f32 %v487, %v760
    %v930 = vadd.f32 %v488, %v761
    %v931 = vadd.f32 %v489, %v762
    %v932 = vadd.f32 %v490, %v763
    %v933 = vadd.f32 %v491, %v764
    %v934 = vadd.f32 %v492, %v765
    %v935 = vadd.f32 %v493, %v766
    %v936 = vadd.f32 %v494, %v767
    %v937 = vadd.f32 %v495, %v768
    %v938 = vadd.f32 %v496, %v769
    %v939 = vadd.f32 %v497, %v770
    %v940 = vadd.f32 %v498, %v771
    %v941 = vadd.f32 %v499, %v772
    %v942 = vadd.f32 %v500, %v773
    %v943 = vadd.f32 %v501, %v774
    %v944 = vadd.f32 %v502, %v775
    %v945 = vadd.f32 %v503, %v776
    %v946 = vadd.f32 %v504, %v777
    %v947 = vadd.f32 %v505, %v778
    %v948 = vadd.f32 %v506, %v779
    %v949 = vadd.f32 %v507, %v780
    %v950 = vadd.f32 %v508, %v781
    %v951 = vadd.f32 %v509, %v782
    %v952 = vadd.f32 %v510, %v783
    %v953 = vadd.f32 %v511, %v784
    %v954 = vadd.f32 %v512, %v785
    %v955 = vadd.f32 %v513, %v786
    %v956 = vadd.f32 %v514, %v787
    %v957 = vadd.f32 %v515, %v788
    %v958 = vadd.f32 %v516, %v789
    %v959 = vadd.f32 %v517, %v790
    %v960 = vadd.f32 %v518, %v791
    %v961 = vadd.f32 %v519, %v792
    %v962 = vadd.f32 %v520, %v793
    %v963 = vadd.f32 %v521, %v794
    %v964 = vadd.f32 %v522, %v795
    %v965 = vadd.f32 %v523, %v796
    %v966 = vadd.f32 %v524, %v797
    %v967 = vadd.f32 %v525, %v798
    %v968 = vadd.f32 %v526, %v799
    %v969 = vadd.f32 %v527, %v800
    %v970 = vadd.f32 %v528, %v801
    %v971 = vadd.f32 %v529, %v802
    %v972 = vadd.f32 %v530, %v803
    %v973 = vadd.f32 %v531, %v804
    %v974 = vadd.f32 %v532, %v805
    %v975 = vadd.f32 %v533, %v806
    %v976 = vadd.f32 %v534, %v807
    %v977 = vadd.f32 %v535, %v808
    %v978 = vadd.f32 %v536, %v809
    %v979 = vadd.f32 %v537, %v810
    %v980 = vadd.f32 %v538, %v811
    %v981 = vadd.f32 %v539, %v812
    %v982 = vadd.f32 %v540, %v813
    %v983 = vadd.f32 %v541, %v814
    %v984 = vadd.f32 %v542, %v815
    %v985 = vadd.f32 %v543, %v816
    %v986 = vadd.f32 %v544, %v817
    %v987 = vadd.f32 %v545, %v818
    %v988 = vadd.f32 %v546, %v819
    %v989 = vadd.f32 %v547, %v820
    %v990 = vadd.f32 %v548, %v821
    %v991 = vadd.f32 %v549, %v822
    %v992 = vadd.f32 %v550, %v823
    %v993 = vadd.f32 %v551, %v824
    %v994 = vadd.f32 %v552, %v825
    %v995 = vadd.f32 %v553, %v826
    %v996 = vadd.f32 %v554, %v827
    %v997 = vadd.f32 %v555, %v828
    %v998 = vadd.f32 %v556, %v829
    %v999 = vadd.f32 %v557, %v830
    %v1000 = vadd.f32 %v558, %v831
    %v1001 = vadd.f32 %v559, %v832
    %v1002 = vadd.f32 %v560, %v833
    %v1003 = vadd.f32 %v561, %v834
    %v1004 = vadd.f32 %v562, %v835
    %v1005 = vadd.f32 %v563, %v836
    %v1006 = vadd.f32 %v564, %v837
    %v1007 = vadd.f32 %v565, %v838
    %v1008 = vadd.f32 %v566, %v839
    %v1009 = vadd.f32 %v567, %v840
    %v1010 = vadd.f32 %v568, %v841
    %v1011 = vadd.f32 %v569, %v842
    %v1012 = vadd.f32 %v570, %v843
    %v1013 = vadd.f32 %v571, %v844
    %v1014 = vadd.f32 %v572, %v845
    %v1015 = vadd.f32 %v573, %v846
    %v1016 = vadd.f32 %v574, %v847
    %v1017 = vadd.f32 %v575, %v848
    %v1018 = vadd.f32 %v576, %v849
    %v1019 = vadd.f32 %v577, %v850
    %v1020 = vadd.f32 %v578, %v851
    %v1021 = vadd.f32 %v579, %v852
    %v1022 = vadd.f32 %v580, %v853
    %v1023 = vadd.f32 %v581, %v854
    %v1024 = vadd.f32 %v582, %v855
    %v1025 = vadd.f32 %v583, %v856
    %v1026 = vadd.f32 %v584, %v857
    %1027 = vset.pattern.permute.xlu0 2
    %1028 = vperm.xlu0 %1027, %v35
    %v1029 = vpop.permute.xlu0 %1028
    %1031 = vset.pattern.permute.xlu0 2
    %1032 = vperm.xlu0 %1031, %v36
    %v1033 = vpop.permute.xlu0 %1032
    %1035 = vset.pattern.permute.xlu0 2
    %1036 = vperm.xlu0 %1035, %v37
    %v1037 = vpop.permute.xlu0 %1036
    %1039 = vset.pattern.permute.xlu0 2
    %1040 = vperm.xlu0 %1039, %v38
    %v1041 = vpop.permute.xlu0 %1040
    %1043 = vset.pattern.permute.xlu0 2
    %1044 = vperm.xlu0 %1043, %v39
    %v1045 = vpop.permute.xlu0 %1044
    %1047 = vset.pattern.permute.xlu0 2
    %1048 = vperm.xlu0 %1047, %v40
    %v1049 = vpop.permute.xlu0 %1048
    %1051 = vset.pattern.permute.xlu0 2
    %1052 = vperm.xlu0 %1051, %v41
    %v1053 = vpop.permute.xlu0 %1052
    %1055 = vset.pattern.permute.xlu0 2
    %1056 = vperm.xlu0 %1055, %v42
    %v1057 = vpop.permute.xlu0 %1056
    %1059 = vset.pattern.permute.xlu0 2
    %1060 = vperm.xlu0 %1059, %v43
    %v1061 = vpop.permute.xlu0 %1060
    %1063 = vset.pattern.permute.xlu0 2
    %1064 = vperm.xlu0 %1063, %v44
    %v1065 = vpop.permute.xlu0 %1064
    %1067 = vset.pattern.permute.xlu0 2
    %1068 = vperm.xlu0 %1067, %v45
    %v1069 = vpop.permute.xlu0 %1068
    %1071 = vset.pattern.permute.xlu0 2
    %1072 = vperm.xlu0 %1071, %v46
    %v1073 = vpop.permute.xlu0 %1072
    %1075 = vset.pattern.permute.xlu0 2
    %1076 = vperm.xlu0 %1075, %v47
    %v1077 = vpop.permute.xlu0 %1076
    %v1079 = vlaneseq
    %v1080 = vshrl.u32 %v1079, 7
    %v1081 = vsub.s32 2, %v1080
    %v1082 = vrot.slane %v48, %v1081
    %v1083 = vlaneseq
    %v1084 = vshrl.u32 %v1083, 7
    %v1085 = vsub.s32 2, %v1084
    %v1086 = vrot.slane %v49, %v1085
    %v1087 = vlaneseq
    %v1088 = vshrl.u32 %v1087, 7
    %v1089 = vsub.s32 2, %v1088
    %v1090 = vrot.slane %v50, %v1089
    %v1091 = vlaneseq
    %v1092 = vshrl.u32 %v1091, 7
    %v1093 = vsub.s32 2, %v1092
    %v1094 = vrot.slane %v51, %v1093
    %v1095 = vlaneseq
    %v1096 = vshrl.u32 %v1095, 7
    %v1097 = vsub.s32 2, %v1096
    %v1098 = vrot.slane %v52, %v1097
    %v1099 = vlaneseq
    %v1100 = vshrl.u32 %v1099, 7
    %v1101 = vsub.s32 2, %v1100
    %v1102 = vrot.slane %v53, %v1101
    %v1103 = vlaneseq
    %v1104 = vshrl.u32 %v1103, 7
    %v1105 = vsub.s32 2, %v1104
    %v1106 = vrot.slane %v54, %v1105
    %v1107 = vlaneseq
    %v1108 = vshrl.u32 %v1107, 7
    %v1109 = vsub.s32 2, %v1108
    %v1110 = vrot.slane %v55, %v1109
    %v1111 = vlaneseq
    %v1112 = vshrl.u32 %v1111, 7
    %v1113 = vsub.s32 2, %v1112
    %v1114 = vrot.slane %v56, %v1113
    %v1115 = vlaneseq
    %v1116 = vshrl.u32 %v1115, 7
    %v1117 = vsub.s32 2, %v1116
    %v1118 = vrot.slane %v57, %v1117
    %v1119 = vlaneseq
    %v1120 = vshrl.u32 %v1119, 7
    %v1121 = vsub.s32 2, %v1120
    %v1122 = vrot.slane %v58, %v1121
    %v1123 = vlaneseq
    %v1124 = vshrl.u32 %v1123, 7
    %v1125 = vsub.s32 2, %v1124
    %v1126 = vrot.slane %v59, %v1125
    %v1127 = vlaneseq
    %v1128 = vshrl.u32 %v1127, 7
    %v1129 = vsub.s32 2, %v1128
    %v1130 = vrot.slane %v60, %v1129
    %v1131 = vmul.f32 %v1029, %v1082
    %v1132 = vmul.f32 %v1029, %v1086
    %v1133 = vmul.f32 %v1029, %v1090
    %v1134 = vmul.f32 %v1029, %v1094
    %v1135 = vmul.f32 %v1029, %v1098
    %v1136 = vmul.f32 %v1029, %v1102
    %v1137 = vmul.f32 %v1029, %v1106
    %v1138 = vmul.f32 %v1029, %v1110
    %v1139 = vmul.f32 %v1029, %v1114
    %v1140 = vmul.f32 %v1029, %v1118
    %v1141 = vmul.f32 %v1029, %v1122
    %v1142 = vmul.f32 %v1029, %v1126
    %v1143 = vmul.f32 %v1029, %v1130
    %v1144 = vmul.f32 %v1033, %v1082
    %v1145 = vmul.f32 %v1033, %v1086
    %v1146 = vmul.f32 %v1033, %v1090
    %v1147 = vmul.f32 %v1033, %v1094
    %v1148 = vmul.f32 %v1033, %v1098
    %v1149 = vmul.f32 %v1033, %v1102
    %v1150 = vmul.f32 %v1033, %v1106
    %v1151 = vmul.f32 %v1033, %v1110
    %v1152 = vmul.f32 %v1033, %v1114
    %v1153 = vmul.f32 %v1033, %v1118
    %v1154 = vmul.f32 %v1033, %v1122
    %v1155 = vmul.f32 %v1033, %v1126
    %v1156 = vmul.f32 %v1033, %v1130
    %v1157 = vmul.f32 %v1037, %v1082
    %v1158 = vmul.f32 %v1037, %v1086
    %v1159 = vmul.f32 %v1037, %v1090
    %v1160 = vmul.f32 %v1037, %v1094
    %v1161 = vmul.f32 %v1037, %v1098
    %v1162 = vmul.f32 %v1037, %v1102
    %v1163 = vmul.f32 %v1037, %v1106
    %v1164 = vmul.f32 %v1037, %v1110
    %v1165 = vmul.f32 %v1037, %v1114
    %v1166 = vmul.f32 %v1037, %v1118
    %v1167 = vmul.f32 %v1037, %v1122
    %v1168 = vmul.f32 %v1037, %v1126
    %v1169 = vmul.f32 %v1037, %v1130
    %v1170 = vmul.f32 %v1041, %v1082
    %v1171 = vmul.f32 %v1041, %v1086
    %v1172 = vmul.f32 %v1041, %v1090
    %v1173 = vmul.f32 %v1041, %v1094
    %v1174 = vmul.f32 %v1041, %v1098
    %v1175 = vmul.f32 %v1041, %v1102
    %v1176 = vmul.f32 %v1041, %v1106
    %v1177 = vmul.f32 %v1041, %v1110
    %v1178 = vmul.f32 %v1041, %v1114
    %v1179 = vmul.f32 %v1041, %v1118
    %v1180 = vmul.f32 %v1041, %v1122
    %v1181 = vmul.f32 %v1041, %v1126
    %v1182 = vmul.f32 %v1041, %v1130
    %v1183 = vmul.f32 %v1045, %v1082
    %v1184 = vmul.f32 %v1045, %v1086
    %v1185 = vmul.f32 %v1045, %v1090
    %v1186 = vmul.f32 %v1045, %v1094
    %v1187 = vmul.f32 %v1045, %v1098
    %v1188 = vmul.f32 %v1045, %v1102
    %v1189 = vmul.f32 %v1045, %v1106
    %v1190 = vmul.f32 %v1045, %v1110
    %v1191 = vmul.f32 %v1045, %v1114
    %v1192 = vmul.f32 %v1045, %v1118
    %v1193 = vmul.f32 %v1045, %v1122
    %v1194 = vmul.f32 %v1045, %v1126
    %v1195 = vmul.f32 %v1045, %v1130
    %v1196 = vmul.f32 %v1049, %v1082
    %v1197 = vmul.f32 %v1049, %v1086
    %v1198 = vmul.f32 %v1049, %v1090
    %v1199 = vmul.f32 %v1049, %v1094
    %v1200 = vmul.f32 %v1049, %v1098
    %v1201 = vmul.f32 %v1049, %v1102
    %v1202 = vmul.f32 %v1049, %v1106
    %v1203 = vmul.f32 %v1049, %v1110
    %v1204 = vmul.f32 %v1049, %v1114
    %v1205 = vmul.f32 %v1049, %v1118
    %v1206 = vmul.f32 %v1049, %v1122
    %v1207 = vmul.f32 %v1049, %v1126
    %v1208 = vmul.f32 %v1049, %v1130
    %v1209 = vmul.f32 %v1053, %v1082
    %v1210 = vmul.f32 %v1053, %v1086
    %v1211 = vmul.f32 %v1053, %v1090
    %v1212 = vmul.f32 %v1053, %v1094
    %v1213 = vmul.f32 %v1053, %v1098
    %v1214 = vmul.f32 %v1053, %v1102
    %v1215 = vmul.f32 %v1053, %v1106
    %v1216 = vmul.f32 %v1053, %v1110
    %v1217 = vmul.f32 %v1053, %v1114
    %v1218 = vmul.f32 %v1053, %v1118
    %v1219 = vmul.f32 %v1053, %v1122
    %v1220 = vmul.f32 %v1053, %v1126
    %v1221 = vmul.f32 %v1053, %v1130
    %v1222 = vmul.f32 %v1057, %v1082
    %v1223 = vmul.f32 %v1057, %v1086
    %v1224 = vmul.f32 %v1057, %v1090
    %v1225 = vmul.f32 %v1057, %v1094
    %v1226 = vmul.f32 %v1057, %v1098
    %v1227 = vmul.f32 %v1057, %v1102
    %v1228 = vmul.f32 %v1057, %v1106
    %v1229 = vmul.f32 %v1057, %v1110
    %v1230 = vmul.f32 %v1057, %v1114
    %v1231 = vmul.f32 %v1057, %v1118
    %v1232 = vmul.f32 %v1057, %v1122
    %v1233 = vmul.f32 %v1057, %v1126
    %v1234 = vmul.f32 %v1057, %v1130
    %v1235 = vmul.f32 %v1061, %v1082
    %v1236 = vmul.f32 %v1061, %v1086
    %v1237 = vmul.f32 %v1061, %v1090
    %v1238 = vmul.f32 %v1061, %v1094
    %v1239 = vmul.f32 %v1061, %v1098
    %v1240 = vmul.f32 %v1061, %v1102
    %v1241 = vmul.f32 %v1061, %v1106
    %v1242 = vmul.f32 %v1061, %v1110
    %v1243 = vmul.f32 %v1061, %v1114
    %v1244 = vmul.f32 %v1061, %v1118
    %v1245 = vmul.f32 %v1061, %v1122
    %v1246 = vmul.f32 %v1061, %v1126
    %v1247 = vmul.f32 %v1061, %v1130
    %v1248 = vmul.f32 %v1065, %v1082
    %v1249 = vmul.f32 %v1065, %v1086
    %v1250 = vmul.f32 %v1065, %v1090
    %v1251 = vmul.f32 %v1065, %v1094
    %v1252 = vmul.f32 %v1065, %v1098
    %v1253 = vmul.f32 %v1065, %v1102
    %v1254 = vmul.f32 %v1065, %v1106
    %v1255 = vmul.f32 %v1065, %v1110
    %v1256 = vmul.f32 %v1065, %v1114
    %v1257 = vmul.f32 %v1065, %v1118
    %v1258 = vmul.f32 %v1065, %v1122
    %v1259 = vmul.f32 %v1065, %v1126
    %v1260 = vmul.f32 %v1065, %v1130
    %v1261 = vmul.f32 %v1069, %v1082
    %v1262 = vmul.f32 %v1069, %v1086
    %v1263 = vmul.f32 %v1069, %v1090
    %v1264 = vmul.f32 %v1069, %v1094
    %v1265 = vmul.f32 %v1069, %v1098
    %v1266 = vmul.f32 %v1069, %v1102
    %v1267 = vmul.f32 %v1069, %v1106
    %v1268 = vmul.f32 %v1069, %v1110
    %v1269 = vmul.f32 %v1069, %v1114
    %v1270 = vmul.f32 %v1069, %v1118
    %v1271 = vmul.f32 %v1069, %v1122
    %v1272 = vmul.f32 %v1069, %v1126
    %v1273 = vmul.f32 %v1069, %v1130
    %v1274 = vmul.f32 %v1073, %v1082
    %v1275 = vmul.f32 %v1073, %v1086
    %v1276 = vmul.f32 %v1073, %v1090
    %v1277 = vmul.f32 %v1073, %v1094
    %v1278 = vmul.f32 %v1073, %v1098
    %v1279 = vmul.f32 %v1073, %v1102
    %v1280 = vmul.f32 %v1073, %v1106
    %v1281 = vmul.f32 %v1073, %v1110
    %v1282 = vmul.f32 %v1073, %v1114
    %v1283 = vmul.f32 %v1073, %v1118
    %v1284 = vmul.f32 %v1073, %v1122
    %v1285 = vmul.f32 %v1073, %v1126
    %v1286 = vmul.f32 %v1073, %v1130
    %v1287 = vmul.f32 %v1077, %v1082
    %v1288 = vmul.f32 %v1077, %v1086
    %v1289 = vmul.f32 %v1077, %v1090
    %v1290 = vmul.f32 %v1077, %v1094
    %v1291 = vmul.f32 %v1077, %v1098
    %v1292 = vmul.f32 %v1077, %v1102
    %v1293 = vmul.f32 %v1077, %v1106
    %v1294 = vmul.f32 %v1077, %v1110
    %v1295 = vmul.f32 %v1077, %v1114
    %v1296 = vmul.f32 %v1077, %v1118
    %v1297 = vmul.f32 %v1077, %v1122
    %v1298 = vmul.f32 %v1077, %v1126
    %v1299 = vmul.f32 %v1077, %v1130
    %v1300 = vadd.f32 %v858, %v1131
    %v1301 = vadd.f32 %v859, %v1132
    %v1302 = vadd.f32 %v860, %v1133
    %v1303 = vadd.f32 %v861, %v1134
    %v1304 = vadd.f32 %v862, %v1135
    %v1305 = vadd.f32 %v863, %v1136
    %v1306 = vadd.f32 %v864, %v1137
    %v1307 = vadd.f32 %v865, %v1138
    %v1308 = vadd.f32 %v866, %v1139
    %v1309 = vadd.f32 %v867, %v1140
    %v1310 = vadd.f32 %v868, %v1141
    %v1311 = vadd.f32 %v869, %v1142
    %v1312 = vadd.f32 %v870, %v1143
    %v1313 = vadd.f32 %v871, %v1144
    %v1314 = vadd.f32 %v872, %v1145
    %v1315 = vadd.f32 %v873, %v1146
    %v1316 = vadd.f32 %v874, %v1147
    %v1317 = vadd.f32 %v875, %v1148
    %v1318 = vadd.f32 %v876, %v1149
    %v1319 = vadd.f32 %v877, %v1150
    %v1320 = vadd.f32 %v878, %v1151
    %v1321 = vadd.f32 %v879, %v1152
    %v1322 = vadd.f32 %v880, %v1153
    %v1323 = vadd.f32 %v881, %v1154
    %v1324 = vadd.f32 %v882, %v1155
    %v1325 = vadd.f32 %v883, %v1156
    %v1326 = vadd.f32 %v884, %v1157
    %v1327 = vadd.f32 %v885, %v1158
    %v1328 = vadd.f32 %v886, %v1159
    %v1329 = vadd.f32 %v887, %v1160
    %v1330 = vadd.f32 %v888, %v1161
    %v1331 = vadd.f32 %v889, %v1162
    %v1332 = vadd.f32 %v890, %v1163
    %v1333 = vadd.f32 %v891, %v1164
    %v1334 = vadd.f32 %v892, %v1165
    %v1335 = vadd.f32 %v893, %v1166
    %v1336 = vadd.f32 %v894, %v1167
    %v1337 = vadd.f32 %v895, %v1168
    %v1338 = vadd.f32 %v896, %v1169
    %v1339 = vadd.f32 %v897, %v1170
    %v1340 = vadd.f32 %v898, %v1171
    %v1341 = vadd.f32 %v899, %v1172
    %v1342 = vadd.f32 %v900, %v1173
    %v1343 = vadd.f32 %v901, %v1174
    %v1344 = vadd.f32 %v902, %v1175
    %v1345 = vadd.f32 %v903, %v1176
    %v1346 = vadd.f32 %v904, %v1177
    %v1347 = vadd.f32 %v905, %v1178
    %v1348 = vadd.f32 %v906, %v1179
    %v1349 = vadd.f32 %v907, %v1180
    %v1350 = vadd.f32 %v908, %v1181
    %v1351 = vadd.f32 %v909, %v1182
    %v1352 = vadd.f32 %v910, %v1183
    %v1353 = vadd.f32 %v911, %v1184
    %v1354 = vadd.f32 %v912, %v1185
    %v1355 = vadd.f32 %v913, %v1186
    %v1356 = vadd.f32 %v914, %v1187
    %v1357 = vadd.f32 %v915, %v1188
    %v1358 = vadd.f32 %v916, %v1189
    %v1359 = vadd.f32 %v917, %v1190
    %v1360 = vadd.f32 %v918, %v1191
    %v1361 = vadd.f32 %v919, %v1192
    %v1362 = vadd.f32 %v920, %v1193
    %v1363 = vadd.f32 %v921, %v1194
    %v1364 = vadd.f32 %v922, %v1195
    %v1365 = vadd.f32 %v923, %v1196
    %v1366 = vadd.f32 %v924, %v1197
    %v1367 = vadd.f32 %v925, %v1198
    %v1368 = vadd.f32 %v926, %v1199
    %v1369 = vadd.f32 %v927, %v1200
    %v1370 = vadd.f32 %v928, %v1201
    %v1371 = vadd.f32 %v929, %v1202
    %v1372 = vadd.f32 %v930, %v1203
    %v1373 = vadd.f32 %v931, %v1204
    %v1374 = vadd.f32 %v932, %v1205
    %v1375 = vadd.f32 %v933, %v1206
    %v1376 = vadd.f32 %v934, %v1207
    %v1377 = vadd.f32 %v935, %v1208
    %v1378 = vadd.f32 %v936, %v1209
    %v1379 = vadd.f32 %v937, %v1210
    %v1380 = vadd.f32 %v938, %v1211
    %v1381 = vadd.f32 %v939, %v1212
    %v1382 = vadd.f32 %v940, %v1213
    %v1383 = vadd.f32 %v941, %v1214
    %v1384 = vadd.f32 %v942, %v1215
    %v1385 = vadd.f32 %v943, %v1216
    %v1386 = vadd.f32 %v944, %v1217
    %v1387 = vadd.f32 %v945, %v1218
    %v1388 = vadd.f32 %v946, %v1219
    %v1389 = vadd.f32 %v947, %v1220
    %v1390 = vadd.f32 %v948, %v1221
    %v1391 = vadd.f32 %v949, %v1222
    %v1392 = vadd.f32 %v950, %v1223
    %v1393 = vadd.f32 %v951, %v1224
    %v1394 = vadd.f32 %v952, %v1225
    %v1395 = vadd.f32 %v953, %v1226
    %v1396 = vadd.f32 %v954, %v1227
    %v1397 = vadd.f32 %v955, %v1228
    %v1398 = vadd.f32 %v956, %v1229
    %v1399 = vadd.f32 %v957, %v1230
    %v1400 = vadd.f32 %v958, %v1231
    %v1401 = vadd.f32 %v959, %v1232
    %v1402 = vadd.f32 %v960, %v1233
    %v1403 = vadd.f32 %v961, %v1234
    %v1404 = vadd.f32 %v962, %v1235
    %v1405 = vadd.f32 %v963, %v1236
    %v1406 = vadd.f32 %v964, %v1237
    %v1407 = vadd.f32 %v965, %v1238
    %v1408 = vadd.f32 %v966, %v1239
    %v1409 = vadd.f32 %v967, %v1240
    %v1410 = vadd.f32 %v968, %v1241
    %v1411 = vadd.f32 %v969, %v1242
    %v1412 = vadd.f32 %v970, %v1243
    %v1413 = vadd.f32 %v971, %v1244
    %v1414 = vadd.f32 %v972, %v1245
    %v1415 = vadd.f32 %v973, %v1246
    %v1416 = vadd.f32 %v974, %v1247
    %v1417 = vadd.f32 %v975, %v1248
    %v1418 = vadd.f32 %v976, %v1249
    %v1419 = vadd.f32 %v977, %v1250
    %v1420 = vadd.f32 %v978, %v1251
    %v1421 = vadd.f32 %v979, %v1252
    %v1422 = vadd.f32 %v980, %v1253
    %v1423 = vadd.f32 %v981, %v1254
    %v1424 = vadd.f32 %v982, %v1255
    %v1425 = vadd.f32 %v983, %v1256
    %v1426 = vadd.f32 %v984, %v1257
    %v1427 = vadd.f32 %v985, %v1258
    %v1428 = vadd.f32 %v986, %v1259
    %v1429 = vadd.f32 %v987, %v1260
    %v1430 = vadd.f32 %v988, %v1261
    %v1431 = vadd.f32 %v989, %v1262
    %v1432 = vadd.f32 %v990, %v1263
    %v1433 = vadd.f32 %v991, %v1264
    %v1434 = vadd.f32 %v992, %v1265
    %v1435 = vadd.f32 %v993, %v1266
    %v1436 = vadd.f32 %v994, %v1267
    %v1437 = vadd.f32 %v995, %v1268
    %v1438 = vadd.f32 %v996, %v1269
    %v1439 = vadd.f32 %v997, %v1270
    %v1440 = vadd.f32 %v998, %v1271
    %v1441 = vadd.f32 %v999, %v1272
    %v1442 = vadd.f32 %v1000, %v1273
    %v1443 = vadd.f32 %v1001, %v1274
    %v1444 = vadd.f32 %v1002, %v1275
    %v1445 = vadd.f32 %v1003, %v1276
    %v1446 = vadd.f32 %v1004, %v1277
    %v1447 = vadd.f32 %v1005, %v1278
    %v1448 = vadd.f32 %v1006, %v1279
    %v1449 = vadd.f32 %v1007, %v1280
    %v1450 = vadd.f32 %v1008, %v1281
    %v1451 = vadd.f32 %v1009, %v1282
    %v1452 = vadd.f32 %v1010, %v1283
    %v1453 = vadd.f32 %v1011, %v1284
    %v1454 = vadd.f32 %v1012, %v1285
    %v1455 = vadd.f32 %v1013, %v1286
    %v1456 = vadd.f32 %v1014, %v1287
    %v1457 = vadd.f32 %v1015, %v1288
    %v1458 = vadd.f32 %v1016, %v1289
    %v1459 = vadd.f32 %v1017, %v1290
    %v1460 = vadd.f32 %v1018, %v1291
    %v1461 = vadd.f32 %v1019, %v1292
    %v1462 = vadd.f32 %v1020, %v1293
    %v1463 = vadd.f32 %v1021, %v1294
    %v1464 = vadd.f32 %v1022, %v1295
    %v1465 = vadd.f32 %v1023, %v1296
    %v1466 = vadd.f32 %v1024, %v1297
    %v1467 = vadd.f32 %v1025, %v1298
    %v1468 = vadd.f32 %v1026, %v1299
    %1469 = vset.pattern.permute.xlu0 3
    %1470 = vperm.xlu0 %1469, %v35
    %v1471 = vpop.permute.xlu0 %1470
    %1473 = vset.pattern.permute.xlu0 3
    %1474 = vperm.xlu0 %1473, %v36
    %v1475 = vpop.permute.xlu0 %1474
    %1477 = vset.pattern.permute.xlu0 3
    %1478 = vperm.xlu0 %1477, %v37
    %v1479 = vpop.permute.xlu0 %1478
    %1481 = vset.pattern.permute.xlu0 3
    %1482 = vperm.xlu0 %1481, %v38
    %v1483 = vpop.permute.xlu0 %1482
    %1485 = vset.pattern.permute.xlu0 3
    %1486 = vperm.xlu0 %1485, %v39
    %v1487 = vpop.permute.xlu0 %1486
    %1489 = vset.pattern.permute.xlu0 3
    %1490 = vperm.xlu0 %1489, %v40
    %v1491 = vpop.permute.xlu0 %1490
    %1493 = vset.pattern.permute.xlu0 3
    %1494 = vperm.xlu0 %1493, %v41
    %v1495 = vpop.permute.xlu0 %1494
    %1497 = vset.pattern.permute.xlu0 3
    %1498 = vperm.xlu0 %1497, %v42
    %v1499 = vpop.permute.xlu0 %1498
    %1501 = vset.pattern.permute.xlu0 3
    %1502 = vperm.xlu0 %1501, %v43
    %v1503 = vpop.permute.xlu0 %1502
    %1505 = vset.pattern.permute.xlu0 3
    %1506 = vperm.xlu0 %1505, %v44
    %v1507 = vpop.permute.xlu0 %1506
    %1509 = vset.pattern.permute.xlu0 3
    %1510 = vperm.xlu0 %1509, %v45
    %v1511 = vpop.permute.xlu0 %1510
    %1513 = vset.pattern.permute.xlu0 3
    %1514 = vperm.xlu0 %1513, %v46
    %v1515 = vpop.permute.xlu0 %1514
    %1517 = vset.pattern.permute.xlu0 3
    %1518 = vperm.xlu0 %1517, %v47
    %v1519 = vpop.permute.xlu0 %1518
    %v1521 = vlaneseq
    %v1522 = vshrl.u32 %v1521, 7
    %v1523 = vsub.s32 3, %v1522
    %v1524 = vrot.slane %v48, %v1523
    %v1525 = vlaneseq
    %v1526 = vshrl.u32 %v1525, 7
    %v1527 = vsub.s32 3, %v1526
    %v1528 = vrot.slane %v49, %v1527
    %v1529 = vlaneseq
    %v1530 = vshrl.u32 %v1529, 7
    %v1531 = vsub.s32 3, %v1530
    %v1532 = vrot.slane %v50, %v1531
    %v1533 = vlaneseq
    %v1534 = vshrl.u32 %v1533, 7
    %v1535 = vsub.s32 3, %v1534
    %v1536 = vrot.slane %v51, %v1535
    %v1537 = vlaneseq
    %v1538 = vshrl.u32 %v1537, 7
    %v1539 = vsub.s32 3, %v1538
    %v1540 = vrot.slane %v52, %v1539
    %v1541 = vlaneseq
    %v1542 = vshrl.u32 %v1541, 7
    %v1543 = vsub.s32 3, %v1542
    %v1544 = vrot.slane %v53, %v1543
    %v1545 = vlaneseq
    %v1546 = vshrl.u32 %v1545, 7
    %v1547 = vsub.s32 3, %v1546
    %v1548 = vrot.slane %v54, %v1547
    %v1549 = vlaneseq
    %v1550 = vshrl.u32 %v1549, 7
    %v1551 = vsub.s32 3, %v1550
    %v1552 = vrot.slane %v55, %v1551
    %v1553 = vlaneseq
    %v1554 = vshrl.u32 %v1553, 7
    %v1555 = vsub.s32 3, %v1554
    %v1556 = vrot.slane %v56, %v1555
    %v1557 = vlaneseq
    %v1558 = vshrl.u32 %v1557, 7
    %v1559 = vsub.s32 3, %v1558
    %v1560 = vrot.slane %v57, %v1559
    %v1561 = vlaneseq
    %v1562 = vshrl.u32 %v1561, 7
    %v1563 = vsub.s32 3, %v1562
    %v1564 = vrot.slane %v58, %v1563
    %v1565 = vlaneseq
    %v1566 = vshrl.u32 %v1565, 7
    %v1567 = vsub.s32 3, %v1566
    %v1568 = vrot.slane %v59, %v1567
    %v1569 = vlaneseq
    %v1570 = vshrl.u32 %v1569, 7
    %v1571 = vsub.s32 3, %v1570
    %v1572 = vrot.slane %v60, %v1571
    %v1573 = vmul.f32 %v1471, %v1524
    %v1574 = vmul.f32 %v1471, %v1528
    %v1575 = vmul.f32 %v1471, %v1532
    %v1576 = vmul.f32 %v1471, %v1536
    %v1577 = vmul.f32 %v1471, %v1540
    %v1578 = vmul.f32 %v1471, %v1544
    %v1579 = vmul.f32 %v1471, %v1548
    %v1580 = vmul.f32 %v1471, %v1552
    %v1581 = vmul.f32 %v1471, %v1556
    %v1582 = vmul.f32 %v1471, %v1560
    %v1583 = vmul.f32 %v1471, %v1564
    %v1584 = vmul.f32 %v1471, %v1568
    %v1585 = vmul.f32 %v1471, %v1572
    %v1586 = vmul.f32 %v1475, %v1524
    %v1587 = vmul.f32 %v1475, %v1528
    %v1588 = vmul.f32 %v1475, %v1532
    %v1589 = vmul.f32 %v1475, %v1536
    %v1590 = vmul.f32 %v1475, %v1540
    %v1591 = vmul.f32 %v1475, %v1544
    %v1592 = vmul.f32 %v1475, %v1548
    %v1593 = vmul.f32 %v1475, %v1552
    %v1594 = vmul.f32 %v1475, %v1556
    %v1595 = vmul.f32 %v1475, %v1560
    %v1596 = vmul.f32 %v1475, %v1564
    %v1597 = vmul.f32 %v1475, %v1568
    %v1598 = vmul.f32 %v1475, %v1572
    %v1599 = vmul.f32 %v1479, %v1524
    %v1600 = vmul.f32 %v1479, %v1528
    %v1601 = vmul.f32 %v1479, %v1532
    %v1602 = vmul.f32 %v1479, %v1536
    %v1603 = vmul.f32 %v1479, %v1540
    %v1604 = vmul.f32 %v1479, %v1544
    %v1605 = vmul.f32 %v1479, %v1548
    %v1606 = vmul.f32 %v1479, %v1552
    %v1607 = vmul.f32 %v1479, %v1556
    %v1608 = vmul.f32 %v1479, %v1560
    %v1609 = vmul.f32 %v1479, %v1564
    %v1610 = vmul.f32 %v1479, %v1568
    %v1611 = vmul.f32 %v1479, %v1572
    %v1612 = vmul.f32 %v1483, %v1524
    %v1613 = vmul.f32 %v1483, %v1528
    %v1614 = vmul.f32 %v1483, %v1532
    %v1615 = vmul.f32 %v1483, %v1536
    %v1616 = vmul.f32 %v1483, %v1540
    %v1617 = vmul.f32 %v1483, %v1544
    %v1618 = vmul.f32 %v1483, %v1548
    %v1619 = vmul.f32 %v1483, %v1552
    %v1620 = vmul.f32 %v1483, %v1556
    %v1621 = vmul.f32 %v1483, %v1560
    %v1622 = vmul.f32 %v1483, %v1564
    %v1623 = vmul.f32 %v1483, %v1568
    %v1624 = vmul.f32 %v1483, %v1572
    %v1625 = vmul.f32 %v1487, %v1524
    %v1626 = vmul.f32 %v1487, %v1528
    %v1627 = vmul.f32 %v1487, %v1532
    %v1628 = vmul.f32 %v1487, %v1536
    %v1629 = vmul.f32 %v1487, %v1540
    %v1630 = vmul.f32 %v1487, %v1544
    %v1631 = vmul.f32 %v1487, %v1548
    %v1632 = vmul.f32 %v1487, %v1552
    %v1633 = vmul.f32 %v1487, %v1556
    %v1634 = vmul.f32 %v1487, %v1560
    %v1635 = vmul.f32 %v1487, %v1564
    %v1636 = vmul.f32 %v1487, %v1568
    %v1637 = vmul.f32 %v1487, %v1572
    %v1638 = vmul.f32 %v1491, %v1524
    %v1639 = vmul.f32 %v1491, %v1528
    %v1640 = vmul.f32 %v1491, %v1532
    %v1641 = vmul.f32 %v1491, %v1536
    %v1642 = vmul.f32 %v1491, %v1540
    %v1643 = vmul.f32 %v1491, %v1544
    %v1644 = vmul.f32 %v1491, %v1548
    %v1645 = vmul.f32 %v1491, %v1552
    %v1646 = vmul.f32 %v1491, %v1556
    %v1647 = vmul.f32 %v1491, %v1560
    %v1648 = vmul.f32 %v1491, %v1564
    %v1649 = vmul.f32 %v1491, %v1568
    %v1650 = vmul.f32 %v1491, %v1572
    %v1651 = vmul.f32 %v1495, %v1524
    %v1652 = vmul.f32 %v1495, %v1528
    %v1653 = vmul.f32 %v1495, %v1532
    %v1654 = vmul.f32 %v1495, %v1536
    %v1655 = vmul.f32 %v1495, %v1540
    %v1656 = vmul.f32 %v1495, %v1544
    %v1657 = vmul.f32 %v1495, %v1548
    %v1658 = vmul.f32 %v1495, %v1552
    %v1659 = vmul.f32 %v1495, %v1556
    %v1660 = vmul.f32 %v1495, %v1560
    %v1661 = vmul.f32 %v1495, %v1564
    %v1662 = vmul.f32 %v1495, %v1568
    %v1663 = vmul.f32 %v1495, %v1572
    %v1664 = vmul.f32 %v1499, %v1524
    %v1665 = vmul.f32 %v1499, %v1528
    %v1666 = vmul.f32 %v1499, %v1532
    %v1667 = vmul.f32 %v1499, %v1536
    %v1668 = vmul.f32 %v1499, %v1540
    %v1669 = vmul.f32 %v1499, %v1544
    %v1670 = vmul.f32 %v1499, %v1548
    %v1671 = vmul.f32 %v1499, %v1552
    %v1672 = vmul.f32 %v1499, %v1556
    %v1673 = vmul.f32 %v1499, %v1560
    %v1674 = vmul.f32 %v1499, %v1564
    %v1675 = vmul.f32 %v1499, %v1568
    %v1676 = vmul.f32 %v1499, %v1572
    %v1677 = vmul.f32 %v1503, %v1524
    %v1678 = vmul.f32 %v1503, %v1528
    %v1679 = vmul.f32 %v1503, %v1532
    %v1680 = vmul.f32 %v1503, %v1536
    %v1681 = vmul.f32 %v1503, %v1540
    %v1682 = vmul.f32 %v1503, %v1544
    %v1683 = vmul.f32 %v1503, %v1548
    %v1684 = vmul.f32 %v1503, %v1552
    %v1685 = vmul.f32 %v1503, %v1556
    %v1686 = vmul.f32 %v1503, %v1560
    %v1687 = vmul.f32 %v1503, %v1564
    %v1688 = vmul.f32 %v1503, %v1568
    %v1689 = vmul.f32 %v1503, %v1572
    %v1690 = vmul.f32 %v1507, %v1524
    %v1691 = vmul.f32 %v1507, %v1528
    %v1692 = vmul.f32 %v1507, %v1532
    %v1693 = vmul.f32 %v1507, %v1536
    %v1694 = vmul.f32 %v1507, %v1540
    %v1695 = vmul.f32 %v1507, %v1544
    %v1696 = vmul.f32 %v1507, %v1548
    %v1697 = vmul.f32 %v1507, %v1552
    %v1698 = vmul.f32 %v1507, %v1556
    %v1699 = vmul.f32 %v1507, %v1560
    %v1700 = vmul.f32 %v1507, %v1564
    %v1701 = vmul.f32 %v1507, %v1568
    %v1702 = vmul.f32 %v1507, %v1572
    %v1703 = vmul.f32 %v1511, %v1524
    %v1704 = vmul.f32 %v1511, %v1528
    %v1705 = vmul.f32 %v1511, %v1532
    %v1706 = vmul.f32 %v1511, %v1536
    %v1707 = vmul.f32 %v1511, %v1540
    %v1708 = vmul.f32 %v1511, %v1544
    %v1709 = vmul.f32 %v1511, %v1548
    %v1710 = vmul.f32 %v1511, %v1552
    %v1711 = vmul.f32 %v1511, %v1556
    %v1712 = vmul.f32 %v1511, %v1560
    %v1713 = vmul.f32 %v1511, %v1564
    %v1714 = vmul.f32 %v1511, %v1568
    %v1715 = vmul.f32 %v1511, %v1572
    %v1716 = vmul.f32 %v1515, %v1524
    %v1717 = vmul.f32 %v1515, %v1528
    %v1718 = vmul.f32 %v1515, %v1532
    %v1719 = vmul.f32 %v1515, %v1536
    %v1720 = vmul.f32 %v1515, %v1540
    %v1721 = vmul.f32 %v1515, %v1544
    %v1722 = vmul.f32 %v1515, %v1548
    %v1723 = vmul.f32 %v1515, %v1552
    %v1724 = vmul.f32 %v1515, %v1556
    %v1725 = vmul.f32 %v1515, %v1560
    %v1726 = vmul.f32 %v1515, %v1564
    %v1727 = vmul.f32 %v1515, %v1568
    %v1728 = vmul.f32 %v1515, %v1572
    %v1729 = vmul.f32 %v1519, %v1524
    %v1730 = vmul.f32 %v1519, %v1528
    %v1731 = vmul.f32 %v1519, %v1532
    %v1732 = vmul.f32 %v1519, %v1536
    %v1733 = vmul.f32 %v1519, %v1540
    %v1734 = vmul.f32 %v1519, %v1544
    %v1735 = vmul.f32 %v1519, %v1548
    %v1736 = vmul.f32 %v1519, %v1552
    %v1737 = vmul.f32 %v1519, %v1556
    %v1738 = vmul.f32 %v1519, %v1560
    %v1739 = vmul.f32 %v1519, %v1564
    %v1740 = vmul.f32 %v1519, %v1568
    %v1741 = vmul.f32 %v1519, %v1572
    %v1742 = vadd.f32 %v1300, %v1573
    %v1743 = vadd.f32 %v1301, %v1574
    %v1744 = vadd.f32 %v1302, %v1575
    %v1745 = vadd.f32 %v1303, %v1576
    %v1746 = vadd.f32 %v1304, %v1577
    %v1747 = vadd.f32 %v1305, %v1578
    %v1748 = vadd.f32 %v1306, %v1579
    %v1749 = vadd.f32 %v1307, %v1580
    %v1750 = vadd.f32 %v1308, %v1581
    %v1751 = vadd.f32 %v1309, %v1582
    %v1752 = vadd.f32 %v1310, %v1583
    %v1753 = vadd.f32 %v1311, %v1584
    %v1754 = vadd.f32 %v1312, %v1585
    %v1755 = vadd.f32 %v1313, %v1586
    %v1756 = vadd.f32 %v1314, %v1587
    %v1757 = vadd.f32 %v1315, %v1588
    %v1758 = vadd.f32 %v1316, %v1589
    %v1759 = vadd.f32 %v1317, %v1590
    %v1760 = vadd.f32 %v1318, %v1591
    %v1761 = vadd.f32 %v1319, %v1592
    %v1762 = vadd.f32 %v1320, %v1593
    %v1763 = vadd.f32 %v1321, %v1594
    %v1764 = vadd.f32 %v1322, %v1595
    %v1765 = vadd.f32 %v1323, %v1596
    %v1766 = vadd.f32 %v1324, %v1597
    %v1767 = vadd.f32 %v1325, %v1598
    %v1768 = vadd.f32 %v1326, %v1599
    %v1769 = vadd.f32 %v1327, %v1600
    %v1770 = vadd.f32 %v1328, %v1601
    %v1771 = vadd.f32 %v1329, %v1602
    %v1772 = vadd.f32 %v1330, %v1603
    %v1773 = vadd.f32 %v1331, %v1604
    %v1774 = vadd.f32 %v1332, %v1605
    %v1775 = vadd.f32 %v1333, %v1606
    %v1776 = vadd.f32 %v1334, %v1607
    %v1777 = vadd.f32 %v1335, %v1608
    %v1778 = vadd.f32 %v1336, %v1609
    %v1779 = vadd.f32 %v1337, %v1610
    %v1780 = vadd.f32 %v1338, %v1611
    %v1781 = vadd.f32 %v1339, %v1612
    %v1782 = vadd.f32 %v1340, %v1613
    %v1783 = vadd.f32 %v1341, %v1614
    %v1784 = vadd.f32 %v1342, %v1615
    %v1785 = vadd.f32 %v1343, %v1616
    %v1786 = vadd.f32 %v1344, %v1617
    %v1787 = vadd.f32 %v1345, %v1618
    %v1788 = vadd.f32 %v1346, %v1619
    %v1789 = vadd.f32 %v1347, %v1620
    %v1790 = vadd.f32 %v1348, %v1621
    %v1791 = vadd.f32 %v1349, %v1622
    %v1792 = vadd.f32 %v1350, %v1623
    %v1793 = vadd.f32 %v1351, %v1624
    %v1794 = vadd.f32 %v1352, %v1625
    %v1795 = vadd.f32 %v1353, %v1626
    %v1796 = vadd.f32 %v1354, %v1627
    %v1797 = vadd.f32 %v1355, %v1628
    %v1798 = vadd.f32 %v1356, %v1629
    %v1799 = vadd.f32 %v1357, %v1630
    %v1800 = vadd.f32 %v1358, %v1631
    %v1801 = vadd.f32 %v1359, %v1632
    %v1802 = vadd.f32 %v1360, %v1633
    %v1803 = vadd.f32 %v1361, %v1634
    %v1804 = vadd.f32 %v1362, %v1635
    %v1805 = vadd.f32 %v1363, %v1636
    %v1806 = vadd.f32 %v1364, %v1637
    %v1807 = vadd.f32 %v1365, %v1638
    %v1808 = vadd.f32 %v1366, %v1639
    %v1809 = vadd.f32 %v1367, %v1640
    %v1810 = vadd.f32 %v1368, %v1641
    %v1811 = vadd.f32 %v1369, %v1642
    %v1812 = vadd.f32 %v1370, %v1643
    %v1813 = vadd.f32 %v1371, %v1644
    %v1814 = vadd.f32 %v1372, %v1645
    %v1815 = vadd.f32 %v1373, %v1646
    %v1816 = vadd.f32 %v1374, %v1647
    %v1817 = vadd.f32 %v1375, %v1648
    %v1818 = vadd.f32 %v1376, %v1649
    %v1819 = vadd.f32 %v1377, %v1650
    %v1820 = vadd.f32 %v1378, %v1651
    %v1821 = vadd.f32 %v1379, %v1652
    %v1822 = vadd.f32 %v1380, %v1653
    %v1823 = vadd.f32 %v1381, %v1654
    %v1824 = vadd.f32 %v1382, %v1655
    %v1825 = vadd.f32 %v1383, %v1656
    %v1826 = vadd.f32 %v1384, %v1657
    %v1827 = vadd.f32 %v1385, %v1658
    %v1828 = vadd.f32 %v1386, %v1659
    %v1829 = vadd.f32 %v1387, %v1660
    %v1830 = vadd.f32 %v1388, %v1661
    %v1831 = vadd.f32 %v1389, %v1662
    %v1832 = vadd.f32 %v1390, %v1663
    %v1833 = vadd.f32 %v1391, %v1664
    %v1834 = vadd.f32 %v1392, %v1665
    %v1835 = vadd.f32 %v1393, %v1666
    %v1836 = vadd.f32 %v1394, %v1667
    %v1837 = vadd.f32 %v1395, %v1668
    %v1838 = vadd.f32 %v1396, %v1669
    %v1839 = vadd.f32 %v1397, %v1670
    %v1840 = vadd.f32 %v1398, %v1671
    %v1841 = vadd.f32 %v1399, %v1672
    %v1842 = vadd.f32 %v1400, %v1673
    %v1843 = vadd.f32 %v1401, %v1674
    %v1844 = vadd.f32 %v1402, %v1675
    %v1845 = vadd.f32 %v1403, %v1676
    %v1846 = vadd.f32 %v1404, %v1677
    %v1847 = vadd.f32 %v1405, %v1678
    %v1848 = vadd.f32 %v1406, %v1679
    %v1849 = vadd.f32 %v1407, %v1680
    %v1850 = vadd.f32 %v1408, %v1681
    %v1851 = vadd.f32 %v1409, %v1682
    %v1852 = vadd.f32 %v1410, %v1683
    %v1853 = vadd.f32 %v1411, %v1684
    %v1854 = vadd.f32 %v1412, %v1685
    %v1855 = vadd.f32 %v1413, %v1686
    %v1856 = vadd.f32 %v1414, %v1687
    %v1857 = vadd.f32 %v1415, %v1688
    %v1858 = vadd.f32 %v1416, %v1689
    %v1859 = vadd.f32 %v1417, %v1690
    %v1860 = vadd.f32 %v1418, %v1691
    %v1861 = vadd.f32 %v1419, %v1692
    %v1862 = vadd.f32 %v1420, %v1693
    %v1863 = vadd.f32 %v1421, %v1694
    %v1864 = vadd.f32 %v1422, %v1695
    %v1865 = vadd.f32 %v1423, %v1696
    %v1866 = vadd.f32 %v1424, %v1697
    %v1867 = vadd.f32 %v1425, %v1698
    %v1868 = vadd.f32 %v1426, %v1699
    %v1869 = vadd.f32 %v1427, %v1700
    %v1870 = vadd.f32 %v1428, %v1701
    %v1871 = vadd.f32 %v1429, %v1702
    %v1872 = vadd.f32 %v1430, %v1703
    %v1873 = vadd.f32 %v1431, %v1704
    %v1874 = vadd.f32 %v1432, %v1705
    %v1875 = vadd.f32 %v1433, %v1706
    %v1876 = vadd.f32 %v1434, %v1707
    %v1877 = vadd.f32 %v1435, %v1708
    %v1878 = vadd.f32 %v1436, %v1709
    %v1879 = vadd.f32 %v1437, %v1710
    %v1880 = vadd.f32 %v1438, %v1711
    %v1881 = vadd.f32 %v1439, %v1712
    %v1882 = vadd.f32 %v1440, %v1713
    %v1883 = vadd.f32 %v1441, %v1714
    %v1884 = vadd.f32 %v1442, %v1715
    %v1885 = vadd.f32 %v1443, %v1716
    %v1886 = vadd.f32 %v1444, %v1717
    %v1887 = vadd.f32 %v1445, %v1718
    %v1888 = vadd.f32 %v1446, %v1719
    %v1889 = vadd.f32 %v1447, %v1720
    %v1890 = vadd.f32 %v1448, %v1721
    %v1891 = vadd.f32 %v1449, %v1722
    %v1892 = vadd.f32 %v1450, %v1723
    %v1893 = vadd.f32 %v1451, %v1724
    %v1894 = vadd.f32 %v1452, %v1725
    %v1895 = vadd.f32 %v1453, %v1726
    %v1896 = vadd.f32 %v1454, %v1727
    %v1897 = vadd.f32 %v1455, %v1728
    %v1898 = vadd.f32 %v1456, %v1729
    %v1899 = vadd.f32 %v1457, %v1730
    %v1900 = vadd.f32 %v1458, %v1731
    %v1901 = vadd.f32 %v1459, %v1732
    %v1902 = vadd.f32 %v1460, %v1733
    %v1903 = vadd.f32 %v1461, %v1734
    %v1904 = vadd.f32 %v1462, %v1735
    %v1905 = vadd.f32 %v1463, %v1736
    %v1906 = vadd.f32 %v1464, %v1737
    %v1907 = vadd.f32 %v1465, %v1738
    %v1908 = vadd.f32 %v1466, %v1739
    %v1909 = vadd.f32 %v1467, %v1740
    %v1910 = vadd.f32 %v1468, %v1741
    %1911 = vset.pattern.permute.xlu0 4
    %1912 = vperm.xlu0 %1911, %v35
    %v1913 = vpop.permute.xlu0 %1912
    %1915 = vset.pattern.permute.xlu0 4
    %1916 = vperm.xlu0 %1915, %v36
    %v1917 = vpop.permute.xlu0 %1916
    %1919 = vset.pattern.permute.xlu0 4
    %1920 = vperm.xlu0 %1919, %v37
    %v1921 = vpop.permute.xlu0 %1920
    %1923 = vset.pattern.permute.xlu0 4
    %1924 = vperm.xlu0 %1923, %v38
    %v1925 = vpop.permute.xlu0 %1924
    %1927 = vset.pattern.permute.xlu0 4
    %1928 = vperm.xlu0 %1927, %v39
    %v1929 = vpop.permute.xlu0 %1928
    %1931 = vset.pattern.permute.xlu0 4
    %1932 = vperm.xlu0 %1931, %v40
    %v1933 = vpop.permute.xlu0 %1932
    %1935 = vset.pattern.permute.xlu0 4
    %1936 = vperm.xlu0 %1935, %v41
    %v1937 = vpop.permute.xlu0 %1936
    %1939 = vset.pattern.permute.xlu0 4
    %1940 = vperm.xlu0 %1939, %v42
    %v1941 = vpop.permute.xlu0 %1940
    %1943 = vset.pattern.permute.xlu0 4
    %1944 = vperm.xlu0 %1943, %v43
    %v1945 = vpop.permute.xlu0 %1944
    %1947 = vset.pattern.permute.xlu0 4
    %1948 = vperm.xlu0 %1947, %v44
    %v1949 = vpop.permute.xlu0 %1948
    %1951 = vset.pattern.permute.xlu0 4
    %1952 = vperm.xlu0 %1951, %v45
    %v1953 = vpop.permute.xlu0 %1952
    %1955 = vset.pattern.permute.xlu0 4
    %1956 = vperm.xlu0 %1955, %v46
    %v1957 = vpop.permute.xlu0 %1956
    %1959 = vset.pattern.permute.xlu0 4
    %1960 = vperm.xlu0 %1959, %v47
    %v1961 = vpop.permute.xlu0 %1960
    %v1963 = vlaneseq
    %v1964 = vshrl.u32 %v1963, 7
    %v1965 = vsub.s32 4, %v1964
    %v1966 = vrot.slane %v48, %v1965
    %v1967 = vlaneseq
    %v1968 = vshrl.u32 %v1967, 7
    %v1969 = vsub.s32 4, %v1968
    %v1970 = vrot.slane %v49, %v1969
    %v1971 = vlaneseq
    %v1972 = vshrl.u32 %v1971, 7
    %v1973 = vsub.s32 4, %v1972
    %v1974 = vrot.slane %v50, %v1973
    %v1975 = vlaneseq
    %v1976 = vshrl.u32 %v1975, 7
    %v1977 = vsub.s32 4, %v1976
    %v1978 = vrot.slane %v51, %v1977
    %v1979 = vlaneseq
    %v1980 = vshrl.u32 %v1979, 7
    %v1981 = vsub.s32 4, %v1980
    %v1982 = vrot.slane %v52, %v1981
    %v1983 = vlaneseq
    %v1984 = vshrl.u32 %v1983, 7
    %v1985 = vsub.s32 4, %v1984
    %v1986 = vrot.slane %v53, %v1985
    %v1987 = vlaneseq
    %v1988 = vshrl.u32 %v1987, 7
    %v1989 = vsub.s32 4, %v1988
    %v1990 = vrot.slane %v54, %v1989
    %v1991 = vlaneseq
    %v1992 = vshrl.u32 %v1991, 7
    %v1993 = vsub.s32 4, %v1992
    %v1994 = vrot.slane %v55, %v1993
    %v1995 = vlaneseq
    %v1996 = vshrl.u32 %v1995, 7
    %v1997 = vsub.s32 4, %v1996
    %v1998 = vrot.slane %v56, %v1997
    %v1999 = vlaneseq
    %v2000 = vshrl.u32 %v1999, 7
    %v2001 = vsub.s32 4, %v2000
    %v2002 = vrot.slane %v57, %v2001
    %v2003 = vlaneseq
    %v2004 = vshrl.u32 %v2003, 7
    %v2005 = vsub.s32 4, %v2004
    %v2006 = vrot.slane %v58, %v2005
    %v2007 = vlaneseq
    %v2008 = vshrl.u32 %v2007, 7
    %v2009 = vsub.s32 4, %v2008
    %v2010 = vrot.slane %v59, %v2009
    %v2011 = vlaneseq
    %v2012 = vshrl.u32 %v2011, 7
    %v2013 = vsub.s32 4, %v2012
    %v2014 = vrot.slane %v60, %v2013
    %v2015 = vmul.f32 %v1913, %v1966
    %v2016 = vmul.f32 %v1913, %v1970
    %v2017 = vmul.f32 %v1913, %v1974
    %v2018 = vmul.f32 %v1913, %v1978
    %v2019 = vmul.f32 %v1913, %v1982
    %v2020 = vmul.f32 %v1913, %v1986
    %v2021 = vmul.f32 %v1913, %v1990
    %v2022 = vmul.f32 %v1913, %v1994
    %v2023 = vmul.f32 %v1913, %v1998
    %v2024 = vmul.f32 %v1913, %v2002
    %v2025 = vmul.f32 %v1913, %v2006
    %v2026 = vmul.f32 %v1913, %v2010
    %v2027 = vmul.f32 %v1913, %v2014
    %v2028 = vmul.f32 %v1917, %v1966
    %v2029 = vmul.f32 %v1917, %v1970
    %v2030 = vmul.f32 %v1917, %v1974
    %v2031 = vmul.f32 %v1917, %v1978
    %v2032 = vmul.f32 %v1917, %v1982
    %v2033 = vmul.f32 %v1917, %v1986
    %v2034 = vmul.f32 %v1917, %v1990
    %v2035 = vmul.f32 %v1917, %v1994
    %v2036 = vmul.f32 %v1917, %v1998
    %v2037 = vmul.f32 %v1917, %v2002
    %v2038 = vmul.f32 %v1917, %v2006
    %v2039 = vmul.f32 %v1917, %v2010
    %v2040 = vmul.f32 %v1917, %v2014
    %v2041 = vmul.f32 %v1921, %v1966
    %v2042 = vmul.f32 %v1921, %v1970
    %v2043 = vmul.f32 %v1921, %v1974
    %v2044 = vmul.f32 %v1921, %v1978
    %v2045 = vmul.f32 %v1921, %v1982
    %v2046 = vmul.f32 %v1921, %v1986
    %v2047 = vmul.f32 %v1921, %v1990
    %v2048 = vmul.f32 %v1921, %v1994
    %v2049 = vmul.f32 %v1921, %v1998
    %v2050 = vmul.f32 %v1921, %v2002
    %v2051 = vmul.f32 %v1921, %v2006
    %v2052 = vmul.f32 %v1921, %v2010
    %v2053 = vmul.f32 %v1921, %v2014
    %v2054 = vmul.f32 %v1925, %v1966
    %v2055 = vmul.f32 %v1925, %v1970
    %v2056 = vmul.f32 %v1925, %v1974
    %v2057 = vmul.f32 %v1925, %v1978
    %v2058 = vmul.f32 %v1925, %v1982
    %v2059 = vmul.f32 %v1925, %v1986
    %v2060 = vmul.f32 %v1925, %v1990
    %v2061 = vmul.f32 %v1925, %v1994
    %v2062 = vmul.f32 %v1925, %v1998
    %v2063 = vmul.f32 %v1925, %v2002
    %v2064 = vmul.f32 %v1925, %v2006
    %v2065 = vmul.f32 %v1925, %v2010
    %v2066 = vmul.f32 %v1925, %v2014
    %v2067 = vmul.f32 %v1929, %v1966
    %v2068 = vmul.f32 %v1929, %v1970
    %v2069 = vmul.f32 %v1929, %v1974
    %v2070 = vmul.f32 %v1929, %v1978
    %v2071 = vmul.f32 %v1929, %v1982
    %v2072 = vmul.f32 %v1929, %v1986
    %v2073 = vmul.f32 %v1929, %v1990
    %v2074 = vmul.f32 %v1929, %v1994
    %v2075 = vmul.f32 %v1929, %v1998
    %v2076 = vmul.f32 %v1929, %v2002
    %v2077 = vmul.f32 %v1929, %v2006
    %v2078 = vmul.f32 %v1929, %v2010
    %v2079 = vmul.f32 %v1929, %v2014
    %v2080 = vmul.f32 %v1933, %v1966
    %v2081 = vmul.f32 %v1933, %v1970
    %v2082 = vmul.f32 %v1933, %v1974
    %v2083 = vmul.f32 %v1933, %v1978
    %v2084 = vmul.f32 %v1933, %v1982
    %v2085 = vmul.f32 %v1933, %v1986
    %v2086 = vmul.f32 %v1933, %v1990
    %v2087 = vmul.f32 %v1933, %v1994
    %v2088 = vmul.f32 %v1933, %v1998
    %v2089 = vmul.f32 %v1933, %v2002
    %v2090 = vmul.f32 %v1933, %v2006
    %v2091 = vmul.f32 %v1933, %v2010
    %v2092 = vmul.f32 %v1933, %v2014
    %v2093 = vmul.f32 %v1937, %v1966
    %v2094 = vmul.f32 %v1937, %v1970
    %v2095 = vmul.f32 %v1937, %v1974
    %v2096 = vmul.f32 %v1937, %v1978
    %v2097 = vmul.f32 %v1937, %v1982
    %v2098 = vmul.f32 %v1937, %v1986
    %v2099 = vmul.f32 %v1937, %v1990
    %v2100 = vmul.f32 %v1937, %v1994
    %v2101 = vmul.f32 %v1937, %v1998
    %v2102 = vmul.f32 %v1937, %v2002
    %v2103 = vmul.f32 %v1937, %v2006
    %v2104 = vmul.f32 %v1937, %v2010
    %v2105 = vmul.f32 %v1937, %v2014
    %v2106 = vmul.f32 %v1941, %v1966
    %v2107 = vmul.f32 %v1941, %v1970
    %v2108 = vmul.f32 %v1941, %v1974
    %v2109 = vmul.f32 %v1941, %v1978
    %v2110 = vmul.f32 %v1941, %v1982
    %v2111 = vmul.f32 %v1941, %v1986
    %v2112 = vmul.f32 %v1941, %v1990
    %v2113 = vmul.f32 %v1941, %v1994
    %v2114 = vmul.f32 %v1941, %v1998
    %v2115 = vmul.f32 %v1941, %v2002
    %v2116 = vmul.f32 %v1941, %v2006
    %v2117 = vmul.f32 %v1941, %v2010
    %v2118 = vmul.f32 %v1941, %v2014
    %v2119 = vmul.f32 %v1945, %v1966
    %v2120 = vmul.f32 %v1945, %v1970
    %v2121 = vmul.f32 %v1945, %v1974
    %v2122 = vmul.f32 %v1945, %v1978
    %v2123 = vmul.f32 %v1945, %v1982
    %v2124 = vmul.f32 %v1945, %v1986
    %v2125 = vmul.f32 %v1945, %v1990
    %v2126 = vmul.f32 %v1945, %v1994
    %v2127 = vmul.f32 %v1945, %v1998
    %v2128 = vmul.f32 %v1945, %v2002
    %v2129 = vmul.f32 %v1945, %v2006
    %v2130 = vmul.f32 %v1945, %v2010
    %v2131 = vmul.f32 %v1945, %v2014
    %v2132 = vmul.f32 %v1949, %v1966
    %v2133 = vmul.f32 %v1949, %v1970
    %v2134 = vmul.f32 %v1949, %v1974
    %v2135 = vmul.f32 %v1949, %v1978
    %v2136 = vmul.f32 %v1949, %v1982
    %v2137 = vmul.f32 %v1949, %v1986
    %v2138 = vmul.f32 %v1949, %v1990
    %v2139 = vmul.f32 %v1949, %v1994
    %v2140 = vmul.f32 %v1949, %v1998
    %v2141 = vmul.f32 %v1949, %v2002
    %v2142 = vmul.f32 %v1949, %v2006
    %v2143 = vmul.f32 %v1949, %v2010
    %v2144 = vmul.f32 %v1949, %v2014
    %v2145 = vmul.f32 %v1953, %v1966
    %v2146 = vmul.f32 %v1953, %v1970
    %v2147 = vmul.f32 %v1953, %v1974
    %v2148 = vmul.f32 %v1953, %v1978
    %v2149 = vmul.f32 %v1953, %v1982
    %v2150 = vmul.f32 %v1953, %v1986
    %v2151 = vmul.f32 %v1953, %v1990
    %v2152 = vmul.f32 %v1953, %v1994
    %v2153 = vmul.f32 %v1953, %v1998
    %v2154 = vmul.f32 %v1953, %v2002
    %v2155 = vmul.f32 %v1953, %v2006
    %v2156 = vmul.f32 %v1953, %v2010
    %v2157 = vmul.f32 %v1953, %v2014
    %v2158 = vmul.f32 %v1957, %v1966
    %v2159 = vmul.f32 %v1957, %v1970
    %v2160 = vmul.f32 %v1957, %v1974
    %v2161 = vmul.f32 %v1957, %v1978
    %v2162 = vmul.f32 %v1957, %v1982
    %v2163 = vmul.f32 %v1957, %v1986
    %v2164 = vmul.f32 %v1957, %v1990
    %v2165 = vmul.f32 %v1957, %v1994
    %v2166 = vmul.f32 %v1957, %v1998
    %v2167 = vmul.f32 %v1957, %v2002
    %v2168 = vmul.f32 %v1957, %v2006
    %v2169 = vmul.f32 %v1957, %v2010
    %v2170 = vmul.f32 %v1957, %v2014
    %v2171 = vmul.f32 %v1961, %v1966
    %v2172 = vmul.f32 %v1961, %v1970
    %v2173 = vmul.f32 %v1961, %v1974
    %v2174 = vmul.f32 %v1961, %v1978
    %v2175 = vmul.f32 %v1961, %v1982
    %v2176 = vmul.f32 %v1961, %v1986
    %v2177 = vmul.f32 %v1961, %v1990
    %v2178 = vmul.f32 %v1961, %v1994
    %v2179 = vmul.f32 %v1961, %v1998
    %v2180 = vmul.f32 %v1961, %v2002
    %v2181 = vmul.f32 %v1961, %v2006
    %v2182 = vmul.f32 %v1961, %v2010
    %v2183 = vmul.f32 %v1961, %v2014
    %v2184 = vadd.f32 %v1742, %v2015
    %v2185 = vadd.f32 %v1743, %v2016
    %v2186 = vadd.f32 %v1744, %v2017
    %v2187 = vadd.f32 %v1745, %v2018
    %v2188 = vadd.f32 %v1746, %v2019
    %v2189 = vadd.f32 %v1747, %v2020
    %v2190 = vadd.f32 %v1748, %v2021
    %v2191 = vadd.f32 %v1749, %v2022
    %v2192 = vadd.f32 %v1750, %v2023
    %v2193 = vadd.f32 %v1751, %v2024
    %v2194 = vadd.f32 %v1752, %v2025
    %v2195 = vadd.f32 %v1753, %v2026
    %v2196 = vadd.f32 %v1754, %v2027
    %v2197 = vadd.f32 %v1755, %v2028
    %v2198 = vadd.f32 %v1756, %v2029
    %v2199 = vadd.f32 %v1757, %v2030
    %v2200 = vadd.f32 %v1758, %v2031
    %v2201 = vadd.f32 %v1759, %v2032
    %v2202 = vadd.f32 %v1760, %v2033
    %v2203 = vadd.f32 %v1761, %v2034
    %v2204 = vadd.f32 %v1762, %v2035
    %v2205 = vadd.f32 %v1763, %v2036
    %v2206 = vadd.f32 %v1764, %v2037
    %v2207 = vadd.f32 %v1765, %v2038
    %v2208 = vadd.f32 %v1766, %v2039
    %v2209 = vadd.f32 %v1767, %v2040
    %v2210 = vadd.f32 %v1768, %v2041
    %v2211 = vadd.f32 %v1769, %v2042
    %v2212 = vadd.f32 %v1770, %v2043
    %v2213 = vadd.f32 %v1771, %v2044
    %v2214 = vadd.f32 %v1772, %v2045
    %v2215 = vadd.f32 %v1773, %v2046
    %v2216 = vadd.f32 %v1774, %v2047
    %v2217 = vadd.f32 %v1775, %v2048
    %v2218 = vadd.f32 %v1776, %v2049
    %v2219 = vadd.f32 %v1777, %v2050
    %v2220 = vadd.f32 %v1778, %v2051
    %v2221 = vadd.f32 %v1779, %v2052
    %v2222 = vadd.f32 %v1780, %v2053
    %v2223 = vadd.f32 %v1781, %v2054
    %v2224 = vadd.f32 %v1782, %v2055
    %v2225 = vadd.f32 %v1783, %v2056
    %v2226 = vadd.f32 %v1784, %v2057
    %v2227 = vadd.f32 %v1785, %v2058
    %v2228 = vadd.f32 %v1786, %v2059
    %v2229 = vadd.f32 %v1787, %v2060
    %v2230 = vadd.f32 %v1788, %v2061
    %v2231 = vadd.f32 %v1789, %v2062
    %v2232 = vadd.f32 %v1790, %v2063
    %v2233 = vadd.f32 %v1791, %v2064
    %v2234 = vadd.f32 %v1792, %v2065
    %v2235 = vadd.f32 %v1793, %v2066
    %v2236 = vadd.f32 %v1794, %v2067
    %v2237 = vadd.f32 %v1795, %v2068
    %v2238 = vadd.f32 %v1796, %v2069
    %v2239 = vadd.f32 %v1797, %v2070
    %v2240 = vadd.f32 %v1798, %v2071
    %v2241 = vadd.f32 %v1799, %v2072
    %v2242 = vadd.f32 %v1800, %v2073
    %v2243 = vadd.f32 %v1801, %v2074
    %v2244 = vadd.f32 %v1802, %v2075
    %v2245 = vadd.f32 %v1803, %v2076
    %v2246 = vadd.f32 %v1804, %v2077
    %v2247 = vadd.f32 %v1805, %v2078
    %v2248 = vadd.f32 %v1806, %v2079
    %v2249 = vadd.f32 %v1807, %v2080
    %v2250 = vadd.f32 %v1808, %v2081
    %v2251 = vadd.f32 %v1809, %v2082
    %v2252 = vadd.f32 %v1810, %v2083
    %v2253 = vadd.f32 %v1811, %v2084
    %v2254 = vadd.f32 %v1812, %v2085
    %v2255 = vadd.f32 %v1813, %v2086
    %v2256 = vadd.f32 %v1814, %v2087
    %v2257 = vadd.f32 %v1815, %v2088
    %v2258 = vadd.f32 %v1816, %v2089
    %v2259 = vadd.f32 %v1817, %v2090
    %v2260 = vadd.f32 %v1818, %v2091
    %v2261 = vadd.f32 %v1819, %v2092
    %v2262 = vadd.f32 %v1820, %v2093
    %v2263 = vadd.f32 %v1821, %v2094
    %v2264 = vadd.f32 %v1822, %v2095
    %v2265 = vadd.f32 %v1823, %v2096
    %v2266 = vadd.f32 %v1824, %v2097
    %v2267 = vadd.f32 %v1825, %v2098
    %v2268 = vadd.f32 %v1826, %v2099
    %v2269 = vadd.f32 %v1827, %v2100
    %v2270 = vadd.f32 %v1828, %v2101
    %v2271 = vadd.f32 %v1829, %v2102
    %v2272 = vadd.f32 %v1830, %v2103
    %v2273 = vadd.f32 %v1831, %v2104
    %v2274 = vadd.f32 %v1832, %v2105
    %v2275 = vadd.f32 %v1833, %v2106
    %v2276 = vadd.f32 %v1834, %v2107
    %v2277 = vadd.f32 %v1835, %v2108
    %v2278 = vadd.f32 %v1836, %v2109
    %v2279 = vadd.f32 %v1837, %v2110
    %v2280 = vadd.f32 %v1838, %v2111
    %v2281 = vadd.f32 %v1839, %v2112
    %v2282 = vadd.f32 %v1840, %v2113
    %v2283 = vadd.f32 %v1841, %v2114
    %v2284 = vadd.f32 %v1842, %v2115
    %v2285 = vadd.f32 %v1843, %v2116
    %v2286 = vadd.f32 %v1844, %v2117
    %v2287 = vadd.f32 %v1845, %v2118
    %v2288 = vadd.f32 %v1846, %v2119
    %v2289 = vadd.f32 %v1847, %v2120
    %v2290 = vadd.f32 %v1848, %v2121
    %v2291 = vadd.f32 %v1849, %v2122
    %v2292 = vadd.f32 %v1850, %v2123
    %v2293 = vadd.f32 %v1851, %v2124
    %v2294 = vadd.f32 %v1852, %v2125
    %v2295 = vadd.f32 %v1853, %v2126
    %v2296 = vadd.f32 %v1854, %v2127
    %v2297 = vadd.f32 %v1855, %v2128
    %v2298 = vadd.f32 %v1856, %v2129
    %v2299 = vadd.f32 %v1857, %v2130
    %v2300 = vadd.f32 %v1858, %v2131
    %v2301 = vadd.f32 %v1859, %v2132
    %v2302 = vadd.f32 %v1860, %v2133
    %v2303 = vadd.f32 %v1861, %v2134
    %v2304 = vadd.f32 %v1862, %v2135
    %v2305 = vadd.f32 %v1863, %v2136
    %v2306 = vadd.f32 %v1864, %v2137
    %v2307 = vadd.f32 %v1865, %v2138
    %v2308 = vadd.f32 %v1866, %v2139
    %v2309 = vadd.f32 %v1867, %v2140
    %v2310 = vadd.f32 %v1868, %v2141
    %v2311 = vadd.f32 %v1869, %v2142
    %v2312 = vadd.f32 %v1870, %v2143
    %v2313 = vadd.f32 %v1871, %v2144
    %v2314 = vadd.f32 %v1872, %v2145
    %v2315 = vadd.f32 %v1873, %v2146
    %v2316 = vadd.f32 %v1874, %v2147
    %v2317 = vadd.f32 %v1875, %v2148
    %v2318 = vadd.f32 %v1876, %v2149
    %v2319 = vadd.f32 %v1877, %v2150
    %v2320 = vadd.f32 %v1878, %v2151
    %v2321 = vadd.f32 %v1879, %v2152
    %v2322 = vadd.f32 %v1880, %v2153
    %v2323 = vadd.f32 %v1881, %v2154
    %v2324 = vadd.f32 %v1882, %v2155
    %v2325 = vadd.f32 %v1883, %v2156
    %v2326 = vadd.f32 %v1884, %v2157
    %v2327 = vadd.f32 %v1885, %v2158
    %v2328 = vadd.f32 %v1886, %v2159
    %v2329 = vadd.f32 %v1887, %v2160
    %v2330 = vadd.f32 %v1888, %v2161
    %v2331 = vadd.f32 %v1889, %v2162
    %v2332 = vadd.f32 %v1890, %v2163
    %v2333 = vadd.f32 %v1891, %v2164
    %v2334 = vadd.f32 %v1892, %v2165
    %v2335 = vadd.f32 %v1893, %v2166
    %v2336 = vadd.f32 %v1894, %v2167
    %v2337 = vadd.f32 %v1895, %v2168
    %v2338 = vadd.f32 %v1896, %v2169
    %v2339 = vadd.f32 %v1897, %v2170
    %v2340 = vadd.f32 %v1898, %v2171
    %v2341 = vadd.f32 %v1899, %v2172
    %v2342 = vadd.f32 %v1900, %v2173
    %v2343 = vadd.f32 %v1901, %v2174
    %v2344 = vadd.f32 %v1902, %v2175
    %v2345 = vadd.f32 %v1903, %v2176
    %v2346 = vadd.f32 %v1904, %v2177
    %v2347 = vadd.f32 %v1905, %v2178
    %v2348 = vadd.f32 %v1906, %v2179
    %v2349 = vadd.f32 %v1907, %v2180
    %v2350 = vadd.f32 %v1908, %v2181
    %v2351 = vadd.f32 %v1909, %v2182
    %v2352 = vadd.f32 %v1910, %v2183
    %2353 = vset.pattern.permute.xlu0 5
    %2354 = vperm.xlu0 %2353, %v35
    %v2355 = vpop.permute.xlu0 %2354
    %2357 = vset.pattern.permute.xlu0 5
    %2358 = vperm.xlu0 %2357, %v36
    %v2359 = vpop.permute.xlu0 %2358
    %2361 = vset.pattern.permute.xlu0 5
    %2362 = vperm.xlu0 %2361, %v37
    %v2363 = vpop.permute.xlu0 %2362
    %2365 = vset.pattern.permute.xlu0 5
    %2366 = vperm.xlu0 %2365, %v38
    %v2367 = vpop.permute.xlu0 %2366
    %2369 = vset.pattern.permute.xlu0 5
    %2370 = vperm.xlu0 %2369, %v39
    %v2371 = vpop.permute.xlu0 %2370
    %2373 = vset.pattern.permute.xlu0 5
    %2374 = vperm.xlu0 %2373, %v40
    %v2375 = vpop.permute.xlu0 %2374
    %2377 = vset.pattern.permute.xlu0 5
    %2378 = vperm.xlu0 %2377, %v41
    %v2379 = vpop.permute.xlu0 %2378
    %2381 = vset.pattern.permute.xlu0 5
    %2382 = vperm.xlu0 %2381, %v42
    %v2383 = vpop.permute.xlu0 %2382
    %2385 = vset.pattern.permute.xlu0 5
    %2386 = vperm.xlu0 %2385, %v43
    %v2387 = vpop.permute.xlu0 %2386
    %2389 = vset.pattern.permute.xlu0 5
    %2390 = vperm.xlu0 %2389, %v44
    %v2391 = vpop.permute.xlu0 %2390
    %2393 = vset.pattern.permute.xlu0 5
    %2394 = vperm.xlu0 %2393, %v45
    %v2395 = vpop.permute.xlu0 %2394
    %2397 = vset.pattern.permute.xlu0 5
    %2398 = vperm.xlu0 %2397, %v46
    %v2399 = vpop.permute.xlu0 %2398
    %2401 = vset.pattern.permute.xlu0 5
    %2402 = vperm.xlu0 %2401, %v47
    %v2403 = vpop.permute.xlu0 %2402
    %v2405 = vlaneseq
    %v2406 = vshrl.u32 %v2405, 7
    %v2407 = vsub.s32 5, %v2406
    %v2408 = vrot.slane %v48, %v2407
    %v2409 = vlaneseq
    %v2410 = vshrl.u32 %v2409, 7
    %v2411 = vsub.s32 5, %v2410
    %v2412 = vrot.slane %v49, %v2411
    %v2413 = vlaneseq
    %v2414 = vshrl.u32 %v2413, 7
    %v2415 = vsub.s32 5, %v2414
    %v2416 = vrot.slane %v50, %v2415
    %v2417 = vlaneseq
    %v2418 = vshrl.u32 %v2417, 7
    %v2419 = vsub.s32 5, %v2418
    %v2420 = vrot.slane %v51, %v2419
    %v2421 = vlaneseq
    %v2422 = vshrl.u32 %v2421, 7
    %v2423 = vsub.s32 5, %v2422
    %v2424 = vrot.slane %v52, %v2423
    %v2425 = vlaneseq
    %v2426 = vshrl.u32 %v2425, 7
    %v2427 = vsub.s32 5, %v2426
    %v2428 = vrot.slane %v53, %v2427
    %v2429 = vlaneseq
    %v2430 = vshrl.u32 %v2429, 7
    %v2431 = vsub.s32 5, %v2430
    %v2432 = vrot.slane %v54, %v2431
    %v2433 = vlaneseq
    %v2434 = vshrl.u32 %v2433, 7
    %v2435 = vsub.s32 5, %v2434
    %v2436 = vrot.slane %v55, %v2435
    %v2437 = vlaneseq
    %v2438 = vshrl.u32 %v2437, 7
    %v2439 = vsub.s32 5, %v2438
    %v2440 = vrot.slane %v56, %v2439
    %v2441 = vlaneseq
    %v2442 = vshrl.u32 %v2441, 7
    %v2443 = vsub.s32 5, %v2442
    %v2444 = vrot.slane %v57, %v2443
    %v2445 = vlaneseq
    %v2446 = vshrl.u32 %v2445, 7
    %v2447 = vsub.s32 5, %v2446
    %v2448 = vrot.slane %v58, %v2447
    %v2449 = vlaneseq
    %v2450 = vshrl.u32 %v2449, 7
    %v2451 = vsub.s32 5, %v2450
    %v2452 = vrot.slane %v59, %v2451
    %v2453 = vlaneseq
    %v2454 = vshrl.u32 %v2453, 7
    %v2455 = vsub.s32 5, %v2454
    %v2456 = vrot.slane %v60, %v2455
    %v2457 = vmul.f32 %v2355, %v2408
    %v2458 = vmul.f32 %v2355, %v2412
    %v2459 = vmul.f32 %v2355, %v2416
    %v2460 = vmul.f32 %v2355, %v2420
    %v2461 = vmul.f32 %v2355, %v2424
    %v2462 = vmul.f32 %v2355, %v2428
    %v2463 = vmul.f32 %v2355, %v2432
    %v2464 = vmul.f32 %v2355, %v2436
    %v2465 = vmul.f32 %v2355, %v2440
    %v2466 = vmul.f32 %v2355, %v2444
    %v2467 = vmul.f32 %v2355, %v2448
    %v2468 = vmul.f32 %v2355, %v2452
    %v2469 = vmul.f32 %v2355, %v2456
    %v2470 = vmul.f32 %v2359, %v2408
    %v2471 = vmul.f32 %v2359, %v2412
    %v2472 = vmul.f32 %v2359, %v2416
    %v2473 = vmul.f32 %v2359, %v2420
    %v2474 = vmul.f32 %v2359, %v2424
    %v2475 = vmul.f32 %v2359, %v2428
    %v2476 = vmul.f32 %v2359, %v2432
    %v2477 = vmul.f32 %v2359, %v2436
    %v2478 = vmul.f32 %v2359, %v2440
    %v2479 = vmul.f32 %v2359, %v2444
    %v2480 = vmul.f32 %v2359, %v2448
    %v2481 = vmul.f32 %v2359, %v2452
    %v2482 = vmul.f32 %v2359, %v2456
    %v2483 = vmul.f32 %v2363, %v2408
    %v2484 = vmul.f32 %v2363, %v2412
    %v2485 = vmul.f32 %v2363, %v2416
    %v2486 = vmul.f32 %v2363, %v2420
    %v2487 = vmul.f32 %v2363, %v2424
    %v2488 = vmul.f32 %v2363, %v2428
    %v2489 = vmul.f32 %v2363, %v2432
    %v2490 = vmul.f32 %v2363, %v2436
    %v2491 = vmul.f32 %v2363, %v2440
    %v2492 = vmul.f32 %v2363, %v2444
    %v2493 = vmul.f32 %v2363, %v2448
    %v2494 = vmul.f32 %v2363, %v2452
    %v2495 = vmul.f32 %v2363, %v2456
    %v2496 = vmul.f32 %v2367, %v2408
    %v2497 = vmul.f32 %v2367, %v2412
    %v2498 = vmul.f32 %v2367, %v2416
    %v2499 = vmul.f32 %v2367, %v2420
    %v2500 = vmul.f32 %v2367, %v2424
    %v2501 = vmul.f32 %v2367, %v2428
    %v2502 = vmul.f32 %v2367, %v2432
    %v2503 = vmul.f32 %v2367, %v2436
    %v2504 = vmul.f32 %v2367, %v2440
    %v2505 = vmul.f32 %v2367, %v2444
    %v2506 = vmul.f32 %v2367, %v2448
    %v2507 = vmul.f32 %v2367, %v2452
    %v2508 = vmul.f32 %v2367, %v2456
    %v2509 = vmul.f32 %v2371, %v2408
    %v2510 = vmul.f32 %v2371, %v2412
    %v2511 = vmul.f32 %v2371, %v2416
    %v2512 = vmul.f32 %v2371, %v2420
    %v2513 = vmul.f32 %v2371, %v2424
    %v2514 = vmul.f32 %v2371, %v2428
    %v2515 = vmul.f32 %v2371, %v2432
    %v2516 = vmul.f32 %v2371, %v2436
    %v2517 = vmul.f32 %v2371, %v2440
    %v2518 = vmul.f32 %v2371, %v2444
    %v2519 = vmul.f32 %v2371, %v2448
    %v2520 = vmul.f32 %v2371, %v2452
    %v2521 = vmul.f32 %v2371, %v2456
    %v2522 = vmul.f32 %v2375, %v2408
    %v2523 = vmul.f32 %v2375, %v2412
    %v2524 = vmul.f32 %v2375, %v2416
    %v2525 = vmul.f32 %v2375, %v2420
    %v2526 = vmul.f32 %v2375, %v2424
    %v2527 = vmul.f32 %v2375, %v2428
    %v2528 = vmul.f32 %v2375, %v2432
    %v2529 = vmul.f32 %v2375, %v2436
    %v2530 = vmul.f32 %v2375, %v2440
    %v2531 = vmul.f32 %v2375, %v2444
    %v2532 = vmul.f32 %v2375, %v2448
    %v2533 = vmul.f32 %v2375, %v2452
    %v2534 = vmul.f32 %v2375, %v2456
    %v2535 = vmul.f32 %v2379, %v2408
    %v2536 = vmul.f32 %v2379, %v2412
    %v2537 = vmul.f32 %v2379, %v2416
    %v2538 = vmul.f32 %v2379, %v2420
    %v2539 = vmul.f32 %v2379, %v2424
    %v2540 = vmul.f32 %v2379, %v2428
    %v2541 = vmul.f32 %v2379, %v2432
    %v2542 = vmul.f32 %v2379, %v2436
    %v2543 = vmul.f32 %v2379, %v2440
    %v2544 = vmul.f32 %v2379, %v2444
    %v2545 = vmul.f32 %v2379, %v2448
    %v2546 = vmul.f32 %v2379, %v2452
    %v2547 = vmul.f32 %v2379, %v2456
    %v2548 = vmul.f32 %v2383, %v2408
    %v2549 = vmul.f32 %v2383, %v2412
    %v2550 = vmul.f32 %v2383, %v2416
    %v2551 = vmul.f32 %v2383, %v2420
    %v2552 = vmul.f32 %v2383, %v2424
    %v2553 = vmul.f32 %v2383, %v2428
    %v2554 = vmul.f32 %v2383, %v2432
    %v2555 = vmul.f32 %v2383, %v2436
    %v2556 = vmul.f32 %v2383, %v2440
    %v2557 = vmul.f32 %v2383, %v2444
    %v2558 = vmul.f32 %v2383, %v2448
    %v2559 = vmul.f32 %v2383, %v2452
    %v2560 = vmul.f32 %v2383, %v2456
    %v2561 = vmul.f32 %v2387, %v2408
    %v2562 = vmul.f32 %v2387, %v2412
    %v2563 = vmul.f32 %v2387, %v2416
    %v2564 = vmul.f32 %v2387, %v2420
    %v2565 = vmul.f32 %v2387, %v2424
    %v2566 = vmul.f32 %v2387, %v2428
    %v2567 = vmul.f32 %v2387, %v2432
    %v2568 = vmul.f32 %v2387, %v2436
    %v2569 = vmul.f32 %v2387, %v2440
    %v2570 = vmul.f32 %v2387, %v2444
    %v2571 = vmul.f32 %v2387, %v2448
    %v2572 = vmul.f32 %v2387, %v2452
    %v2573 = vmul.f32 %v2387, %v2456
    %v2574 = vmul.f32 %v2391, %v2408
    %v2575 = vmul.f32 %v2391, %v2412
    %v2576 = vmul.f32 %v2391, %v2416
    %v2577 = vmul.f32 %v2391, %v2420
    %v2578 = vmul.f32 %v2391, %v2424
    %v2579 = vmul.f32 %v2391, %v2428
    %v2580 = vmul.f32 %v2391, %v2432
    %v2581 = vmul.f32 %v2391, %v2436
    %v2582 = vmul.f32 %v2391, %v2440
    %v2583 = vmul.f32 %v2391, %v2444
    %v2584 = vmul.f32 %v2391, %v2448
    %v2585 = vmul.f32 %v2391, %v2452
    %v2586 = vmul.f32 %v2391, %v2456
    %v2587 = vmul.f32 %v2395, %v2408
    %v2588 = vmul.f32 %v2395, %v2412
    %v2589 = vmul.f32 %v2395, %v2416
    %v2590 = vmul.f32 %v2395, %v2420
    %v2591 = vmul.f32 %v2395, %v2424
    %v2592 = vmul.f32 %v2395, %v2428
    %v2593 = vmul.f32 %v2395, %v2432
    %v2594 = vmul.f32 %v2395, %v2436
    %v2595 = vmul.f32 %v2395, %v2440
    %v2596 = vmul.f32 %v2395, %v2444
    %v2597 = vmul.f32 %v2395, %v2448
    %v2598 = vmul.f32 %v2395, %v2452
    %v2599 = vmul.f32 %v2395, %v2456
    %v2600 = vmul.f32 %v2399, %v2408
    %v2601 = vmul.f32 %v2399, %v2412
    %v2602 = vmul.f32 %v2399, %v2416
    %v2603 = vmul.f32 %v2399, %v2420
    %v2604 = vmul.f32 %v2399, %v2424
    %v2605 = vmul.f32 %v2399, %v2428
    %v2606 = vmul.f32 %v2399, %v2432
    %v2607 = vmul.f32 %v2399, %v2436
    %v2608 = vmul.f32 %v2399, %v2440
    %v2609 = vmul.f32 %v2399, %v2444
    %v2610 = vmul.f32 %v2399, %v2448
    %v2611 = vmul.f32 %v2399, %v2452
    %v2612 = vmul.f32 %v2399, %v2456
    %v2613 = vmul.f32 %v2403, %v2408
    %v2614 = vmul.f32 %v2403, %v2412
    %v2615 = vmul.f32 %v2403, %v2416
    %v2616 = vmul.f32 %v2403, %v2420
    %v2617 = vmul.f32 %v2403, %v2424
    %v2618 = vmul.f32 %v2403, %v2428
    %v2619 = vmul.f32 %v2403, %v2432
    %v2620 = vmul.f32 %v2403, %v2436
    %v2621 = vmul.f32 %v2403, %v2440
    %v2622 = vmul.f32 %v2403, %v2444
    %v2623 = vmul.f32 %v2403, %v2448
    %v2624 = vmul.f32 %v2403, %v2452
    %v2625 = vmul.f32 %v2403, %v2456
    %v2626 = vadd.f32 %v2184, %v2457
    %v2627 = vadd.f32 %v2185, %v2458
    %v2628 = vadd.f32 %v2186, %v2459
    %v2629 = vadd.f32 %v2187, %v2460
    %v2630 = vadd.f32 %v2188, %v2461
    %v2631 = vadd.f32 %v2189, %v2462
    %v2632 = vadd.f32 %v2190, %v2463
    %v2633 = vadd.f32 %v2191, %v2464
    %v2634 = vadd.f32 %v2192, %v2465
    %v2635 = vadd.f32 %v2193, %v2466
    %v2636 = vadd.f32 %v2194, %v2467
    %v2637 = vadd.f32 %v2195, %v2468
    %v2638 = vadd.f32 %v2196, %v2469
    %v2639 = vadd.f32 %v2197, %v2470
    %v2640 = vadd.f32 %v2198, %v2471
    %v2641 = vadd.f32 %v2199, %v2472
    %v2642 = vadd.f32 %v2200, %v2473
    %v2643 = vadd.f32 %v2201, %v2474
    %v2644 = vadd.f32 %v2202, %v2475
    %v2645 = vadd.f32 %v2203, %v2476
    %v2646 = vadd.f32 %v2204, %v2477
    %v2647 = vadd.f32 %v2205, %v2478
    %v2648 = vadd.f32 %v2206, %v2479
    %v2649 = vadd.f32 %v2207, %v2480
    %v2650 = vadd.f32 %v2208, %v2481
    %v2651 = vadd.f32 %v2209, %v2482
    %v2652 = vadd.f32 %v2210, %v2483
    %v2653 = vadd.f32 %v2211, %v2484
    %v2654 = vadd.f32 %v2212, %v2485
    %v2655 = vadd.f32 %v2213, %v2486
    %v2656 = vadd.f32 %v2214, %v2487
    %v2657 = vadd.f32 %v2215, %v2488
    %v2658 = vadd.f32 %v2216, %v2489
    %v2659 = vadd.f32 %v2217, %v2490
    %v2660 = vadd.f32 %v2218, %v2491
    %v2661 = vadd.f32 %v2219, %v2492
    %v2662 = vadd.f32 %v2220, %v2493
    %v2663 = vadd.f32 %v2221, %v2494
    %v2664 = vadd.f32 %v2222, %v2495
    %v2665 = vadd.f32 %v2223, %v2496
    %v2666 = vadd.f32 %v2224, %v2497
    %v2667 = vadd.f32 %v2225, %v2498
    %v2668 = vadd.f32 %v2226, %v2499
    %v2669 = vadd.f32 %v2227, %v2500
    %v2670 = vadd.f32 %v2228, %v2501
    %v2671 = vadd.f32 %v2229, %v2502
    %v2672 = vadd.f32 %v2230, %v2503
    %v2673 = vadd.f32 %v2231, %v2504
    %v2674 = vadd.f32 %v2232, %v2505
    %v2675 = vadd.f32 %v2233, %v2506
    %v2676 = vadd.f32 %v2234, %v2507
    %v2677 = vadd.f32 %v2235, %v2508
    %v2678 = vadd.f32 %v2236, %v2509
    %v2679 = vadd.f32 %v2237, %v2510
    %v2680 = vadd.f32 %v2238, %v2511
    %v2681 = vadd.f32 %v2239, %v2512
    %v2682 = vadd.f32 %v2240, %v2513
    %v2683 = vadd.f32 %v2241, %v2514
    %v2684 = vadd.f32 %v2242, %v2515
    %v2685 = vadd.f32 %v2243, %v2516
    %v2686 = vadd.f32 %v2244, %v2517
    %v2687 = vadd.f32 %v2245, %v2518
    %v2688 = vadd.f32 %v2246, %v2519
    %v2689 = vadd.f32 %v2247, %v2520
    %v2690 = vadd.f32 %v2248, %v2521
    %v2691 = vadd.f32 %v2249, %v2522
    %v2692 = vadd.f32 %v2250, %v2523
    %v2693 = vadd.f32 %v2251, %v2524
    %v2694 = vadd.f32 %v2252, %v2525
    %v2695 = vadd.f32 %v2253, %v2526
    %v2696 = vadd.f32 %v2254, %v2527
    %v2697 = vadd.f32 %v2255, %v2528
    %v2698 = vadd.f32 %v2256, %v2529
    %v2699 = vadd.f32 %v2257, %v2530
    %v2700 = vadd.f32 %v2258, %v2531
    %v2701 = vadd.f32 %v2259, %v2532
    %v2702 = vadd.f32 %v2260, %v2533
    %v2703 = vadd.f32 %v2261, %v2534
    %v2704 = vadd.f32 %v2262, %v2535
    %v2705 = vadd.f32 %v2263, %v2536
    %v2706 = vadd.f32 %v2264, %v2537
    %v2707 = vadd.f32 %v2265, %v2538
    %v2708 = vadd.f32 %v2266, %v2539
    %v2709 = vadd.f32 %v2267, %v2540
    %v2710 = vadd.f32 %v2268, %v2541
    %v2711 = vadd.f32 %v2269, %v2542
    %v2712 = vadd.f32 %v2270, %v2543
    %v2713 = vadd.f32 %v2271, %v2544
    %v2714 = vadd.f32 %v2272, %v2545
    %v2715 = vadd.f32 %v2273, %v2546
    %v2716 = vadd.f32 %v2274, %v2547
    %v2717 = vadd.f32 %v2275, %v2548
    %v2718 = vadd.f32 %v2276, %v2549
    %v2719 = vadd.f32 %v2277, %v2550
    %v2720 = vadd.f32 %v2278, %v2551
    %v2721 = vadd.f32 %v2279, %v2552
    %v2722 = vadd.f32 %v2280, %v2553
    %v2723 = vadd.f32 %v2281, %v2554
    %v2724 = vadd.f32 %v2282, %v2555
    %v2725 = vadd.f32 %v2283, %v2556
    %v2726 = vadd.f32 %v2284, %v2557
    %v2727 = vadd.f32 %v2285, %v2558
    %v2728 = vadd.f32 %v2286, %v2559
    %v2729 = vadd.f32 %v2287, %v2560
    %v2730 = vadd.f32 %v2288, %v2561
    %v2731 = vadd.f32 %v2289, %v2562
    %v2732 = vadd.f32 %v2290, %v2563
    %v2733 = vadd.f32 %v2291, %v2564
    %v2734 = vadd.f32 %v2292, %v2565
    %v2735 = vadd.f32 %v2293, %v2566
    %v2736 = vadd.f32 %v2294, %v2567
    %v2737 = vadd.f32 %v2295, %v2568
    %v2738 = vadd.f32 %v2296, %v2569
    %v2739 = vadd.f32 %v2297, %v2570
    %v2740 = vadd.f32 %v2298, %v2571
    %v2741 = vadd.f32 %v2299, %v2572
    %v2742 = vadd.f32 %v2300, %v2573
    %v2743 = vadd.f32 %v2301, %v2574
    %v2744 = vadd.f32 %v2302, %v2575
    %v2745 = vadd.f32 %v2303, %v2576
    %v2746 = vadd.f32 %v2304, %v2577
    %v2747 = vadd.f32 %v2305, %v2578
    %v2748 = vadd.f32 %v2306, %v2579
    %v2749 = vadd.f32 %v2307, %v2580
    %v2750 = vadd.f32 %v2308, %v2581
    %v2751 = vadd.f32 %v2309, %v2582
    %v2752 = vadd.f32 %v2310, %v2583
    %v2753 = vadd.f32 %v2311, %v2584
    %v2754 = vadd.f32 %v2312, %v2585
    %v2755 = vadd.f32 %v2313, %v2586
    %v2756 = vadd.f32 %v2314, %v2587
    %v2757 = vadd.f32 %v2315, %v2588
    %v2758 = vadd.f32 %v2316, %v2589
    %v2759 = vadd.f32 %v2317, %v2590
    %v2760 = vadd.f32 %v2318, %v2591
    %v2761 = vadd.f32 %v2319, %v2592
    %v2762 = vadd.f32 %v2320, %v2593
    %v2763 = vadd.f32 %v2321, %v2594
    %v2764 = vadd.f32 %v2322, %v2595
    %v2765 = vadd.f32 %v2323, %v2596
    %v2766 = vadd.f32 %v2324, %v2597
    %v2767 = vadd.f32 %v2325, %v2598
    %v2768 = vadd.f32 %v2326, %v2599
    %v2769 = vadd.f32 %v2327, %v2600
    %v2770 = vadd.f32 %v2328, %v2601
    %v2771 = vadd.f32 %v2329, %v2602
    %v2772 = vadd.f32 %v2330, %v2603
    %v2773 = vadd.f32 %v2331, %v2604
    %v2774 = vadd.f32 %v2332, %v2605
    %v2775 = vadd.f32 %v2333, %v2606
    %v2776 = vadd.f32 %v2334, %v2607
    %v2777 = vadd.f32 %v2335, %v2608
    %v2778 = vadd.f32 %v2336, %v2609
    %v2779 = vadd.f32 %v2337, %v2610
    %v2780 = vadd.f32 %v2338, %v2611
    %v2781 = vadd.f32 %v2339, %v2612
    %v2782 = vadd.f32 %v2340, %v2613
    %v2783 = vadd.f32 %v2341, %v2614
    %v2784 = vadd.f32 %v2342, %v2615
    %v2785 = vadd.f32 %v2343, %v2616
    %v2786 = vadd.f32 %v2344, %v2617
    %v2787 = vadd.f32 %v2345, %v2618
    %v2788 = vadd.f32 %v2346, %v2619
    %v2789 = vadd.f32 %v2347, %v2620
    %v2790 = vadd.f32 %v2348, %v2621
    %v2791 = vadd.f32 %v2349, %v2622
    %v2792 = vadd.f32 %v2350, %v2623
    %v2793 = vadd.f32 %v2351, %v2624
    %v2794 = vadd.f32 %v2352, %v2625
    %v2795 = vmul.f32 %v2626, 0.01
    %v2796 = vmul.f32 %v2627, 0.01
    %v2797 = vmul.f32 %v2628, 0.01
    %v2798 = vmul.f32 %v2629, 0.01
    %v2799 = vmul.f32 %v2630, 0.01
    %v2800 = vmul.f32 %v2631, 0.01
    %v2801 = vmul.f32 %v2632, 0.01
    %v2802 = vmul.f32 %v2633, 0.01
    %v2803 = vmul.f32 %v2634, 0.01
    %v2804 = vmul.f32 %v2635, 0.01
    %v2805 = vmul.f32 %v2636, 0.01
    %v2806 = vmul.f32 %v2637, 0.01
    %v2807 = vmul.f32 %v2638, 0.01
    %v2808 = vmul.f32 %v2639, 0.01
    %v2809 = vmul.f32 %v2640, 0.01
    %v2810 = vmul.f32 %v2641, 0.01
    %v2811 = vmul.f32 %v2642, 0.01
    %v2812 = vmul.f32 %v2643, 0.01
    %v2813 = vmul.f32 %v2644, 0.01
    %v2814 = vmul.f32 %v2645, 0.01
    %v2815 = vmul.f32 %v2646, 0.01
    %v2816 = vmul.f32 %v2647, 0.01
    %v2817 = vmul.f32 %v2648, 0.01
    %v2818 = vmul.f32 %v2649, 0.01
    %v2819 = vmul.f32 %v2650, 0.01
    %v2820 = vmul.f32 %v2651, 0.01
    %v2821 = vmul.f32 %v2652, 0.01
    %v2822 = vmul.f32 %v2653, 0.01
    %v2823 = vmul.f32 %v2654, 0.01
    %v2824 = vmul.f32 %v2655, 0.01
    %v2825 = vmul.f32 %v2656, 0.01
    %v2826 = vmul.f32 %v2657, 0.01
    %v2827 = vmul.f32 %v2658, 0.01
    %v2828 = vmul.f32 %v2659, 0.01
    %v2829 = vmul.f32 %v2660, 0.01
    %v2830 = vmul.f32 %v2661, 0.01
    %v2831 = vmul.f32 %v2662, 0.01
    %v2832 = vmul.f32 %v2663, 0.01
    %v2833 = vmul.f32 %v2664, 0.01
    %v2834 = vmul.f32 %v2665, 0.01
    %v2835 = vmul.f32 %v2666, 0.01
    %v2836 = vmul.f32 %v2667, 0.01
    %v2837 = vmul.f32 %v2668, 0.01
    %v2838 = vmul.f32 %v2669, 0.01
    %v2839 = vmul.f32 %v2670, 0.01
    %v2840 = vmul.f32 %v2671, 0.01
    %v2841 = vmul.f32 %v2672, 0.01
    %v2842 = vmul.f32 %v2673, 0.01
    %v2843 = vmul.f32 %v2674, 0.01
    %v2844 = vmul.f32 %v2675, 0.01
    %v2845 = vmul.f32 %v2676, 0.01
    %v2846 = vmul.f32 %v2677, 0.01
    %v2847 = vmul.f32 %v2678, 0.01
    %v2848 = vmul.f32 %v2679, 0.01
    %v2849 = vmul.f32 %v2680, 0.01
    %v2850 = vmul.f32 %v2681, 0.01
    %v2851 = vmul.f32 %v2682, 0.01
    %v2852 = vmul.f32 %v2683, 0.01
    %v2853 = vmul.f32 %v2684, 0.01
    %v2854 = vmul.f32 %v2685, 0.01
    %v2855 = vmul.f32 %v2686, 0.01
    %v2856 = vmul.f32 %v2687, 0.01
    %v2857 = vmul.f32 %v2688, 0.01
    %v2858 = vmul.f32 %v2689, 0.01
    %v2859 = vmul.f32 %v2690, 0.01
    %v2860 = vmul.f32 %v2691, 0.01
    %v2861 = vmul.f32 %v2692, 0.01
    %v2862 = vmul.f32 %v2693, 0.01
    %v2863 = vmul.f32 %v2694, 0.01
    %v2864 = vmul.f32 %v2695, 0.01
    %v2865 = vmul.f32 %v2696, 0.01
    %v2866 = vmul.f32 %v2697, 0.01
    %v2867 = vmul.f32 %v2698, 0.01
    %v2868 = vmul.f32 %v2699, 0.01
    %v2869 = vmul.f32 %v2700, 0.01
    %v2870 = vmul.f32 %v2701, 0.01
    %v2871 = vmul.f32 %v2702, 0.01
    %v2872 = vmul.f32 %v2703, 0.01
    %v2873 = vmul.f32 %v2704, 0.01
    %v2874 = vmul.f32 %v2705, 0.01
    %v2875 = vmul.f32 %v2706, 0.01
    %v2876 = vmul.f32 %v2707, 0.01
    %v2877 = vmul.f32 %v2708, 0.01
    %v2878 = vmul.f32 %v2709, 0.01
    %v2879 = vmul.f32 %v2710, 0.01
    %v2880 = vmul.f32 %v2711, 0.01
    %v2881 = vmul.f32 %v2712, 0.01
    %v2882 = vmul.f32 %v2713, 0.01
    %v2883 = vmul.f32 %v2714, 0.01
    %v2884 = vmul.f32 %v2715, 0.01
    %v2885 = vmul.f32 %v2716, 0.01
    %v2886 = vmul.f32 %v2717, 0.01
    %v2887 = vmul.f32 %v2718, 0.01
    %v2888 = vmul.f32 %v2719, 0.01
    %v2889 = vmul.f32 %v2720, 0.01
    %v2890 = vmul.f32 %v2721, 0.01
    %v2891 = vmul.f32 %v2722, 0.01
    %v2892 = vmul.f32 %v2723, 0.01
    %v2893 = vmul.f32 %v2724, 0.01
    %v2894 = vmul.f32 %v2725, 0.01
    %v2895 = vmul.f32 %v2726, 0.01
    %v2896 = vmul.f32 %v2727, 0.01
    %v2897 = vmul.f32 %v2728, 0.01
    %v2898 = vmul.f32 %v2729, 0.01
    %v2899 = vmul.f32 %v2730, 0.01
    %v2900 = vmul.f32 %v2731, 0.01
    %v2901 = vmul.f32 %v2732, 0.01
    %v2902 = vmul.f32 %v2733, 0.01
    %v2903 = vmul.f32 %v2734, 0.01
    %v2904 = vmul.f32 %v2735, 0.01
    %v2905 = vmul.f32 %v2736, 0.01
    %v2906 = vmul.f32 %v2737, 0.01
    %v2907 = vmul.f32 %v2738, 0.01
    %v2908 = vmul.f32 %v2739, 0.01
    %v2909 = vmul.f32 %v2740, 0.01
    %v2910 = vmul.f32 %v2741, 0.01
    %v2911 = vmul.f32 %v2742, 0.01
    %v2912 = vmul.f32 %v2743, 0.01
    %v2913 = vmul.f32 %v2744, 0.01
    %v2914 = vmul.f32 %v2745, 0.01
    %v2915 = vmul.f32 %v2746, 0.01
    %v2916 = vmul.f32 %v2747, 0.01
    %v2917 = vmul.f32 %v2748, 0.01
    %v2918 = vmul.f32 %v2749, 0.01
    %v2919 = vmul.f32 %v2750, 0.01
    %v2920 = vmul.f32 %v2751, 0.01
    %v2921 = vmul.f32 %v2752, 0.01
    %v2922 = vmul.f32 %v2753, 0.01
    %v2923 = vmul.f32 %v2754, 0.01
    %v2924 = vmul.f32 %v2755, 0.01
    %v2925 = vmul.f32 %v2756, 0.01
    %v2926 = vmul.f32 %v2757, 0.01
    %v2927 = vmul.f32 %v2758, 0.01
    %v2928 = vmul.f32 %v2759, 0.01
    %v2929 = vmul.f32 %v2760, 0.01
    %v2930 = vmul.f32 %v2761, 0.01
    %v2931 = vmul.f32 %v2762, 0.01
    %v2932 = vmul.f32 %v2763, 0.01
    %v2933 = vmul.f32 %v2764, 0.01
    %v2934 = vmul.f32 %v2765, 0.01
    %v2935 = vmul.f32 %v2766, 0.01
    %v2936 = vmul.f32 %v2767, 0.01
    %v2937 = vmul.f32 %v2768, 0.01
    %v2938 = vmul.f32 %v2769, 0.01
    %v2939 = vmul.f32 %v2770, 0.01
    %v2940 = vmul.f32 %v2771, 0.01
    %v2941 = vmul.f32 %v2772, 0.01
    %v2942 = vmul.f32 %v2773, 0.01
    %v2943 = vmul.f32 %v2774, 0.01
    %v2944 = vmul.f32 %v2775, 0.01
    %v2945 = vmul.f32 %v2776, 0.01
    %v2946 = vmul.f32 %v2777, 0.01
    %v2947 = vmul.f32 %v2778, 0.01
    %v2948 = vmul.f32 %v2779, 0.01
    %v2949 = vmul.f32 %v2780, 0.01
    %v2950 = vmul.f32 %v2781, 0.01
    %v2951 = vmul.f32 %v2782, 0.01
    %v2952 = vmul.f32 %v2783, 0.01
    %v2953 = vmul.f32 %v2784, 0.01
    %v2954 = vmul.f32 %v2785, 0.01
    %v2955 = vmul.f32 %v2786, 0.01
    %v2956 = vmul.f32 %v2787, 0.01
    %v2957 = vmul.f32 %v2788, 0.01
    %v2958 = vmul.f32 %v2789, 0.01
    %v2959 = vmul.f32 %v2790, 0.01
    %v2960 = vmul.f32 %v2791, 0.01
    %v2961 = vmul.f32 %v2792, 0.01
    %v2962 = vmul.f32 %v2793, 0.01
    %v2963 = vmul.f32 %v2794, 0.01
    %v2964 = vmax.f32 %v2626, %v2795
    %v2965 = vmax.f32 %v2627, %v2796
    %v2966 = vmax.f32 %v2628, %v2797
    %v2967 = vmax.f32 %v2629, %v2798
    %v2968 = vmax.f32 %v2630, %v2799
    %v2969 = vmax.f32 %v2631, %v2800
    %v2970 = vmax.f32 %v2632, %v2801
    %v2971 = vmax.f32 %v2633, %v2802
    %v2972 = vmax.f32 %v2634, %v2803
    %v2973 = vmax.f32 %v2635, %v2804
    %v2974 = vmax.f32 %v2636, %v2805
    %v2975 = vmax.f32 %v2637, %v2806
    %v2976 = vmax.f32 %v2638, %v2807
    %v2977 = vmax.f32 %v2639, %v2808
    %v2978 = vmax.f32 %v2640, %v2809
    %v2979 = vmax.f32 %v2641, %v2810
    %v2980 = vmax.f32 %v2642, %v2811
    %v2981 = vmax.f32 %v2643, %v2812
    %v2982 = vmax.f32 %v2644, %v2813
    %v2983 = vmax.f32 %v2645, %v2814
    %v2984 = vmax.f32 %v2646, %v2815
    %v2985 = vmax.f32 %v2647, %v2816
    %v2986 = vmax.f32 %v2648, %v2817
    %v2987 = vmax.f32 %v2649, %v2818
    %v2988 = vmax.f32 %v2650, %v2819
    %v2989 = vmax.f32 %v2651, %v2820
    %v2990 = vmax.f32 %v2652, %v2821
    %v2991 = vmax.f32 %v2653, %v2822
    %v2992 = vmax.f32 %v2654, %v2823
    %v2993 = vmax.f32 %v2655, %v2824
    %v2994 = vmax.f32 %v2656, %v2825
    %v2995 = vmax.f32 %v2657, %v2826
    %v2996 = vmax.f32 %v2658, %v2827
    %v2997 = vmax.f32 %v2659, %v2828
    %v2998 = vmax.f32 %v2660, %v2829
    %v2999 = vmax.f32 %v2661, %v2830
    %v3000 = vmax.f32 %v2662, %v2831
    %v3001 = vmax.f32 %v2663, %v2832
    %v3002 = vmax.f32 %v2664, %v2833
    %v3003 = vmax.f32 %v2665, %v2834
    %v3004 = vmax.f32 %v2666, %v2835
    %v3005 = vmax.f32 %v2667, %v2836
    %v3006 = vmax.f32 %v2668, %v2837
    %v3007 = vmax.f32 %v2669, %v2838
    %v3008 = vmax.f32 %v2670, %v2839
    %v3009 = vmax.f32 %v2671, %v2840
    %v3010 = vmax.f32 %v2672, %v2841
    %v3011 = vmax.f32 %v2673, %v2842
    %v3012 = vmax.f32 %v2674, %v2843
    %v3013 = vmax.f32 %v2675, %v2844
    %v3014 = vmax.f32 %v2676, %v2845
    %v3015 = vmax.f32 %v2677, %v2846
    %v3016 = vmax.f32 %v2678, %v2847
    %v3017 = vmax.f32 %v2679, %v2848
    %v3018 = vmax.f32 %v2680, %v2849
    %v3019 = vmax.f32 %v2681, %v2850
    %v3020 = vmax.f32 %v2682, %v2851
    %v3021 = vmax.f32 %v2683, %v2852
    %v3022 = vmax.f32 %v2684, %v2853
    %v3023 = vmax.f32 %v2685, %v2854
    %v3024 = vmax.f32 %v2686, %v2855
    %v3025 = vmax.f32 %v2687, %v2856
    %v3026 = vmax.f32 %v2688, %v2857
    %v3027 = vmax.f32 %v2689, %v2858
    %v3028 = vmax.f32 %v2690, %v2859
    %v3029 = vmax.f32 %v2691, %v2860
    %v3030 = vmax.f32 %v2692, %v2861
    %v3031 = vmax.f32 %v2693, %v2862
    %v3032 = vmax.f32 %v2694, %v2863
    %v3033 = vmax.f32 %v2695, %v2864
    %v3034 = vmax.f32 %v2696, %v2865
    %v3035 = vmax.f32 %v2697, %v2866
    %v3036 = vmax.f32 %v2698, %v2867
    %v3037 = vmax.f32 %v2699, %v2868
    %v3038 = vmax.f32 %v2700, %v2869
    %v3039 = vmax.f32 %v2701, %v2870
    %v3040 = vmax.f32 %v2702, %v2871
    %v3041 = vmax.f32 %v2703, %v2872
    %v3042 = vmax.f32 %v2704, %v2873
    %v3043 = vmax.f32 %v2705, %v2874
    %v3044 = vmax.f32 %v2706, %v2875
    %v3045 = vmax.f32 %v2707, %v2876
    %v3046 = vmax.f32 %v2708, %v2877
    %v3047 = vmax.f32 %v2709, %v2878
    %v3048 = vmax.f32 %v2710, %v2879
    %v3049 = vmax.f32 %v2711, %v2880
    %v3050 = vmax.f32 %v2712, %v2881
    %v3051 = vmax.f32 %v2713, %v2882
    %v3052 = vmax.f32 %v2714, %v2883
    %v3053 = vmax.f32 %v2715, %v2884
    %v3054 = vmax.f32 %v2716, %v2885
    %v3055 = vmax.f32 %v2717, %v2886
    %v3056 = vmax.f32 %v2718, %v2887
    %v3057 = vmax.f32 %v2719, %v2888
    %v3058 = vmax.f32 %v2720, %v2889
    %v3059 = vmax.f32 %v2721, %v2890
    %v3060 = vmax.f32 %v2722, %v2891
    %v3061 = vmax.f32 %v2723, %v2892
    %v3062 = vmax.f32 %v2724, %v2893
    %v3063 = vmax.f32 %v2725, %v2894
    %v3064 = vmax.f32 %v2726, %v2895
    %v3065 = vmax.f32 %v2727, %v2896
    %v3066 = vmax.f32 %v2728, %v2897
    %v3067 = vmax.f32 %v2729, %v2898
    %v3068 = vmax.f32 %v2730, %v2899
    %v3069 = vmax.f32 %v2731, %v2900
    %v3070 = vmax.f32 %v2732, %v2901
    %v3071 = vmax.f32 %v2733, %v2902
    %v3072 = vmax.f32 %v2734, %v2903
    %v3073 = vmax.f32 %v2735, %v2904
    %v3074 = vmax.f32 %v2736, %v2905
    %v3075 = vmax.f32 %v2737, %v2906
    %v3076 = vmax.f32 %v2738, %v2907
    %v3077 = vmax.f32 %v2739, %v2908
    %v3078 = vmax.f32 %v2740, %v2909
    %v3079 = vmax.f32 %v2741, %v2910
    %v3080 = vmax.f32 %v2742, %v2911
    %v3081 = vmax.f32 %v2743, %v2912
    %v3082 = vmax.f32 %v2744, %v2913
    %v3083 = vmax.f32 %v2745, %v2914
    %v3084 = vmax.f32 %v2746, %v2915
    %v3085 = vmax.f32 %v2747, %v2916
    %v3086 = vmax.f32 %v2748, %v2917
    %v3087 = vmax.f32 %v2749, %v2918
    %v3088 = vmax.f32 %v2750, %v2919
    %v3089 = vmax.f32 %v2751, %v2920
    %v3090 = vmax.f32 %v2752, %v2921
    %v3091 = vmax.f32 %v2753, %v2922
    %v3092 = vmax.f32 %v2754, %v2923
    %v3093 = vmax.f32 %v2755, %v2924
    %v3094 = vmax.f32 %v2756, %v2925
    %v3095 = vmax.f32 %v2757, %v2926
    %v3096 = vmax.f32 %v2758, %v2927
    %v3097 = vmax.f32 %v2759, %v2928
    %v3098 = vmax.f32 %v2760, %v2929
    %v3099 = vmax.f32 %v2761, %v2930
    %v3100 = vmax.f32 %v2762, %v2931
    %v3101 = vmax.f32 %v2763, %v2932
    %v3102 = vmax.f32 %v2764, %v2933
    %v3103 = vmax.f32 %v2765, %v2934
    %v3104 = vmax.f32 %v2766, %v2935
    %v3105 = vmax.f32 %v2767, %v2936
    %v3106 = vmax.f32 %v2768, %v2937
    %v3107 = vmax.f32 %v2769, %v2938
    %v3108 = vmax.f32 %v2770, %v2939
    %v3109 = vmax.f32 %v2771, %v2940
    %v3110 = vmax.f32 %v2772, %v2941
    %v3111 = vmax.f32 %v2773, %v2942
    %v3112 = vmax.f32 %v2774, %v2943
    %v3113 = vmax.f32 %v2775, %v2944
    %v3114 = vmax.f32 %v2776, %v2945
    %v3115 = vmax.f32 %v2777, %v2946
    %v3116 = vmax.f32 %v2778, %v2947
    %v3117 = vmax.f32 %v2779, %v2948
    %v3118 = vmax.f32 %v2780, %v2949
    %v3119 = vmax.f32 %v2781, %v2950
    %v3120 = vmax.f32 %v2782, %v2951
    %v3121 = vmax.f32 %v2783, %v2952
    %v3122 = vmax.f32 %v2784, %v2953
    %v3123 = vmax.f32 %v2785, %v2954
    %v3124 = vmax.f32 %v2786, %v2955
    %v3125 = vmax.f32 %v2787, %v2956
    %v3126 = vmax.f32 %v2788, %v2957
    %v3127 = vmax.f32 %v2789, %v2958
    %v3128 = vmax.f32 %v2790, %v2959
    %v3129 = vmax.f32 %v2791, %v2960
    %v3130 = vmax.f32 %v2792, %v2961
    %v3131 = vmax.f32 %v2793, %v2962
    %v3132 = vmax.f32 %v2794, %v2963
    %v3133 = vld [vmem:[#allocation2] sm:$0xff]
    %v3134 = vld [vmem:[#allocation2 + $0x8] sm:$0xff]
    %v3135 = vld [vmem:[#allocation2 + $0x10] sm:$0xff]
    %v3136 = vld [vmem:[#allocation2 + $0x18] sm:$0xff]
    %v3137 = vld [vmem:[#allocation2 + $0x20] sm:$0xff]
    %v3138 = vld [vmem:[#allocation2 + $0x28] sm:$0xff]
    %v3139 = vld [vmem:[#allocation2 + $0x30] sm:$0xff]
    %v3140 = vld [vmem:[#allocation2 + $0x38] sm:$0xff]
    %v3141 = vld [vmem:[#allocation2 + $0x40] sm:$0xff]
    %v3142 = vld [vmem:[#allocation2 + $0x48] sm:$0xff]
    %v3143 = vld [vmem:[#allocation2 + $0x50] sm:$0xff]
    %v3144 = vld [vmem:[#allocation2 + $0x58] sm:$0xff]
    %v3145 = vld [vmem:[#allocation2 + $0x60] sm:$0xff]
    %v3146 = vld [vmem:[#allocation2 + $0x68] sm:$0xff]
    %v3147 = vld [vmem:[#allocation2 + $0x70] sm:$0xff]
    %v3148 = vld [vmem:[#allocation2 + $0x78] sm:$0xff]
    %v3149 = vld [vmem:[#allocation2 + $0x80] sm:$0xff]
    %v3150 = vld [vmem:[#allocation2 + $0x88] sm:$0xff]
    %v3151 = vld [vmem:[#allocation2 + $0x90] sm:$0xff]
    %v3152 = vld [vmem:[#allocation2 + $0x98] sm:$0xff]
    %v3153 = vld [vmem:[#allocation2 + $0xa0] sm:$0xff]
    %v3154 = vld [vmem:[#allocation2 + $0xa8] sm:$0xff]
    %v3155 = vld [vmem:[#allocation2 + $0xb0] sm:$0xff]
    %v3156 = vld [vmem:[#allocation2 + $0xb8] sm:$0xff]
    %v3157 = vld [vmem:[#allocation2 + $0xc0] sm:$0xff]
    %v3158 = vld [vmem:[#allocation2 + $0xc8] sm:$0xff]
    %v3159 = vld [vmem:[#allocation2 + $0xd0] sm:$0xff]
    %v3160 = vld [vmem:[#allocation2 + $0xd8] sm:$0xff]
    %v3161 = vld [vmem:[#allocation2 + $0xe0] sm:$0xff]
    %v3162 = vld [vmem:[#allocation2 + $0xe8] sm:$0xff]
    %v3163 = vld [vmem:[#allocation2 + $0xf0] sm:$0xff]
    %v3164 = vld [vmem:[#allocation2 + $0xf8] sm:$0xff]
    %v3165 = vld [vmem:[#allocation2 + $0x100] sm:$0xff]
    %v3166 = vld [vmem:[#allocation2 + $0x108] sm:$0xff]
    %v3167 = vld [vmem:[#allocation2 + $0x110] sm:$0xff]
    %v3168 = vld [vmem:[#allocation2 + $0x118] sm:$0xff]
    %v3169 = vld [vmem:[#allocation2 + $0x120] sm:$0xff]
    %v3170 = vld [vmem:[#allocation2 + $0x128] sm:$0xff]
    %v3171 = vld [vmem:[#allocation2 + $0x130] sm:$0xff]
    %v3172 = vld [vmem:[#allocation2 + $0x138] sm:$0xff]
    %v3173 = vld [vmem:[#allocation2 + $0x140] sm:$0xff]
    %v3174 = vld [vmem:[#allocation2 + $0x148] sm:$0xff]
    %v3175 = vld [vmem:[#allocation2 + $0x150] sm:$0xff]
    %v3176 = vld [vmem:[#allocation2 + $0x158] sm:$0xff]
    %v3177 = vld [vmem:[#allocation2 + $0x160] sm:$0xff]
    %v3178 = vld [vmem:[#allocation2 + $0x168] sm:$0xff]
    %v3179 = vld [vmem:[#allocation2 + $0x170] sm:$0xff]
    %v3180 = vld [vmem:[#allocation2 + $0x178] sm:$0xff]
    %v3181 = vld [vmem:[#allocation2 + $0x180] sm:$0xff]
    %v3182 = vld [vmem:[#allocation2 + $0x188] sm:$0xff]
    %v3183 = vld [vmem:[#allocation2 + $0x190] sm:$0xff]
    %v3184 = vld [vmem:[#allocation2 + $0x198] sm:$0xff]
    %v3185 = vld [vmem:[#allocation2 + $0x1a0] sm:$0xff]
    %v3186 = vld [vmem:[#allocation2 + $0x1a8] sm:$0xff]
    %v3187 = vld [vmem:[#allocation2 + $0x1b0] sm:$0xff]
    %v3188 = vld [vmem:[#allocation2 + $0x1b8] sm:$0xff]
    %v3189 = vld [vmem:[#allocation2 + $0x1c0] sm:$0xff]
    %v3190 = vld [vmem:[#allocation2 + $0x1c8] sm:$0xff]
    %v3191 = vld [vmem:[#allocation2 + $0x1d0] sm:$0xff]
    %v3192 = vld [vmem:[#allocation2 + $0x1d8] sm:$0xff]
    %v3193 = vld [vmem:[#allocation2 + $0x1e0] sm:$0xff]
    %v3194 = vld [vmem:[#allocation2 + $0x1e8] sm:$0xff]
    %v3195 = vld [vmem:[#allocation2 + $0x1f0] sm:$0xff]
    %v3196 = vld [vmem:[#allocation2 + $0x1f8] sm:$0xff]
    %v3197 = vld [vmem:[#allocation2 + $0x200] sm:$0xff]
    %v3198 = vld [vmem:[#allocation2 + $0x208] sm:$0xff]
    %v3199 = vld [vmem:[#allocation2 + $0x210] sm:$0xff]
    %v3200 = vld [vmem:[#allocation2 + $0x218] sm:$0xff]
    %v3201 = vld [vmem:[#allocation2 + $0x220] sm:$0xff]
    %v3202 = vld [vmem:[#allocation2 + $0x228] sm:$0xff]
    %v3203 = vld [vmem:[#allocation2 + $0x230] sm:$0xff]
    %v3204 = vld [vmem:[#allocation2 + $0x238] sm:$0xff]
    %v3205 = vld [vmem:[#allocation2 + $0x240] sm:$0xff]
    %v3206 = vld [vmem:[#allocation2 + $0x248] sm:$0xff]
    %v3207 = vld [vmem:[#allocation2 + $0x250] sm:$0xff]
    %v3208 = vld [vmem:[#allocation2 + $0x258] sm:$0xff]
    %v3209 = vld [vmem:[#allocation2 + $0x260] sm:$0xff]
    %v3210 = vld [vmem:[#allocation2 + $0x268] sm:$0xff]
    %v3211 = vld [vmem:[#allocation2 + $0x270] sm:$0xff]
    %v3212 = vld [vmem:[#allocation2 + $0x278] sm:$0xff]
    %v3213 = vld [vmem:[#allocation2 + $0x280] sm:$0xff]
    %v3214 = vld [vmem:[#allocation2 + $0x288] sm:$0xff]
    %v3215 = vld [vmem:[#allocation2 + $0x290] sm:$0xff]
    %v3216 = vld [vmem:[#allocation2 + $0x298] sm:$0xff]
    %v3217 = vld [vmem:[#allocation2 + $0x2a0] sm:$0xff]
    %v3218 = vld [vmem:[#allocation2 + $0x2a8] sm:$0xff]
    %v3219 = vld [vmem:[#allocation2 + $0x2b0] sm:$0xff]
    %v3220 = vld [vmem:[#allocation2 + $0x2b8] sm:$0xff]
    %v3221 = vld [vmem:[#allocation2 + $0x2c0] sm:$0xff]
    %v3222 = vld [vmem:[#allocation2 + $0x2c8] sm:$0xff]
    %v3223 = vld [vmem:[#allocation2 + $0x2d0] sm:$0xff]
    %v3224 = vld [vmem:[#allocation2 + $0x2d8] sm:$0xff]
    %v3225 = vld [vmem:[#allocation2 + $0x2e0] sm:$0xff]
    %v3226 = vld [vmem:[#allocation2 + $0x2e8] sm:$0xff]
    %v3227 = vld [vmem:[#allocation2 + $0x2f0] sm:$0xff]
    %v3228 = vld [vmem:[#allocation2 + $0x2f8] sm:$0xff]
    %v3229 = vld [vmem:[#allocation2 + $0x300] sm:$0xff]
    %v3230 = vld [vmem:[#allocation2 + $0x308] sm:$0xff]
    %v3231 = vld [vmem:[#allocation2 + $0x310] sm:$0xff]
    %v3232 = vld [vmem:[#allocation2 + $0x318] sm:$0xff]
    %v3233 = vld [vmem:[#allocation2 + $0x320] sm:$0xff]
    %v3234 = vld [vmem:[#allocation2 + $0x328] sm:$0xff]
    %v3235 = vld [vmem:[#allocation2 + $0x330] sm:$0xff]
    %v3236 = vld [vmem:[#allocation2 + $0x338] sm:$0xff]
    %v3237 = vld [vmem:[#allocation2 + $0x340] sm:$0xff]
    %v3238 = vld [vmem:[#allocation2 + $0x348] sm:$0xff]
    %v3239 = vld [vmem:[#allocation2 + $0x350] sm:$0xff]
    %v3240 = vld [vmem:[#allocation2 + $0x358] sm:$0xff]
    %v3241 = vld [vmem:[#allocation2 + $0x360] sm:$0xff]
    %v3242 = vld [vmem:[#allocation2 + $0x368] sm:$0xff]
    %v3243 = vld [vmem:[#allocation2 + $0x370] sm:$0xff]
    %v3244 = vld [vmem:[#allocation2 + $0x378] sm:$0xff]
    %v3245 = vld [vmem:[#allocation2 + $0x380] sm:$0xff]
    %v3246 = vld [vmem:[#allocation2 + $0x388] sm:$0xff]
    %v3247 = vld [vmem:[#allocation2 + $0x390] sm:$0xff]
    %v3248 = vld [vmem:[#allocation2 + $0x398] sm:$0xff]
    %v3249 = vld [vmem:[#allocation2 + $0x3a0] sm:$0xff]
    %v3250 = vld [vmem:[#allocation2 + $0x3a8] sm:$0xff]
    %v3251 = vld [vmem:[#allocation2 + $0x3b0] sm:$0xff]
    %v3252 = vld [vmem:[#allocation2 + $0x3b8] sm:$0xff]
    %v3253 = vld [vmem:[#allocation2 + $0x3c0] sm:$0xff]
    %v3254 = vld [vmem:[#allocation2 + $0x3c8] sm:$0xff]
    %v3255 = vld [vmem:[#allocation2 + $0x3d0] sm:$0xff]
    %v3256 = vld [vmem:[#allocation2 + $0x3d8] sm:$0xff]
    %v3257 = vld [vmem:[#allocation2 + $0x3e0] sm:$0xff]
    %v3258 = vld [vmem:[#allocation2 + $0x3e8] sm:$0xff]
    %v3259 = vld [vmem:[#allocation2 + $0x3f0] sm:$0xff]
    %v3260 = vld [vmem:[#allocation2 + $0x3f8] sm:$0xff]
    %v3261 = vld [vmem:[#allocation2 + $0x400] sm:$0xff]
    %v3262 = vld [vmem:[#allocation2 + $0x408] sm:$0xff]
    %v3263 = vld [vmem:[#allocation2 + $0x410] sm:$0xff]
    %v3264 = vld [vmem:[#allocation2 + $0x418] sm:$0xff]
    %v3265 = vld [vmem:[#allocation2 + $0x420] sm:$0xff]
    %v3266 = vld [vmem:[#allocation2 + $0x428] sm:$0xff]
    %v3267 = vld [vmem:[#allocation2 + $0x430] sm:$0xff]
    %v3268 = vld [vmem:[#allocation2 + $0x438] sm:$0xff]
    %v3269 = vld [vmem:[#allocation2 + $0x440] sm:$0xff]
    %v3270 = vld [vmem:[#allocation2 + $0x448] sm:$0xff]
    %v3271 = vld [vmem:[#allocation2 + $0x450] sm:$0xff]
    %v3272 = vld [vmem:[#allocation2 + $0x458] sm:$0xff]
    %v3273 = vld [vmem:[#allocation2 + $0x460] sm:$0xff]
    %v3274 = vld [vmem:[#allocation2 + $0x468] sm:$0xff]
    %v3275 = vld [vmem:[#allocation2 + $0x470] sm:$0xff]
    %v3276 = vld [vmem:[#allocation2 + $0x478] sm:$0xff]
    %v3277 = vld [vmem:[#allocation2 + $0x480] sm:$0xff]
    %v3278 = vld [vmem:[#allocation2 + $0x488] sm:$0xff]
    %v3279 = vld [vmem:[#allocation2 + $0x490] sm:$0xff]
    %v3280 = vld [vmem:[#allocation2 + $0x498] sm:$0xff]
    %v3281 = vld [vmem:[#allocation2 + $0x4a0] sm:$0xff]
    %v3282 = vld [vmem:[#allocation2 + $0x4a8] sm:$0xff]
    %v3283 = vld [vmem:[#allocation2 + $0x4b0] sm:$0xff]
    %v3284 = vld [vmem:[#allocation2 + $0x4b8] sm:$0xff]
    %v3285 = vld [vmem:[#allocation2 + $0x4c0] sm:$0xff]
    %v3286 = vld [vmem:[#allocation2 + $0x4c8] sm:$0xff]
    %v3287 = vld [vmem:[#allocation2 + $0x4d0] sm:$0xff]
    %v3288 = vld [vmem:[#allocation2 + $0x4d8] sm:$0xff]
    %v3289 = vld [vmem:[#allocation2 + $0x4e0] sm:$0xff]
    %v3290 = vld [vmem:[#allocation2 + $0x4e8] sm:$0xff]
    %v3291 = vld [vmem:[#allocation2 + $0x4f0] sm:$0xff]
    %v3292 = vld [vmem:[#allocation2 + $0x4f8] sm:$0xff]
    %v3293 = vld [vmem:[#allocation2 + $0x500] sm:$0xff]
    %v3294 = vld [vmem:[#allocation2 + $0x508] sm:$0xff]
    %v3295 = vld [vmem:[#allocation2 + $0x510] sm:$0xff]
    %v3296 = vld [vmem:[#allocation2 + $0x518] sm:$0xff]
    %v3297 = vld [vmem:[#allocation2 + $0x520] sm:$0xff]
    %v3298 = vld [vmem:[#allocation2 + $0x528] sm:$0xff]
    %v3299 = vld [vmem:[#allocation2 + $0x530] sm:$0xff]
    %v3300 = vld [vmem:[#allocation2 + $0x538] sm:$0xff]
    %v3301 = vld [vmem:[#allocation2 + $0x540] sm:$0xff]
    %v3302 = vld [vmem:[#allocation2 + $0x548] sm:$0xff]
    %v3303 = vld [vmem:[#allocation2 + $0x550] sm:$0xff]
    %v3304 = vld [vmem:[#allocation2 + $0x558] sm:$0xff]
    %v3305 = vld [vmem:[#allocation2 + $0x560] sm:$0xff]
    %v3306 = vld [vmem:[#allocation2 + $0x568] sm:$0xff]
    %v3307 = vld [vmem:[#allocation2 + $0x570] sm:$0xff]
    %v3308 = vld [vmem:[#allocation2 + $0x578] sm:$0xff]
    %v3309 = vld [vmem:[#allocation2 + $0x580] sm:$0xff]
    %v3310 = vld [vmem:[#allocation2 + $0x588] sm:$0xff]
    %v3311 = vld [vmem:[#allocation2 + $0x590] sm:$0xff]
    %v3312 = vld [vmem:[#allocation2 + $0x598] sm:$0xff]
    %v3313 = vld [vmem:[#allocation2 + $0x5a0] sm:$0xff]
    %v3314 = vld [vmem:[#allocation2 + $0x5a8] sm:$0xff]
    %v3315 = vld [vmem:[#allocation2 + $0x5b0] sm:$0xff]
    %v3316 = vld [vmem:[#allocation2 + $0x5b8] sm:$0xff]
    %v3317 = vld [vmem:[#allocation2 + $0x5c0] sm:$0xff]
    %v3318 = vld [vmem:[#allocation2 + $0x5c8] sm:$0xff]
    %v3319 = vld [vmem:[#allocation2 + $0x5d0] sm:$0xff]
    %v3320 = vld [vmem:[#allocation2 + $0x5d8] sm:$0xff]
    %v3321 = vld [vmem:[#allocation2 + $0x5e0] sm:$0xff]
    %v3322 = vld [vmem:[#allocation2 + $0x5e8] sm:$0xff]
    %v3323 = vld [vmem:[#allocation2 + $0x5f0] sm:$0xff]
    %v3324 = vld [vmem:[#allocation2 + $0x5f8] sm:$0xff]
    %v3325 = vld [vmem:[#allocation2 + $0x600] sm:$0xff]
    %v3326 = vld [vmem:[#allocation2 + $0x608] sm:$0xff]
    %v3327 = vld [vmem:[#allocation2 + $0x610] sm:$0xff]
    %v3328 = vld [vmem:[#allocation2 + $0x618] sm:$0xff]
    %v3329 = vld [vmem:[#allocation2 + $0x620] sm:$0xff]
    %v3330 = vld [vmem:[#allocation2 + $0x628] sm:$0xff]
    %v3331 = vld [vmem:[#allocation2 + $0x630] sm:$0xff]
    %v3332 = vld [vmem:[#allocation2 + $0x638] sm:$0xff]
    %v3333 = vld [vmem:[#allocation2 + $0x640] sm:$0xff]
    %v3334 = vld [vmem:[#allocation2 + $0x648] sm:$0xff]
    %v3335 = vld [vmem:[#allocation2 + $0x650] sm:$0xff]
    %v3336 = vld [vmem:[#allocation2 + $0x658] sm:$0xff]
    %v3337 = vld [vmem:[#allocation2 + $0x660] sm:$0xff]
    %v3338 = vld [vmem:[#allocation2 + $0x668] sm:$0xff]
    %v3339 = vld [vmem:[#allocation2 + $0x670] sm:$0xff]
    %v3340 = vld [vmem:[#allocation2 + $0x678] sm:$0xff]
    %v3341 = vld [vmem:[%s4] sm:$0x1]
    %v3343 = vlaneseq
    %v3344 = vshrl.u32 %v3343, 7
    %v3345 = vsub.s32 0, %v3344
    %v3346 = vrot.slane %v3341, %v3345
    %3348 = vmatprep.subr.mxu0 0.0
    %3349 = vmatpush1.msra.mxu0 %v3133
    %3350 = vmatprep.subr.mxu0 0.0
    %3351 = vmatpush1.msra.mxu0 %v3134
    %3352 = vmatprep.subr.mxu0 0.0
    %3353 = vmatpush1.msra.mxu0 %v3135
    %3354 = vmatprep.subr.mxu0 0.0
    %3355 = vmatpush1.msra.mxu0 %v3136
    %3356 = vmatprep.subr.mxu0 0.0
    %3357 = vmatpush1.msra.mxu0 %v3137
    %3358 = vmatprep.subr.mxu0 0.0
    %3359 = vmatpush1.msra.mxu0 %v3138
    %3360 = vmatprep.subr.mxu0 0.0
    %3361 = vmatpush1.msra.mxu0 %v3139
    %3362 = vmatprep.subr.mxu0 0.0
    %3363 = vmatpush1.msra.mxu0 %v3140
    %3364 = vmatprep.subr.mxu0 0.0
    %3365 = vmatpush1.msra.mxu0 %v3141
    %3366 = vmatprep.subr.mxu0 0.0
    %3367 = vmatpush1.msra.mxu0 %v3142
    %3368 = vmatprep.subr.mxu0 0.0
    %3369 = vmatpush1.msra.mxu0 %v3143
    %3370 = vmatprep.subr.mxu0 0.0
    %3371 = vmatpush1.msra.mxu0 %v3144
    %3372 = vmatprep.subr.mxu0 0.0
    %3373 = vmatpush1.msra.mxu0 %v3145
    %3374 = vmatprep.subr.mxu0 0.0
    %3375 = vmatpush1.msra.mxu0 %v3146
    %3376 = vmatprep.subr.mxu0 0.0
    %3377 = vmatpush1.msra.mxu0 %v3147
    %3378 = vmatprep.subr.mxu0 0.0
    %3379 = vmatpush1.msra.mxu0 %v3148
    %3380 = vmatprep.subr.mxu0 0.0
    %3381 = vmatpush1.msra.mxu0 %v3149
    %3382 = vmatprep.subr.mxu0 0.0
    %3383 = vmatpush1.msra.mxu0 %v3150
    %3384 = vmatprep.subr.mxu0 0.0
    %3385 = vmatpush1.msra.mxu0 %v3151
    %3386 = vmatprep.subr.mxu0 0.0
    %3387 = vmatpush1.msra.mxu0 %v3152
    %3388 = vmatprep.subr.mxu0 0.0
    %3389 = vmatpush1.msra.mxu0 %v3153
    %3390 = vmatprep.subr.mxu0 0.0
    %3391 = vmatpush1.msra.mxu0 %v3154
    %3392 = vmatprep.subr.mxu0 0.0
    %3393 = vmatpush1.msra.mxu0 %v3155
    %3394 = vmatprep.subr.mxu0 0.0
    %3395 = vmatpush1.msra.mxu0 %v3156
    %3396 = vmatprep.subr.mxu0 0.0
    %3397 = vmatpush1.msra.mxu0 %v3157
    %3398 = vmatprep.subr.mxu0 0.0
    %3399 = vmatpush1.msra.mxu0 %v3158
    %3400 = vmatprep.subr.mxu0 0.0
    %3401 = vmatpush1.msra.mxu0 %v3159
    %3402 = vmatprep.subr.mxu0 0.0
    %3403 = vmatpush1.msra.mxu0 %v3160
    %3404 = vmatprep.subr.mxu0 0.0
    %3405 = vmatpush1.msra.mxu0 %v3161
    %3406 = vmatprep.subr.mxu0 0.0
    %3407 = vmatpush1.msra.mxu0 %v3162
    %3408 = vmatprep.subr.mxu0 0.0
    %3409 = vmatpush1.msra.mxu0 %v3163
    %3410 = vmatprep.subr.mxu0 0.0
    %3411 = vmatpush1.msra.mxu0 %v3164
    %3412 = vmatprep.mubr.f32.mxu0 %v2965
    %3413 = vmatmul.mubr.f32.gmra.mrb[0].mxu0 %v2964
    %v3414 = vpop.f32.mrb[0].mxu0
    %v3415 = vadd.f32 %v3346, %v3414
    %v3416 = vpop.f32.mrb[0].mxu0
    %3417 = vmatprep.mubr.f32.mxu0 %v2978
    %3418 = vmatmul.mubr.f32.gmra.mrb[0].mxu0 %v2977
    %v3419 = vpop.f32.mrb[0].mxu0
    %v3420 = vadd.f32 %v3346, %v3419
    %v3421 = vpop.f32.mrb[0].mxu0
    %3422 = vmatprep.mubr.f32.mxu0 %v2991
    %3423 = vmatmul.mubr.f32.gmra.mrb[0].mxu0 %v2990
    %v3424 = vpop.f32.mrb[0].mxu0
    %v3425 = vadd.f32 %v3346, %v3424
    %v3426 = vpop.f32.mrb[0].mxu0
    %3427 = vmatprep.mubr.f32.mxu0 %v3004
    %3428 = vmatmul.mubr.f32.gmra.mrb[0].mxu0 %v3003
    %v3429 = vpop.f32.mrb[0].mxu0
    %v3430 = vadd.f32 %v3346, %v3429
    %v3431 = vpop.f32.mrb[0].mxu0
    %3432 = vmatprep.mubr.f32.mxu0 %v3017
    %3433 = vmatmul.mubr.f32.gmra.mrb[0].mxu0 %v3016
    %v3434 = vpop.f32.mrb[0].mxu0
    %v3435 = vadd.f32 %v3346, %v3434
    %v3436 = vpop.f32.mrb[0].mxu0
    %3437 = vmatprep.mubr.f32.mxu0 %v3030
    %3438 = vmatmul.mubr.f32.gmra.mrb[0].mxu0 %v3029
    %v3439 = vpop.f32.mrb[0].mxu0
    %v3440 = vadd.f32 %v3346, %v3439
    %v3441 = vpop.f32.mrb[0].mxu0
    %3442 = vmatprep.mubr.f32.mxu0 %v3043
    %3443 = vmatmul.mubr.f32.gmra.mrb[0].mxu0 %v3042
    %v3444 = vpop.f32.mrb[0].mxu0
    %v3445 = vadd.f32 %v3346, %v3444
    %v3446 = vpop.f32.mrb[0].mxu0
    %3447 = vmatprep.mubr.f32.mxu0 %v3056
    %3448 = vmatmul.mubr.f32.gmra.mrb[0].mxu0 %v3055
    %v3449 = vpop.f32.mrb[0].mxu0
    %v3450 = vadd.f32 %v3346, %v3449
    %v3451 = vpop.f32.mrb[0].mxu0
    %3452 = vmatprep.mubr.f32.mxu0 %v3069
    %3453 = vmatmul.mubr.f32.gmra.mrb[0].mxu0 %v3068
    %v3454 = vpop.f32.mrb[0].mxu0
    %v3455 = vadd.f32 %v3346, %v3454
    %v3456 = vpop.f32.mrb[0].mxu0
    %3457 = vmatprep.mubr.f32.mxu0 %v3082
    %3458 = vmatmul.mubr.f32.gmra.mrb[0].mxu0 %v3081
    %v3459 = vpop.f32.mrb[0].mxu0
    %v3460 = vadd.f32 %v3346, %v3459
    %v3461 = vpop.f32.mrb[0].mxu0
    %3462 = vmatprep.mubr.f32.mxu0 %v3095
    %3463 = vmatmul.mubr.f32.gmra.mrb[0].mxu0 %v3094
    %v3464 = vpop.f32.mrb[0].mxu0
    %v3465 = vadd.f32 %v3346, %v3464
    %v3466 = vpop.f32.mrb[0].mxu0
    %3467 = vmatprep.mubr.f32.mxu0 %v3108
    %3468 = vmatmul.mubr.f32.gmra.mrb[0].mxu0 %v3107
    %v3469 = vpop.f32.mrb[0].mxu0
    %v3470 = vadd.f32 %v3346, %v3469
    %v3471 = vpop.f32.mrb[0].mxu0
    %3472 = vmatprep.mubr.f32.mxu0 %v3121
    %3473 = vmatmul.mubr.f32.gmra.mrb[0].mxu0 %v3120
    %v3474 = vpop.f32.mrb[0].mxu0
    %v3475 = vadd.f32 %v3346, %v3474
    %v3476 = vpop.f32.mrb[0].mxu0
    %3477 = vdwg.mxu0
    %3478 = vmatprep.subr.mxu0 0.0
    %3479 = vmatpush1.msra.mxu0 %v3165
    %3480 = vmatprep.subr.mxu0 0.0
    %3481 = vmatpush1.msra.mxu0 %v3166
    %3482 = vmatprep.subr.mxu0 0.0
    %3483 = vmatpush1.msra.mxu0 %v3167
    %3484 = vmatprep.subr.mxu0 0.0
    %3485 = vmatpush1.msra.mxu0 %v3168
    %3486 = vmatprep.subr.mxu0 0.0
    %3487 = vmatpush1.msra.mxu0 %v3169
    %3488 = vmatprep.subr.mxu0 0.0
    %3489 = vmatpush1.msra.mxu0 %v3170
    %3490 = vmatprep.subr.mxu0 0.0
    %3491 = vmatpush1.msra.mxu0 %v3171
    %3492 = vmatprep.subr.mxu0 0.0
    %3493 = vmatpush1.msra.mxu0 %v3172
    %3494 = vmatprep.subr.mxu0 0.0
    %3495 = vmatpush1.msra.mxu0 %v3173
    %3496 = vmatprep.subr.mxu0 0.0
    %3497 = vmatpush1.msra.mxu0 %v3174
    %3498 = vmatprep.subr.mxu0 0.0
    %3499 = vmatpush1.msra.mxu0 %v3175
    %3500 = vmatprep.subr.mxu0 0.0
    %3501 = vmatpush1.msra.mxu0 %v3176
    %3502 = vmatprep.subr.mxu0 0.0
    %3503 = vmatpush1.msra.mxu0 %v3177
    %3504 = vmatprep.subr.mxu0 0.0
    %3505 = vmatpush1.msra.mxu0 %v3178
    %3506 = vmatprep.subr.mxu0 0.0
    %3507 = vmatpush1.msra.mxu0 %v3179
    %3508 = vmatprep.subr.mxu0 0.0
    %3509 = vmatpush1.msra.mxu0 %v3180
    %3510 = vmatprep.subr.mxu0 0.0
    %3511 = vmatpush1.msra.mxu0 %v3181
    %3512 = vmatprep.subr.mxu0 0.0
    %3513 = vmatpush1.msra.mxu0 %v3182
    %3514 = vmatprep.subr.mxu0 0.0
    %3515 = vmatpush1.msra.mxu0 %v3183
    %3516 = vmatprep.subr.mxu0 0.0
    %3517 = vmatpush1.msra.mxu0 %v3184
    %3518 = vmatprep.subr.mxu0 0.0
    %3519 = vmatpush1.msra.mxu0 %v3185
    %3520 = vmatprep.subr.mxu0 0.0
    %3521 = vmatpush1.msra.mxu0 %v3186
    %3522 = vmatprep.subr.mxu0 0.0
    %3523 = vmatpush1.msra.mxu0 %v3187
    %3524 = vmatprep.subr.mxu0 0.0
    %3525 = vmatpush1.msra.mxu0 %v3188
    %3526 = vmatprep.subr.mxu0 0.0
    %3527 = vmatpush1.msra.mxu0 %v3189
    %3528 = vmatprep.subr.mxu0 0.0
    %3529 = vmatpush1.msra.mxu0 %v3190
    %3530 = vmatprep.subr.mxu0 0.0
    %3531 = vmatpush1.msra.mxu0 %v3191
    %3532 = vmatprep.subr.mxu0 0.0
    %3533 = vmatpush1.msra.mxu0 %v3192
    %3534 = vmatprep.subr.mxu0 0.0
    %3535 = vmatpush1.msra.mxu0 %v3193
    %3536 = vmatprep.subr.mxu0 0.0
    %3537 = vmatpush1.msra.mxu0 %v3194
    %3538 = vmatprep.subr.mxu0 0.0
    %3539 = vmatpush1.msra.mxu0 %v3195
    %3540 = vmatprep.subr.mxu0 0.0
    %3541 = vmatpush1.msra.mxu0 %v3196
    %3542 = vmatprep.mubr.f32.mxu0 %v2967
    %3543 = vmatmul.mubr.f32.gmra.mrb[0].mxu0 %v2966
    %v3544 = vpop.f32.mrb[0].mxu0
    %v3545 = vadd.f32 %v3415, %v3544
    %v3546 = vpop.f32.mrb[0].mxu0
    %3547 = vmatprep.mubr.f32.mxu0 %v2980
    %3548 = vmatmul.mubr.f32.gmra.mrb[0].mxu0 %v2979
    %v3549 = vpop.f32.mrb[0].mxu0
    %v3550 = vadd.f32 %v3420, %v3549
    %v3551 = vpop.f32.mrb[0].mxu0
    %3552 = vmatprep.mubr.f32.mxu0 %v2993
    %3553 = vmatmul.mubr.f32.gmra.mrb[0].mxu0 %v2992
    %v3554 = vpop.f32.mrb[0].mxu0
    %v3555 = vadd.f32 %v3425, %v3554
    %v3556 = vpop.f32.mrb[0].mxu0
    %3557 = vmatprep.mubr.f32.mxu0 %v3006
    %3558 = vmatmul.mubr.f32.gmra.mrb[0].mxu0 %v3005
    %v3559 = vpop.f32.mrb[0].mxu0
    %v3560 = vadd.f32 %v3430, %v3559
    %v3561 = vpop.f32.mrb[0].mxu0
    %3562 = vmatprep.mubr.f32.mxu0 %v3019
    %3563 = vmatmul.mubr.f32.gmra.mrb[0].mxu0 %v3018
    %v3564 = vpop.f32.mrb[0].mxu0
    %v3565 = vadd.f32 %v3435, %v3564
    %v3566 = vpop.f32.mrb[0].mxu0
    %3567 = vmatprep.mubr.f32.mxu0 %v3032
    %3568 = vmatmul.mubr.f32.gmra.mrb[0].mxu0 %v3031
    %v3569 = vpop.f32.mrb[0].mxu0
    %v3570 = vadd.f32 %v3440, %v3569
    %v3571 = vpop.f32.mrb[0].mxu0
    %3572 = vmatprep.mubr.f32.mxu0 %v3045
    %3573 = vmatmul.mubr.f32.gmra.mrb[0].mxu0 %v3044
    %v3574 = vpop.f32.mrb[0].mxu0
    %v3575 = vadd.f32 %v3445, %v3574
    %v3576 = vpop.f32.mrb[0].mxu0
    %3577 = vmatprep.mubr.f32.mxu0 %v3058
    %3578 = vmatmul.mubr.f32.gmra.mrb[0].mxu0 %v3057
    %v3579 = vpop.f32.mrb[0].mxu0
    %v3580 = vadd.f32 %v3450, %v3579
    %v3581 = vpop.f32.mrb[0].mxu0
    %3582 = vmatprep.mubr.f32.mxu0 %v3071
    %3583 = vmatmul.mubr.f32.gmra.mrb[0].mxu0 %v3070
    %v3584 = vpop.f32.mrb[0].mxu0
    %v3585 = vadd.f32 %v3455, %v3584
    %v3586 = vpop.f32.mrb[0].mxu0
    %3587 = vmatprep.mubr.f32.mxu0 %v3084
    %3588 = vmatmul.mubr.f32.gmra.mrb[0].mxu0 %v3083
    %v3589 = vpop.f32.mrb[0].mxu0
    %v3590 = vadd.f32 %v3460, %v3589
    %v3591 = vpop.f32.mrb[0].mxu0
    %3592 = vmatprep.mubr.f32.mxu0 %v3097
    %3593 = vmatmul.mubr.f32.gmra.mrb[0].mxu0 %v3096
    %v3594 = vpop.f32.mrb[0].mxu0
    %v3595 = vadd.f32 %v3465, %v3594
    %v3596 = vpop.f32.mrb[0].mxu0
    %3597 = vmatprep.mubr.f32.mxu0 %v3110
    %3598 = vmatmul.mubr.f32.gmra.mrb[0].mxu0 %v3109
    %v3599 = vpop.f32.mrb[0].mxu0
    %v3600 = vadd.f32 %v3470, %v3599
    %v3601 = vpop.f32.mrb[0].mxu0
    %3602 = vmatprep.mubr.f32.mxu0 %v3123
    %3603 = vmatmul.mubr.f32.gmra.mrb[0].mxu0 %v3122
    %v3604 = vpop.f32.mrb[0].mxu0
    %v3605 = vadd.f32 %v3475, %v3604
    %v3606 = vpop.f32.mrb[0].mxu0
    %3607 = vdwg.mxu0
    %3608 = vmatprep.subr.mxu0 0.0
    %3609 = vmatpush1.msra.mxu0 %v3197
    %3610 = vmatprep.subr.mxu0 0.0
    %3611 = vmatpush1.msra.mxu0 %v3198
    %3612 = vmatprep.subr.mxu0 0.0
    %3613 = vmatpush1.msra.mxu0 %v3199
    %3614 = vmatprep.subr.mxu0 0.0
    %3615 = vmatpush1.msra.mxu0 %v3200
    %3616 = vmatprep.subr.mxu0 0.0
    %3617 = vmatpush1.msra.mxu0 %v3201
    %3618 = vmatprep.subr.mxu0 0.0
    %3619 = vmatpush1.msra.mxu0 %v3202
    %3620 = vmatprep.subr.mxu0 0.0
    %3621 = vmatpush1.msra.mxu0 %v3203
    %3622 = vmatprep.subr.mxu0 0.0
    %3623 = vmatpush1.msra.mxu0 %v3204
    %3624 = vmatprep.subr.mxu0 0.0
    %3625 = vmatpush1.msra.mxu0 %v3205
    %3626 = vmatprep.subr.mxu0 0.0
    %3627 = vmatpush1.msra.mxu0 %v3206
    %3628 = vmatprep.subr.mxu0 0.0
    %3629 = vmatpush1.msra.mxu0 %v3207
    %3630 = vmatprep.subr.mxu0 0.0
    %3631 = vmatpush1.msra.mxu0 %v3208
    %3632 = vmatprep.subr.mxu0 0.0
    %3633 = vmatpush1.msra.mxu0 %v3209
    %3634 = vmatprep.subr.mxu0 0.0
    %3635 = vmatpush1.msra.mxu0 %v3210
    %3636 = vmatprep.subr.mxu0 0.0
    %3637 = vmatpush1.msra.mxu0 %v3211
    %3638 = vmatprep.subr.mxu0 0.0
    %3639 = vmatpush1.msra.mxu0 %v3212
    %3640 = vmatprep.subr.mxu0 0.0
    %3641 = vmatpush1.msra.mxu0 %v3213
    %3642 = vmatprep.subr.mxu0 0.0
    %3643 = vmatpush1.msra.mxu0 %v3214
    %3644 = vmatprep.subr.mxu0 0.0
    %3645 = vmatpush1.msra.mxu0 %v3215
    %3646 = vmatprep.subr.mxu0 0.0
    %3647 = vmatpush1.msra.mxu0 %v3216
    %3648 = vmatprep.subr.mxu0 0.0
    %3649 = vmatpush1.msra.mxu0 %v3217
    %3650 = vmatprep.subr.mxu0 0.0
    %3651 = vmatpush1.msra.mxu0 %v3218
    %3652 = vmatprep.subr.mxu0 0.0
    %3653 = vmatpush1.msra.mxu0 %v3219
    %3654 = vmatprep.subr.mxu0 0.0
    %3655 = vmatpush1.msra.mxu0 %v3220
    %3656 = vmatprep.subr.mxu0 0.0
    %3657 = vmatpush1.msra.mxu0 %v3221
    %3658 = vmatprep.subr.mxu0 0.0
    %3659 = vmatpush1.msra.mxu0 %v3222
    %3660 = vmatprep.subr.mxu0 0.0
    %3661 = vmatpush1.msra.mxu0 %v3223
    %3662 = vmatprep.subr.mxu0 0.0
    %3663 = vmatpush1.msra.mxu0 %v3224
    %3664 = vmatprep.subr.mxu0 0.0
    %3665 = vmatpush1.msra.mxu0 %v3225
    %3666 = vmatprep.subr.mxu0 0.0
    %3667 = vmatpush1.msra.mxu0 %v3226
    %3668 = vmatprep.subr.mxu0 0.0
    %3669 = vmatpush1.msra.mxu0 %v3227
    %3670 = vmatprep.subr.mxu0 0.0
    %3671 = vmatpush1.msra.mxu0 %v3228
    %3672 = vmatprep.mubr.f32.mxu0 %v2969
    %3673 = vmatmul.mubr.f32.gmra.mrb[0].mxu0 %v2968
    %v3674 = vpop.f32.mrb[0].mxu0
    %v3675 = vadd.f32 %v3545, %v3674
    %v3676 = vpop.f32.mrb[0].mxu0
    %3677 = vmatprep.mubr.f32.mxu0 %v2982
    %3678 = vmatmul.mubr.f32.gmra.mrb[0].mxu0 %v2981
    %v3679 = vpop.f32.mrb[0].mxu0
    %v3680 = vadd.f32 %v3550, %v3679
    %v3681 = vpop.f32.mrb[0].mxu0
    %3682 = vmatprep.mubr.f32.mxu0 %v2995
    %3683 = vmatmul.mubr.f32.gmra.mrb[0].mxu0 %v2994
    %v3684 = vpop.f32.mrb[0].mxu0
    %v3685 = vadd.f32 %v3555, %v3684
    %v3686 = vpop.f32.mrb[0].mxu0
    %3687 = vmatprep.mubr.f32.mxu0 %v3008
    %3688 = vmatmul.mubr.f32.gmra.mrb[0].mxu0 %v3007
    %v3689 = vpop.f32.mrb[0].mxu0
    %v3690 = vadd.f32 %v3560, %v3689
    %v3691 = vpop.f32.mrb[0].mxu0
    %3692 = vmatprep.mubr.f32.mxu0 %v3021
    %3693 = vmatmul.mubr.f32.gmra.mrb[0].mxu0 %v3020
    %v3694 = vpop.f32.mrb[0].mxu0
    %v3695 = vadd.f32 %v3565, %v3694
    %v3696 = vpop.f32.mrb[0].mxu0
    %3697 = vmatprep.mubr.f32.mxu0 %v3034
    %3698 = vmatmul.mubr.f32.gmra.mrb[0].mxu0 %v3033
    %v3699 = vpop.f32.mrb[0].mxu0
    %v3700 = vadd.f32 %v3570, %v3699
    %v3701 = vpop.f32.mrb[0].mxu0
    %3702 = vmatprep.mubr.f32.mxu0 %v3047
    %3703 = vmatmul.mubr.f32.gmra.mrb[0].mxu0 %v3046
    %v3704 = vpop.f32.mrb[0].mxu0
    %v3705 = vadd.f32 %v3575, %v3704
    %v3706 = vpop.f32.mrb[0].mxu0
    %3707 = vmatprep.mubr.f32.mxu0 %v3060
    %3708 = vmatmul.mubr.f32.gmra.mrb[0].mxu0 %v3059
    %v3709 = vpop.f32.mrb[0].mxu0
    %v3710 = vadd.f32 %v3580, %v3709
    %v3711 = vpop.f32.mrb[0].mxu0
    %3712 = vmatprep.mubr.f32.mxu0 %v3073
    %3713 = vmatmul.mubr.f32.gmra.mrb[0].mxu0 %v3072
    %v3714 = vpop.f32.mrb[0].mxu0
    %v3715 = vadd.f32 %v3585, %v3714
    %v3716 = vpop.f32.mrb[0].mxu0
    %3717 = vmatprep.mubr.f32.mxu0 %v3086
    %3718 = vmatmul.mubr.f32.gmra.mrb[0].mxu0 %v3085
    %v3719 = vpop.f32.mrb[0].mxu0
    %v3720 = vadd.f32 %v3590, %v3719
    %v3721 = vpop.f32.mrb[0].mxu0
    %3722 = vmatprep.mubr.f32.mxu0 %v3099
    %3723 = vmatmul.mubr.f32.gmra.mrb[0].mxu0 %v3098
    %v3724 = vpop.f32.mrb[0].mxu0
    %v3725 = vadd.f32 %v3595, %v3724
    %v3726 = vpop.f32.mrb[0].mxu0
    %3727 = vmatprep.mubr.f32.mxu0 %v3112
    %3728 = vmatmul.mubr.f32.gmra.mrb[0].mxu0 %v3111
    %v3729 = vpop.f32.mrb[0].mxu0
    %v3730 = vadd.f32 %v3600, %v3729
    %v3731 = vpop.f32.mrb[0].mxu0
    %3732 = vmatprep.mubr.f32.mxu0 %v3125
    %3733 = vmatmul.mubr.f32.gmra.mrb[0].mxu0 %v3124
    %v3734 = vpop.f32.mrb[0].mxu0
    %v3735 = vadd.f32 %v3605, %v3734
    %v3736 = vpop.f32.mrb[0].mxu0
    %3737 = vdwg.mxu0
    %3738 = vmatprep.subr.mxu0 0.0
    %3739 = vmatpush1.msra.mxu0 %v3229
    %3740 = vmatprep.subr.mxu0 0.0
    %3741 = vmatpush1.msra.mxu0 %v3230
    %3742 = vmatprep.subr.mxu0 0.0
    %3743 = vmatpush1.msra.mxu0 %v3231
    %3744 = vmatprep.subr.mxu0 0.0
    %3745 = vmatpush1.msra.mxu0 %v3232
    %3746 = vmatprep.subr.mxu0 0.0
    %3747 = vmatpush1.msra.mxu0 %v3233
    %3748 = vmatprep.subr.mxu0 0.0
    %3749 = vmatpush1.msra.mxu0 %v3234
    %3750 = vmatprep.subr.mxu0 0.0
    %3751 = vmatpush1.msra.mxu0 %v3235
    %3752 = vmatprep.subr.mxu0 0.0
    %3753 = vmatpush1.msra.mxu0 %v3236
    %3754 = vmatprep.subr.mxu0 0.0
    %3755 = vmatpush1.msra.mxu0 %v3237
    %3756 = vmatprep.subr.mxu0 0.0
    %3757 = vmatpush1.msra.mxu0 %v3238
    %3758 = vmatprep.subr.mxu0 0.0
    %3759 = vmatpush1.msra.mxu0 %v3239
    %3760 = vmatprep.subr.mxu0 0.0
    %3761 = vmatpush1.msra.mxu0 %v3240
    %3762 = vmatprep.subr.mxu0 0.0
    %3763 = vmatpush1.msra.mxu0 %v3241
    %3764 = vmatprep.subr.mxu0 0.0
    %3765 = vmatpush1.msra.mxu0 %v3242
    %3766 = vmatprep.subr.mxu0 0.0
    %3767 = vmatpush1.msra.mxu0 %v3243
    %3768 = vmatprep.subr.mxu0 0.0
    %3769 = vmatpush1.msra.mxu0 %v3244
    %3770 = vmatprep.subr.mxu0 0.0
    %3771 = vmatpush1.msra.mxu0 %v3245
    %3772 = vmatprep.subr.mxu0 0.0
    %3773 = vmatpush1.msra.mxu0 %v3246
    %3774 = vmatprep.subr.mxu0 0.0
    %3775 = vmatpush1.msra.mxu0 %v3247
    %3776 = vmatprep.subr.mxu0 0.0
    %3777 = vmatpush1.msra.mxu0 %v3248
    %3778 = vmatprep.subr.mxu0 0.0
    %3779 = vmatpush1.msra.mxu0 %v3249
    %3780 = vmatprep.subr.mxu0 0.0
    %3781 = vmatpush1.msra.mxu0 %v3250
    %3782 = vmatprep.subr.mxu0 0.0
    %3783 = vmatpush1.msra.mxu0 %v3251
    %3784 = vmatprep.subr.mxu0 0.0
    %3785 = vmatpush1.msra.mxu0 %v3252
    %3786 = vmatprep.subr.mxu0 0.0
    %3787 = vmatpush1.msra.mxu0 %v3253
    %3788 = vmatprep.subr.mxu0 0.0
    %3789 = vmatpush1.msra.mxu0 %v3254
    %3790 = vmatprep.subr.mxu0 0.0
    %3791 = vmatpush1.msra.mxu0 %v3255
    %3792 = vmatprep.subr.mxu0 0.0
    %3793 = vmatpush1.msra.mxu0 %v3256
    %3794 = vmatprep.subr.mxu0 0.0
    %3795 = vmatpush1.msra.mxu0 %v3257
    %3796 = vmatprep.subr.mxu0 0.0
    %3797 = vmatpush1.msra.mxu0 %v3258
    %3798 = vmatprep.subr.mxu0 0.0
    %3799 = vmatpush1.msra.mxu0 %v3259
    %3800 = vmatprep.subr.mxu0 0.0
    %3801 = vmatpush1.msra.mxu0 %v3260
    %3802 = vmatprep.mubr.f32.mxu0 %v2971
    %3803 = vmatmul.mubr.f32.gmra.mrb[0].mxu0 %v2970
    %v3804 = vpop.f32.mrb[0].mxu0
    %v3805 = vadd.f32 %v3675, %v3804
    %v3806 = vpop.f32.mrb[0].mxu0
    %3807 = vmatprep.mubr.f32.mxu0 %v2984
    %3808 = vmatmul.mubr.f32.gmra.mrb[0].mxu0 %v2983
    %v3809 = vpop.f32.mrb[0].mxu0
    %v3810 = vadd.f32 %v3680, %v3809
    %v3811 = vpop.f32.mrb[0].mxu0
    %3812 = vmatprep.mubr.f32.mxu0 %v2997
    %3813 = vmatmul.mubr.f32.gmra.mrb[0].mxu0 %v2996
    %v3814 = vpop.f32.mrb[0].mxu0
    %v3815 = vadd.f32 %v3685, %v3814
    %v3816 = vpop.f32.mrb[0].mxu0
    %3817 = vmatprep.mubr.f32.mxu0 %v3010
    %3818 = vmatmul.mubr.f32.gmra.mrb[0].mxu0 %v3009
    %v3819 = vpop.f32.mrb[0].mxu0
    %v3820 = vadd.f32 %v3690, %v3819
    %v3821 = vpop.f32.mrb[0].mxu0
    %3822 = vmatprep.mubr.f32.mxu0 %v3023
    %3823 = vmatmul.mubr.f32.gmra.mrb[0].mxu0 %v3022
    %v3824 = vpop.f32.mrb[0].mxu0
    %v3825 = vadd.f32 %v3695, %v3824
    %v3826 = vpop.f32.mrb[0].mxu0
    %3827 = vmatprep.mubr.f32.mxu0 %v3036
    %3828 = vmatmul.mubr.f32.gmra.mrb[0].mxu0 %v3035
    %v3829 = vpop.f32.mrb[0].mxu0
    %v3830 = vadd.f32 %v3700, %v3829
    %v3831 = vpop.f32.mrb[0].mxu0
    %3832 = vmatprep.mubr.f32.mxu0 %v3049
    %3833 = vmatmul.mubr.f32.gmra.mrb[0].mxu0 %v3048
    %v3834 = vpop.f32.mrb[0].mxu0
    %v3835 = vadd.f32 %v3705, %v3834
    %v3836 = vpop.f32.mrb[0].mxu0
    %3837 = vmatprep.mubr.f32.mxu0 %v3062
    %3838 = vmatmul.mubr.f32.gmra.mrb[0].mxu0 %v3061
    %v3839 = vpop.f32.mrb[0].mxu0
    %v3840 = vadd.f32 %v3710, %v3839
    %v3841 = vpop.f32.mrb[0].mxu0
    %3842 = vmatprep.mubr.f32.mxu0 %v3075
    %3843 = vmatmul.mubr.f32.gmra.mrb[0].mxu0 %v3074
    %v3844 = vpop.f32.mrb[0].mxu0
    %v3845 = vadd.f32 %v3715, %v3844
    %v3846 = vpop.f32.mrb[0].mxu0
    %3847 = vmatprep.mubr.f32.mxu0 %v3088
    %3848 = vmatmul.mubr.f32.gmra.mrb[0].mxu0 %v3087
    %v3849 = vpop.f32.mrb[0].mxu0
    %v3850 = vadd.f32 %v3720, %v3849
    %v3851 = vpop.f32.mrb[0].mxu0
    %3852 = vmatprep.mubr.f32.mxu0 %v3101
    %3853 = vmatmul.mubr.f32.gmra.mrb[0].mxu0 %v3100
    %v3854 = vpop.f32.mrb[0].mxu0
    %v3855 = vadd.f32 %v3725, %v3854
    %v3856 = vpop.f32.mrb[0].mxu0
    %3857 = vmatprep.mubr.f32.mxu0 %v3114
    %3858 = vmatmul.mubr.f32.gmra.mrb[0].mxu0 %v3113
    %v3859 = vpop.f32.mrb[0].mxu0
    %v3860 = vadd.f32 %v3730, %v3859
    %v3861 = vpop.f32.mrb[0].mxu0
    %3862 = vmatprep.mubr.f32.mxu0 %v3127
    %3863 = vmatmul.mubr.f32.gmra.mrb[0].mxu0 %v3126
    %v3864 = vpop.f32.mrb[0].mxu0
    %v3865 = vadd.f32 %v3735, %v3864
    %v3866 = vpop.f32.mrb[0].mxu0
    %3867 = vdwg.mxu0
    %3868 = vmatprep.subr.mxu0 0.0
    %3869 = vmatpush1.msra.mxu0 %v3261
    %3870 = vmatprep.subr.mxu0 0.0
    %3871 = vmatpush1.msra.mxu0 %v3262
    %3872 = vmatprep.subr.mxu0 0.0
    %3873 = vmatpush1.msra.mxu0 %v3263
    %3874 = vmatprep.subr.mxu0 0.0
    %3875 = vmatpush1.msra.mxu0 %v3264
    %3876 = vmatprep.subr.mxu0 0.0
    %3877 = vmatpush1.msra.mxu0 %v3265
    %3878 = vmatprep.subr.mxu0 0.0
    %3879 = vmatpush1.msra.mxu0 %v3266
    %3880 = vmatprep.subr.mxu0 0.0
    %3881 = vmatpush1.msra.mxu0 %v3267
    %3882 = vmatprep.subr.mxu0 0.0
    %3883 = vmatpush1.msra.mxu0 %v3268
    %3884 = vmatprep.subr.mxu0 0.0
    %3885 = vmatpush1.msra.mxu0 %v3269
    %3886 = vmatprep.subr.mxu0 0.0
    %3887 = vmatpush1.msra.mxu0 %v3270
    %3888 = vmatprep.subr.mxu0 0.0
    %3889 = vmatpush1.msra.mxu0 %v3271
    %3890 = vmatprep.subr.mxu0 0.0
    %3891 = vmatpush1.msra.mxu0 %v3272
    %3892 = vmatprep.subr.mxu0 0.0
    %3893 = vmatpush1.msra.mxu0 %v3273
    %3894 = vmatprep.subr.mxu0 0.0
    %3895 = vmatpush1.msra.mxu0 %v3274
    %3896 = vmatprep.subr.mxu0 0.0
    %3897 = vmatpush1.msra.mxu0 %v3275
    %3898 = vmatprep.subr.mxu0 0.0
    %3899 = vmatpush1.msra.mxu0 %v3276
    %3900 = vmatprep.subr.mxu0 0.0
    %3901 = vmatpush1.msra.mxu0 %v3277
    %3902 = vmatprep.subr.mxu0 0.0
    %3903 = vmatpush1.msra.mxu0 %v3278
    %3904 = vmatprep.subr.mxu0 0.0
    %3905 = vmatpush1.msra.mxu0 %v3279
    %3906 = vmatprep.subr.mxu0 0.0
    %3907 = vmatpush1.msra.mxu0 %v3280
    %3908 = vmatprep.subr.mxu0 0.0
    %3909 = vmatpush1.msra.mxu0 %v3281
    %3910 = vmatprep.subr.mxu0 0.0
    %3911 = vmatpush1.msra.mxu0 %v3282
    %3912 = vmatprep.subr.mxu0 0.0
    %3913 = vmatpush1.msra.mxu0 %v3283
    %3914 = vmatprep.subr.mxu0 0.0
    %3915 = vmatpush1.msra.mxu0 %v3284
    %3916 = vmatprep.subr.mxu0 0.0
    %3917 = vmatpush1.msra.mxu0 %v3285
    %3918 = vmatprep.subr.mxu0 0.0
    %3919 = vmatpush1.msra.mxu0 %v3286
    %3920 = vmatprep.subr.mxu0 0.0
    %3921 = vmatpush1.msra.mxu0 %v3287
    %3922 = vmatprep.subr.mxu0 0.0
    %3923 = vmatpush1.msra.mxu0 %v3288
    %3924 = vmatprep.subr.mxu0 0.0
    %3925 = vmatpush1.msra.mxu0 %v3289
    %3926 = vmatprep.subr.mxu0 0.0
    %3927 = vmatpush1.msra.mxu0 %v3290
    %3928 = vmatprep.subr.mxu0 0.0
    %3929 = vmatpush1.msra.mxu0 %v3291
    %3930 = vmatprep.subr.mxu0 0.0
    %3931 = vmatpush1.msra.mxu0 %v3292
    %3932 = vmatprep.mubr.f32.mxu0 %v2973
    %3933 = vmatmul.mubr.f32.gmra.mrb[0].mxu0 %v2972
    %v3934 = vpop.f32.mrb[0].mxu0
    %v3935 = vadd.f32 %v3805, %v3934
    %v3936 = vpop.f32.mrb[0].mxu0
    %3937 = vmatprep.mubr.f32.mxu0 %v2986
    %3938 = vmatmul.mubr.f32.gmra.mrb[0].mxu0 %v2985
    %v3939 = vpop.f32.mrb[0].mxu0
    %v3940 = vadd.f32 %v3810, %v3939
    %v3941 = vpop.f32.mrb[0].mxu0
    %3942 = vmatprep.mubr.f32.mxu0 %v2999
    %3943 = vmatmul.mubr.f32.gmra.mrb[0].mxu0 %v2998
    %v3944 = vpop.f32.mrb[0].mxu0
    %v3945 = vadd.f32 %v3815, %v3944
    %v3946 = vpop.f32.mrb[0].mxu0
    %3947 = vmatprep.mubr.f32.mxu0 %v3012
    %3948 = vmatmul.mubr.f32.gmra.mrb[0].mxu0 %v3011
    %v3949 = vpop.f32.mrb[0].mxu0
    %v3950 = vadd.f32 %v3820, %v3949
    %v3951 = vpop.f32.mrb[0].mxu0
    %3952 = vmatprep.mubr.f32.mxu0 %v3025
    %3953 = vmatmul.mubr.f32.gmra.mrb[0].mxu0 %v3024
    %v3954 = vpop.f32.mrb[0].mxu0
    %v3955 = vadd.f32 %v3825, %v3954
    %v3956 = vpop.f32.mrb[0].mxu0
    %3957 = vmatprep.mubr.f32.mxu0 %v3038
    %3958 = vmatmul.mubr.f32.gmra.mrb[0].mxu0 %v3037
    %v3959 = vpop.f32.mrb[0].mxu0
    %v3960 = vadd.f32 %v3830, %v3959
    %v3961 = vpop.f32.mrb[0].mxu0
    %3962 = vmatprep.mubr.f32.mxu0 %v3051
    %3963 = vmatmul.mubr.f32.gmra.mrb[0].mxu0 %v3050
    %v3964 = vpop.f32.mrb[0].mxu0
    %v3965 = vadd.f32 %v3835, %v3964
    %v3966 = vpop.f32.mrb[0].mxu0
    %3967 = vmatprep.mubr.f32.mxu0 %v3064
    %3968 = vmatmul.mubr.f32.gmra.mrb[0].mxu0 %v3063
    %v3969 = vpop.f32.mrb[0].mxu0
    %v3970 = vadd.f32 %v3840, %v3969
    %v3971 = vpop.f32.mrb[0].mxu0
    %3972 = vmatprep.mubr.f32.mxu0 %v3077
    %3973 = vmatmul.mubr.f32.gmra.mrb[0].mxu0 %v3076
    %v3974 = vpop.f32.mrb[0].mxu0
    %v3975 = vadd.f32 %v3845, %v3974
    %v3976 = vpop.f32.mrb[0].mxu0
    %3977 = vmatprep.mubr.f32.mxu0 %v3090
    %3978 = vmatmul.mubr.f32.gmra.mrb[0].mxu0 %v3089
    %v3979 = vpop.f32.mrb[0].mxu0
    %v3980 = vadd.f32 %v3850, %v3979
    %v3981 = vpop.f32.mrb[0].mxu0
    %3982 = vmatprep.mubr.f32.mxu0 %v3103
    %3983 = vmatmul.mubr.f32.gmra.mrb[0].mxu0 %v3102
    %v3984 = vpop.f32.mrb[0].mxu0
    %v3985 = vadd.f32 %v3855, %v3984
    %v3986 = vpop.f32.mrb[0].mxu0
    %3987 = vmatprep.mubr.f32.mxu0 %v3116
    %3988 = vmatmul.mubr.f32.gmra.mrb[0].mxu0 %v3115
    %v3989 = vpop.f32.mrb[0].mxu0
    %v3990 = vadd.f32 %v3860, %v3989
    %v3991 = vpop.f32.mrb[0].mxu0
    %3992 = vmatprep.mubr.f32.mxu0 %v3129
    %3993 = vmatmul.mubr.f32.gmra.mrb[0].mxu0 %v3128
    %v3994 = vpop.f32.mrb[0].mxu0
    %v3995 = vadd.f32 %v3865, %v3994
    %v3996 = vpop.f32.mrb[0].mxu0
    %3997 = vdwg.mxu0
    %3998 = vmatprep.subr.mxu0 0.0
    %3999 = vmatpush1.msra.mxu0 %v3293
    %4000 = vmatprep.subr.mxu0 0.0
    %4001 = vmatpush1.msra.mxu0 %v3294
    %4002 = vmatprep.subr.mxu0 0.0
    %4003 = vmatpush1.msra.mxu0 %v3295
    %4004 = vmatprep.subr.mxu0 0.0
    %4005 = vmatpush1.msra.mxu0 %v3296
    %4006 = vmatprep.subr.mxu0 0.0
    %4007 = vmatpush1.msra.mxu0 %v3297
    %4008 = vmatprep.subr.mxu0 0.0
    %4009 = vmatpush1.msra.mxu0 %v3298
    %4010 = vmatprep.subr.mxu0 0.0
    %4011 = vmatpush1.msra.mxu0 %v3299
    %4012 = vmatprep.subr.mxu0 0.0
    %4013 = vmatpush1.msra.mxu0 %v3300
    %4014 = vmatprep.subr.mxu0 0.0
    %4015 = vmatpush1.msra.mxu0 %v3301
    %4016 = vmatprep.subr.mxu0 0.0
    %4017 = vmatpush1.msra.mxu0 %v3302
    %4018 = vmatprep.subr.mxu0 0.0
    %4019 = vmatpush1.msra.mxu0 %v3303
    %4020 = vmatprep.subr.mxu0 0.0
    %4021 = vmatpush1.msra.mxu0 %v3304
    %4022 = vmatprep.subr.mxu0 0.0
    %4023 = vmatpush1.msra.mxu0 %v3305
    %4024 = vmatprep.subr.mxu0 0.0
    %4025 = vmatpush1.msra.mxu0 %v3306
    %4026 = vmatprep.subr.mxu0 0.0
    %4027 = vmatpush1.msra.mxu0 %v3307
    %4028 = vmatprep.subr.mxu0 0.0
    %4029 = vmatpush1.msra.mxu0 %v3308
    %4030 = vmatprep.subr.mxu0 0.0
    %4031 = vmatpush1.msra.mxu0 %v3309
    %4032 = vmatprep.subr.mxu0 0.0
    %4033 = vmatpush1.msra.mxu0 %v3310
    %4034 = vmatprep.subr.mxu0 0.0
    %4035 = vmatpush1.msra.mxu0 %v3311
    %4036 = vmatprep.subr.mxu0 0.0
    %4037 = vmatpush1.msra.mxu0 %v3312
    %4038 = vmatprep.subr.mxu0 0.0
    %4039 = vmatpush1.msra.mxu0 %v3313
    %4040 = vmatprep.subr.mxu0 0.0
    %4041 = vmatpush1.msra.mxu0 %v3314
    %4042 = vmatprep.subr.mxu0 0.0
    %4043 = vmatpush1.msra.mxu0 %v3315
    %4044 = vmatprep.subr.mxu0 0.0
    %4045 = vmatpush1.msra.mxu0 %v3316
    %4046 = vmatprep.subr.mxu0 0.0
    %4047 = vmatpush1.msra.mxu0 %v3317
    %4048 = vmatprep.subr.mxu0 0.0
    %4049 = vmatpush1.msra.mxu0 %v3318
    %4050 = vmatprep.subr.mxu0 0.0
    %4051 = vmatpush1.msra.mxu0 %v3319
    %4052 = vmatprep.subr.mxu0 0.0
    %4053 = vmatpush1.msra.mxu0 %v3320
    %4054 = vmatprep.subr.mxu0 0.0
    %4055 = vmatpush1.msra.mxu0 %v3321
    %4056 = vmatprep.subr.mxu0 0.0
    %4057 = vmatpush1.msra.mxu0 %v3322
    %4058 = vmatprep.subr.mxu0 0.0
    %4059 = vmatpush1.msra.mxu0 %v3323
    %4060 = vmatprep.subr.mxu0 0.0
    %4061 = vmatpush1.msra.mxu0 %v3324
    %4062 = vmatprep.mubr.f32.mxu0 %v2975
    %4063 = vmatmul.mubr.f32.gmra.mrb[0].mxu0 %v2974
    %v4064 = vpop.f32.mrb[0].mxu0
    %v4065 = vadd.f32 %v3935, %v4064
    %v4066 = vpop.f32.mrb[0].mxu0
    %4067 = vmatprep.mubr.f32.mxu0 %v2988
    %4068 = vmatmul.mubr.f32.gmra.mrb[0].mxu0 %v2987
    %v4069 = vpop.f32.mrb[0].mxu0
    %v4070 = vadd.f32 %v3940, %v4069
    %v4071 = vpop.f32.mrb[0].mxu0
    %4072 = vmatprep.mubr.f32.mxu0 %v3001
    %4073 = vmatmul.mubr.f32.gmra.mrb[0].mxu0 %v3000
    %v4074 = vpop.f32.mrb[0].mxu0
    %v4075 = vadd.f32 %v3945, %v4074
    %v4076 = vpop.f32.mrb[0].mxu0
    %4077 = vmatprep.mubr.f32.mxu0 %v3014
    %4078 = vmatmul.mubr.f32.gmra.mrb[0].mxu0 %v3013
    %v4079 = vpop.f32.mrb[0].mxu0
    %v4080 = vadd.f32 %v3950, %v4079
    %v4081 = vpop.f32.mrb[0].mxu0
    %4082 = vmatprep.mubr.f32.mxu0 %v3027
    %4083 = vmatmul.mubr.f32.gmra.mrb[0].mxu0 %v3026
    %v4084 = vpop.f32.mrb[0].mxu0
    %v4085 = vadd.f32 %v3955, %v4084
    %v4086 = vpop.f32.mrb[0].mxu0
    %4087 = vmatprep.mubr.f32.mxu0 %v3040
    %4088 = vmatmul.mubr.f32.gmra.mrb[0].mxu0 %v3039
    %v4089 = vpop.f32.mrb[0].mxu0
    %v4090 = vadd.f32 %v3960, %v4089
    %v4091 = vpop.f32.mrb[0].mxu0
    %4092 = vmatprep.mubr.f32.mxu0 %v3053
    %4093 = vmatmul.mubr.f32.gmra.mrb[0].mxu0 %v3052
    %v4094 = vpop.f32.mrb[0].mxu0
    %v4095 = vadd.f32 %v3965, %v4094
    %v4096 = vpop.f32.mrb[0].mxu0
    %4097 = vmatprep.mubr.f32.mxu0 %v3066
    %4098 = vmatmul.mubr.f32.gmra.mrb[0].mxu0 %v3065
    %v4099 = vpop.f32.mrb[0].mxu0
    %v4100 = vadd.f32 %v3970, %v4099
    %v4101 = vpop.f32.mrb[0].mxu0
    %4102 = vmatprep.mubr.f32.mxu0 %v3079
    %4103 = vmatmul.mubr.f32.gmra.mrb[0].mxu0 %v3078
    %v4104 = vpop.f32.mrb[0].mxu0
    %v4105 = vadd.f32 %v3975, %v4104
    %v4106 = vpop.f32.mrb[0].mxu0
    %4107 = vmatprep.mubr.f32.mxu0 %v3092
    %4108 = vmatmul.mubr.f32.gmra.mrb[0].mxu0 %v3091
    %v4109 = vpop.f32.mrb[0].mxu0
    %v4110 = vadd.f32 %v3980, %v4109
    %v4111 = vpop.f32.mrb[0].mxu0
    %4112 = vmatprep.mubr.f32.mxu0 %v3105
    %4113 = vmatmul.mubr.f32.gmra.mrb[0].mxu0 %v3104
    %v4114 = vpop.f32.mrb[0].mxu0
    %v4115 = vadd.f32 %v3985, %v4114
    %v4116 = vpop.f32.mrb[0].mxu0
    %4117 = vmatprep.mubr.f32.mxu0 %v3118
    %4118 = vmatmul.mubr.f32.gmra.mrb[0].mxu0 %v3117
    %v4119 = vpop.f32.mrb[0].mxu0
    %v4120 = vadd.f32 %v3990, %v4119
    %v4121 = vpop.f32.mrb[0].mxu0
    %4122 = vmatprep.mubr.f32.mxu0 %v3131
    %4123 = vmatmul.mubr.f32.gmra.mrb[0].mxu0 %v3130
    %v4124 = vpop.f32.mrb[0].mxu0
    %v4125 = vadd.f32 %v3995, %v4124
    %v4126 = vpop.f32.mrb[0].mxu0
    %4127 = vdwg.mxu0
    %4128 = vmatprep.subr.mxu0 0.0
    %4129 = vmatpush1.msra.mxu0 %v3325
    %4130 = vmatprep.subr.mxu0 0.0
    %4131 = vmatpush1.msra.mxu0 %v3326
    %4132 = vmatprep.subr.mxu0 0.0
    %4133 = vmatpush1.msra.mxu0 %v3327
    %4134 = vmatprep.subr.mxu0 0.0
    %4135 = vmatpush1.msra.mxu0 %v3328
    %4136 = vmatprep.subr.mxu0 0.0
    %4137 = vmatpush1.msra.mxu0 %v3329
    %4138 = vmatprep.subr.mxu0 0.0
    %4139 = vmatpush1.msra.mxu0 %v3330
    %4140 = vmatprep.subr.mxu0 0.0
    %4141 = vmatpush1.msra.mxu0 %v3331
    %4142 = vmatprep.subr.mxu0 0.0
    %4143 = vmatpush1.msra.mxu0 %v3332
    %4144 = vmatprep.subr.mxu0 0.0
    %4145 = vmatpush1.msra.mxu0 %v3333
    %4146 = vmatprep.subr.mxu0 0.0
    %4147 = vmatpush1.msra.mxu0 %v3334
    %4148 = vmatprep.subr.mxu0 0.0
    %4149 = vmatpush1.msra.mxu0 %v3335
    %4150 = vmatprep.subr.mxu0 0.0
    %4151 = vmatpush1.msra.mxu0 %v3336
    %4152 = vmatprep.subr.mxu0 0.0
    %4153 = vmatpush1.msra.mxu0 %v3337
    %4154 = vmatprep.subr.mxu0 0.0
    %4155 = vmatpush1.msra.mxu0 %v3338
    %4156 = vmatprep.subr.mxu0 0.0
    %4157 = vmatpush1.msra.mxu0 %v3339
    %4158 = vmatprep.subr.mxu0 0.0
    %4159 = vmatpush1.msra.mxu0 %v3340
    %4160 = vmatprep.subr.mxu0 0.0
    %4161 = vmatpush1.msra.mxu0 0.0
    %4162 = vmatprep.subr.mxu0 0.0
    %4163 = vmatpush1.msra.mxu0 0.0
    %4164 = vmatprep.subr.mxu0 0.0
    %4165 = vmatpush1.msra.mxu0 0.0
    %4166 = vmatprep.subr.mxu0 0.0
    %4167 = vmatpush1.msra.mxu0 0.0
    %4168 = vmatprep.subr.mxu0 0.0
    %4169 = vmatpush1.msra.mxu0 0.0
    %4170 = vmatprep.subr.mxu0 0.0
    %4171 = vmatpush1.msra.mxu0 0.0
    %4172 = vmatprep.subr.mxu0 0.0
    %4173 = vmatpush1.msra.mxu0 0.0
    %4174 = vmatprep.subr.mxu0 0.0
    %4175 = vmatpush1.msra.mxu0 0.0
    %4176 = vmatprep.subr.mxu0 0.0
    %4177 = vmatpush1.msra.mxu0 0.0
    %4178 = vmatprep.subr.mxu0 0.0
    %4179 = vmatpush1.msra.mxu0 0.0
    %4180 = vmatprep.subr.mxu0 0.0
    %4181 = vmatpush1.msra.mxu0 0.0
    %4182 = vmatprep.subr.mxu0 0.0
    %4183 = vmatpush1.msra.mxu0 0.0
    %4184 = vmatprep.subr.mxu0 0.0
    %4185 = vmatpush1.msra.mxu0 0.0
    %4186 = vmatprep.subr.mxu0 0.0
    %4187 = vmatpush1.msra.mxu0 0.0
    %4188 = vmatprep.subr.mxu0 0.0
    %4189 = vmatpush1.msra.mxu0 0.0
    %4190 = vmatprep.subr.mxu0 0.0
    %4191 = vmatpush1.msra.mxu0 0.0
    %4192 = vmatprep.mubr.f32.mxu0 0.0
    %4193 = vmatmul.mubr.f32.gmra.mrb[0].mxu0 %v2976
    %v4194 = vpop.f32.mrb[0].mxu0
    %v4195 = vadd.f32 %v4065, %v4194
    %v4196 = vpop.f32.mrb[0].mxu0
    %4197 = vmatprep.mubr.f32.mxu0 0.0
    %4198 = vmatmul.mubr.f32.gmra.mrb[0].mxu0 %v2989
    %v4199 = vpop.f32.mrb[0].mxu0
    %v4200 = vadd.f32 %v4070, %v4199
    %v4201 = vpop.f32.mrb[0].mxu0
    %4202 = vmatprep.mubr.f32.mxu0 0.0
    %4203 = vmatmul.mubr.f32.gmra.mrb[0].mxu0 %v3002
    %v4204 = vpop.f32.mrb[0].mxu0
    %v4205 = vadd.f32 %v4075, %v4204
    %v4206 = vpop.f32.mrb[0].mxu0
    %4207 = vmatprep.mubr.f32.mxu0 0.0
    %4208 = vmatmul.mubr.f32.gmra.mrb[0].mxu0 %v3015
    %v4209 = vpop.f32.mrb[0].mxu0
    %v4210 = vadd.f32 %v4080, %v4209
    %v4211 = vpop.f32.mrb[0].mxu0
    %4212 = vmatprep.mubr.f32.mxu0 0.0
    %4213 = vmatmul.mubr.f32.gmra.mrb[0].mxu0 %v3028
    %v4214 = vpop.f32.mrb[0].mxu0
    %v4215 = vadd.f32 %v4085, %v4214
    %v4216 = vpop.f32.mrb[0].mxu0
    %4217 = vmatprep.mubr.f32.mxu0 0.0
    %4218 = vmatmul.mubr.f32.gmra.mrb[0].mxu0 %v3041
    %v4219 = vpop.f32.mrb[0].mxu0
    %v4220 = vadd.f32 %v4090, %v4219
    %v4221 = vpop.f32.mrb[0].mxu0
    %4222 = vmatprep.mubr.f32.mxu0 0.0
    %4223 = vmatmul.mubr.f32.gmra.mrb[0].mxu0 %v3054
    %v4224 = vpop.f32.mrb[0].mxu0
    %v4225 = vadd.f32 %v4095, %v4224
    %v4226 = vpop.f32.mrb[0].mxu0
    %4227 = vmatprep.mubr.f32.mxu0 0.0
    %4228 = vmatmul.mubr.f32.gmra.mrb[0].mxu0 %v3067
    %v4229 = vpop.f32.mrb[0].mxu0
    %v4230 = vadd.f32 %v4100, %v4229
    %v4231 = vpop.f32.mrb[0].mxu0
    %4232 = vmatprep.mubr.f32.mxu0 0.0
    %4233 = vmatmul.mubr.f32.gmra.mrb[0].mxu0 %v3080
    %v4234 = vpop.f32.mrb[0].mxu0
    %v4235 = vadd.f32 %v4105, %v4234
    %v4236 = vpop.f32.mrb[0].mxu0
    %4237 = vmatprep.mubr.f32.mxu0 0.0
    %4238 = vmatmul.mubr.f32.gmra.mrb[0].mxu0 %v3093
    %v4239 = vpop.f32.mrb[0].mxu0
    %v4240 = vadd.f32 %v4110, %v4239
    %v4241 = vpop.f32.mrb[0].mxu0
    %4242 = vmatprep.mubr.f32.mxu0 0.0
    %4243 = vmatmul.mubr.f32.gmra.mrb[0].mxu0 %v3106
    %v4244 = vpop.f32.mrb[0].mxu0
    %v4245 = vadd.f32 %v4115, %v4244
    %v4246 = vpop.f32.mrb[0].mxu0
    %4247 = vmatprep.mubr.f32.mxu0 0.0
    %4248 = vmatmul.mubr.f32.gmra.mrb[0].mxu0 %v3119
    %v4249 = vpop.f32.mrb[0].mxu0
    %v4250 = vadd.f32 %v4120, %v4249
    %v4251 = vpop.f32.mrb[0].mxu0
    %4252 = vmatprep.mubr.f32.mxu0 0.0
    %4253 = vmatmul.mubr.f32.gmra.mrb[0].mxu0 %v3132
    %v4254 = vpop.f32.mrb[0].mxu0
    %v4255 = vadd.f32 %v4125, %v4254
    %v4256 = vpop.f32.mrb[0].mxu0
    %4257 = vdwg.mxu0
    %4258 = vst [vmem:[#allocation5] sm:$0xff] %v4195
    %4259 = vst [vmem:[#allocation5 + $0x8] sm:$0xff] %v4200
    %4260 = vst [vmem:[#allocation5 + $0x10] sm:$0xff] %v4205
    %4261 = vst [vmem:[#allocation5 + $0x18] sm:$0xff] %v4210
    %4262 = vst [vmem:[#allocation5 + $0x20] sm:$0xff] %v4215
    %4263 = vst [vmem:[#allocation5 + $0x28] sm:$0xff] %v4220
    %4264 = vst [vmem:[#allocation5 + $0x30] sm:$0xff] %v4225
    %4265 = vst [vmem:[#allocation5 + $0x38] sm:$0xff] %v4230
    %4266 = vst [vmem:[#allocation5 + $0x40] sm:$0xff] %v4235
    %4267 = vst [vmem:[#allocation5 + $0x48] sm:$0xff] %v4240
    %4268 = vst [vmem:[#allocation5 + $0x50] sm:$0xff] %v4245
    %4269 = vst [vmem:[#allocation5 + $0x58] sm:$0xff] %v4250
    %4270 = vst [vmem:[#allocation5 + $0x60] sm:$0xff] %v4255
    // Predicated region
    $region26: #{tpu_custom_call.1} parent=1 // pred_check
      _
    $region27: #{tpu_custom_call.1} parent=1 // pred_check_branch
      %4272 = sbr.rel (0) target = $region29
    $region28: #{tpu_custom_call.1} parent=1 // pred_region
      %s4274 = ssub.s32 1664, 1664
      %4275 = vsyncadd [#allocation4], %s4274
      %s4276 = sshll.u32 [#allocation5], 4
      %s4277 = int_to_ptr.vmem [resolvable:$true] %s4276
      %4282 = dma.vmem_to_hbm [thread:$0]  %s4277, 1664, %s5, [#allocation4], 128, 128, 8
    $region29: #{tpu_custom_call.1} parent=1 // pred_fallthru
      _
    // Predicated region
    $region30: #{tpu_custom_call.1} parent=1 // pred_check
      _
    $region31: #{tpu_custom_call.1} parent=1 // pred_check_branch
      %4284 = sbr.rel (0) target = $region33
    $region32: #{tpu_custom_call.1} parent=1 // pred_region
      %4285 = dma.done [#allocation4], 1664
    $region33: #{tpu_custom_call.1} parent=1 // pred_fallthru
      _
    %4286 = vsyncpa [#allocation3], 1
    %4287 = vsyncpa [#allocation4], 1

</llo_original>
